<compile_context>
chip_gen: v7x
topology: tpu7x:2x2x1
jax: 0.10.0
libtpu: 0.0.40
codegen_flags: <defaults>
</compile_context>

<pallas_src>
import jax
import jax.numpy as jnp
from jax import lax
from jax.experimental import pallas as pl
from jax.experimental.pallas import tpu as pltpu


def _zero_halo(pad_ref):
    """Zero only the 1-element halo (first/last row and column) of a padded scratch."""
    nb, hp, wp, c = pad_ref.shape
    zrow = jnp.zeros((nb, 1, wp, c), pad_ref.dtype)
    zcol = jnp.zeros((nb, hp, 1, c), pad_ref.dtype)
    pad_ref[:, 0:1, :, :] = zrow
    pad_ref[:, hp - 1:hp, :, :] = zrow
    pad_ref[:, :, 0:1, :] = zcol
    pad_ref[:, :, wp - 1:wp, :] = zcol


def _conv3x3_bias_relu(pad_ref, w_ref, b_ref, m, cin, cout):
    """3x3 'SAME' conv on the zero-padded scratch as 9 accumulated MXU matmuls."""
    _, hp, wp, _ = pad_ref.shape
    h2, w2 = hp - 2, wp - 2
    acc = jnp.zeros((m, cout), jnp.float32)
    for dy in range(3):
        for dx in range(3):
            tap = pad_ref[:, dy:dy + h2, dx:dx + w2, :].reshape(m, cin)
            acc = acc + jnp.dot(tap, w_ref[dy, dx],
                                preferred_element_type=jnp.float32)
    return jnp.maximum(acc + b_ref[...], 0.0)            # (m, cout) f32


def _unet_down_kernel(x_ref, w1_ref, b1_ref, w2_ref, b2_ref, out_ref,
                      pad1_ref, pad2_ref):
    # x_ref   : (NB, H, W, CIN)       one block of NB images, H = 2*H2, W = 2*W2
    # w1_ref  : (3, 3, CIN, CM)       b1_ref : (1, CM)
    # w2_ref  : (3, 3, CM, COUT)      b2_ref : (1, COUT)
    # out_ref : (NB, H2, W2, COUT)
    # pad1_ref: (NB, H2+2, W2+2, CIN) VMEM scratch (zero halo + pooled interior)
    # pad2_ref: (NB, H2+2, W2+2, CM)  VMEM scratch (zero halo + conv1 interior)
    NB, H, W, CIN = x_ref.shape
    H2, W2 = H // 2, W // 2
    CM = w1_ref.shape[-1]
    COUT = w2_ref.shape[-1]
    M = NB * H2 * W2

    # ---- MaxPool2d(2, stride=2) from the single input block ----
    # stride-2 reads along W (sublane axis) give even/odd columns ...
    x_even = x_ref[:, :, pl.ds(0, W2, 2), :]             # (NB, H, W2, CIN)
    x_odd = x_ref[:, :, pl.ds(1, W2, 2), :]
    xw = jnp.maximum(x_even, x_odd)                      # pooled along W
    # ... and an H-split reshape (leading dims only) pairs even/odd rows.
    xr = xw.reshape(NB, H2, 2, W2, CIN)
    pooled = jnp.maximum(xr[:, :, 0], xr[:, :, 1])       # (NB, H2, W2, CIN)

    # ---- Conv2d(CIN -> CM, 3x3, padding=1) + bias + ReLU ----
    _zero_halo(pad1_ref)                                 # halo only; interior overwritten
    pad1_ref[:, 1:H2 + 1, 1:W2 + 1, :] = pooled.astype(pad1_ref.dtype)
    h1 = _conv3x3_bias_relu(pad1_ref, w1_ref, b1_ref, M, CIN, CM)

    # ---- Conv2d(CM -> COUT, 3x3, padding=1) + bias + ReLU ----
    _zero_halo(pad2_ref)
    pad2_ref[:, 1:H2 + 1, 1:W2 + 1, :] = h1.reshape(NB, H2, W2, CM)
    h2 = _conv3x3_bias_relu(pad2_ref, w2_ref, b2_ref, M, CM, COUT)

    out_ref[...] = h2.reshape(NB, H2, W2, COUT).astype(out_ref.dtype)


def _pick_batch_block(n, h2, w2, cin, cm, cout):
    """Largest divisor of n that (a) keeps the per-step VMEM footprint modest
    (sized for v7x's smaller VMEM, accounting for (8,128)-tile padding and input
    double-buffering), (b) targets a matmul M = NB*H2*W2 around ~1k rows, and
    (c) leaves grid length >= 2 so both v7x TensorCores get work."""
    def padded_bytes(lead, sublanes, lanes):
        return lead * (-(-sublanes // 8) * 8) * (-(-lanes // 128) * 128) * 4

    h, w = 2 * h2, 2 * w2
    per_image = (2 * padded_bytes(h, w, cin)               # double-buffered input block
                 + 2 * padded_bytes(h2, w2, cout)          # double-buffered output block
                 + padded_bytes(h2 + 2, w2 + 2, cin)       # pad1 scratch
                 + padded_bytes(h2 + 2, w2 + 2, cm)        # pad2 scratch
                 + 4 * padded_bytes(h2, w2, max(cin, cm))) # transient vreg slack
    vmem_cap = max(1, (16 * 1024 * 1024) // max(per_image, 1))
    m_cap = max(1, 1024 // max(h2 * w2, 1))
    tc_cap = max(1, n // 2)
    cap = max(1, min(vmem_cap, m_cap, tc_cap))
    nb = 1
    for d in range(1, cap + 1):
        if n % d == 0:
            nb = d
    return nb


def unet_down_no_bn(x_nchw, w1, b1, w2, b2, *, batch_block=None):
    """Forward pass of UNetDownNoBN.

    x_nchw: (N, CIN, H, W); w1: (CM, CIN, 3, 3); b1: (CM,);
    w2: (COUT, CM, 3, 3);   b2: (COUT,).  Returns (N, COUT, H//2, W//2) NCHW."""
    N, CIN, H, W = x_nchw.shape
    CM = w1.shape[0]
    COUT = w2.shape[0]
    H2, W2 = H // 2, W // 2

    # PyTorch MaxPool2d(2,2) floors odd spatial dims: drop any trailing row/col.
    x_nchw = x_nchw[:, :, :2 * H2, :2 * W2]
    x = jnp.transpose(x_nchw, (0, 2, 3, 1))              # NHWC, read once by the kernel

    # weights as (ky, kx, Cin, Cout) for the in-kernel per-tap matmuls
    w1_k = jnp.transpose(w1, (2, 3, 1, 0))
    w2_k = jnp.transpose(w2, (2, 3, 1, 0))
    b1_k = b1.reshape(1, CM)
    b2_k = b2.reshape(1, COUT)
    # NOTE: on v6e/v7x, casting x / w*_k to bf16 here (keeping the in-kernel f32
    # accumulator) halves HBM/VMEM bytes; kept f32 for exact parity with the reference.

    NB = _pick_batch_block(N, H2, W2, CIN, CM, COUT) if batch_block is None else batch_block
    assert N % NB == 0, (N, NB)
    grid = (N // NB,)

    out_nhwc = pl.pallas_call(
        _unet_down_kernel,
        out_shape=jax.ShapeDtypeStruct((N, H2, W2, COUT), x.dtype),
        grid_spec=pltpu.PrefetchScalarGridSpec(
            num_scalar_prefetch=0,
            grid=grid,
            in_specs=[
                pl.BlockSpec((NB, 2 * H2, 2 * W2, CIN), lambda n: (n, 0, 0, 0)),
                pl.BlockSpec((3, 3, CIN, CM), lambda n: (0, 0, 0, 0)),
                pl.BlockSpec((1, CM), lambda n: (0, 0)),
                pl.BlockSpec((3, 3, CM, COUT), lambda n: (0, 0, 0, 0)),
                pl.BlockSpec((1, COUT), lambda n: (0, 0)),
            ],
            out_specs=pl.BlockSpec((NB, H2, W2, COUT), lambda n: (n, 0, 0, 0)),
            scratch_shapes=[
                pltpu.VMEM((NB, H2 + 2, W2 + 2, CIN), jnp.float32),
                pltpu.VMEM((NB, H2 + 2, W2 + 2, CM), jnp.float32),
            ]),
        compiler_params=pltpu.CompilerParams(
            dimension_semantics=("parallel",)),
    )(x, w1_k, b1_k, w2_k, b2_k)

    return jnp.transpose(out_nhwc, (0, 3, 1, 2))          # back to NCHW


def _reference(x_nchw, w1, b1, w2, b2):
    """Plain-JAX reference matching PyTorch semantics (for sanity check)."""
    x = jnp.transpose(x_nchw, (0, 2, 3, 1))
    p = lax.reduce_window(x, -jnp.inf, lax.max,
                          (1, 2, 2, 1), (1, 2, 2, 1), 'VALID')

    def conv_relu(h, w, b):
        y = lax.conv_general_dilated(
            h, jnp.transpose(w, (2, 3, 1, 0)),
            window_strides=(1, 1), padding='SAME',
            dimension_numbers=('NHWC', 'HWIO', 'NHWC'))
        return jnp.maximum(y + b, 0.0)

    h = conv_relu(p, w1, b1)
    h = conv_relu(h, w2, b2)
    return jnp.transpose(h, (0, 3, 1, 2))


if __name__ == "__main__":
    key = jax.random.PRNGKey(0)
    k1, k2, k3, k4, k5 = jax.random.split(key, 5)

    N, CIN, H, W = 2, 4, 16, 16
    COUT = 8  # both convs produce COUT channels

    x = jax.random.normal(k1, (N, CIN, H, W), jnp.float32)

    fan1 = CIN * 3 * 3
    w1 = jax.random.uniform(k2, (COUT, CIN, 3, 3), jnp.float32, -1.0, 1.0) / jnp.sqrt(fan1)
    b1 = jax.random.uniform(k3, (COUT,), jnp.float32, -1.0, 1.0) / jnp.sqrt(fan1)
    fan2 = COUT * 3 * 3
    w2 = jax.random.uniform(k4, (COUT, COUT, 3, 3), jnp.float32, -1.0, 1.0) / jnp.sqrt(fan2)
    b2 = jax.random.uniform(k5, (COUT,), jnp.float32, -1.0, 1.0) / jnp.sqrt(fan2)

    out = unet_down_no_bn(x, w1, b1, w2, b2)
    out = jax.block_until_ready(out)

    ref = _reference(x, w1, b1, w2, b2)
    assert out.shape == (N, COUT, H // 2, W // 2), out.shape
    assert jnp.allclose(out, ref, rtol=1e-4, atol=1e-4), \
        float(jnp.max(jnp.abs(out - ref)))

    print("KERNEL_OK")
</pallas_src>

<mosaic_0001>
module attributes {stable_mosaic.version = 11 : i64} {
  func.func @_unet_down_kernel(%arg0: i32, %arg1: memref<1x16x16x4xf32, #tpu.memory_space<vmem>>, %arg2: memref<3x3x4x8xf32, #tpu.memory_space<vmem>>, %arg3: memref<1x8xf32, #tpu.memory_space<vmem>>, %arg4: memref<3x3x8x8xf32, #tpu.memory_space<vmem>>, %arg5: memref<1x8xf32, #tpu.memory_space<vmem>>, %arg6: memref<1x8x8x8xf32, #tpu.memory_space<vmem>>, %arg7: memref<1x10x10x4xf32, #tpu.memory_space<vmem>>, %arg8: memref<1x10x10x8xf32, #tpu.memory_space<vmem>>) attributes {dimension_semantics = [#tpu.dimension_semantics<parallel>], iteration_bounds = array<i64: 2>, scalar_prefetch = 0 : i64, scratch_operands = 2 : i64, tpu.core_type = #tpu.core_type<tc>, window_params = [{transform_indices = @transform_0, window_bounds = array<i64: 1, 16, 16, 4>}, {pipeline_mode = #tpu.pipeline_mode<synchronous>, transform_indices = @transform_1, window_bounds = array<i64: 3, 3, 4, 8>}, {pipeline_mode = #tpu.pipeline_mode<synchronous>, transform_indices = @transform_2, window_bounds = array<i64: 1, 8>}, {pipeline_mode = #tpu.pipeline_mode<synchronous>, transform_indices = @transform_3, window_bounds = array<i64: 3, 3, 8, 8>}, {pipeline_mode = #tpu.pipeline_mode<synchronous>, transform_indices = @transform_4, window_bounds = array<i64: 1, 8>}, {transform_indices = @transform_5, window_bounds = array<i64: 1, 8, 8, 8>}]} {
    %c0 = arith.constant 0 : index
    %c0_0 = arith.constant 0 : index
    %c0_1 = arith.constant 0 : index
    %c0_2 = arith.constant 0 : index
    %0 = tpu.strided_load %arg1[%c0, %c0_0, %c0_1, %c0_2] {strides = array<i32: 1, 1, 2, 1>} : memref<1x16x16x4xf32, #tpu.memory_space<vmem>>, vector<1x16x8x4xf32>
    %c0_3 = arith.constant 0 : index
    %c0_4 = arith.constant 0 : index
    %c1 = arith.constant 1 : index
    %c0_5 = arith.constant 0 : index
    %1 = tpu.strided_load %arg1[%c0_3, %c0_4, %c1, %c0_5] {strides = array<i32: 1, 1, 2, 1>} : memref<1x16x16x4xf32, #tpu.memory_space<vmem>>, vector<1x16x8x4xf32>
    %2 = arith.maximumf %0, %1 : vector<1x16x8x4xf32>
    %3 = vector.shape_cast %2 : vector<1x16x8x4xf32> to vector<1x8x2x8x4xf32>
    %4 = vector.extract_strided_slice %3 {offsets = [0, 0, 0, 0, 0], sizes = [1, 8, 1, 8, 4], strides = [1, 1, 1, 1, 1]} : vector<1x8x2x8x4xf32> to vector<1x8x1x8x4xf32>
    %5 = vector.shape_cast %4 : vector<1x8x1x8x4xf32> to vector<1x8x8x4xf32>
    %6 = vector.extract_strided_slice %3 {offsets = [0, 0, 1, 0, 0], sizes = [1, 8, 1, 8, 4], strides = [1, 1, 1, 1, 1]} : vector<1x8x2x8x4xf32> to vector<1x8x1x8x4xf32>
    %7 = vector.shape_cast %6 : vector<1x8x1x8x4xf32> to vector<1x8x8x4xf32>
    %8 = arith.maximumf %5, %7 : vector<1x8x8x4xf32>
    %cst = arith.constant 0.000000e+00 : f32
    %9 = vector.broadcast %cst : f32 to vector<1x1x10x4xf32>
    %cst_6 = arith.constant 0.000000e+00 : f32
    %10 = vector.broadcast %cst_6 : f32 to vector<1x10x1x4xf32>
    %c0_7 = arith.constant 0 : index
    %c0_8 = arith.constant 0 : index
    %c0_9 = arith.constant 0 : index
    %c0_10 = arith.constant 0 : index
    %11 = vector.load %arg7[%c0_7, %c0_8, %c0_9, %c0_10] : memref<1x10x10x4xf32, #tpu.memory_space<vmem>>, vector<1x1x10x4xf32>
    tpu.vector_store %arg7[%c0_7, %c0_8, %c0_9, %c0_10], %9 {strides = array<i32>} : memref<1x10x10x4xf32, #tpu.memory_space<vmem>>, vector<1x1x10x4xf32>,
    %c0_11 = arith.constant 0 : index
    %c9 = arith.constant 9 : index
    %c0_12 = arith.constant 0 : index
    %c0_13 = arith.constant 0 : index
    %12 = vector.load %arg7[%c0_11, %c9, %c0_12, %c0_13] : memref<1x10x10x4xf32, #tpu.memory_space<vmem>>, vector<1x1x10x4xf32>
    tpu.vector_store %arg7[%c0_11, %c9, %c0_12, %c0_13], %9 {strides = array<i32>} : memref<1x10x10x4xf32, #tpu.memory_space<vmem>>, vector<1x1x10x4xf32>,
    %c0_14 = arith.constant 0 : index
    %c0_15 = arith.constant 0 : index
    %c0_16 = arith.constant 0 : index
    %c0_17 = arith.constant 0 : index
    %13 = vector.load %arg7[%c0_14, %c0_15, %c0_16, %c0_17] : memref<1x10x10x4xf32, #tpu.memory_space<vmem>>, vector<1x10x1x4xf32>
    tpu.vector_store %arg7[%c0_14, %c0_15, %c0_16, %c0_17], %10 {strides = array<i32>} : memref<1x10x10x4xf32, #tpu.memory_space<vmem>>, vector<1x10x1x4xf32>,
    %c0_18 = arith.constant 0 : index
    %c0_19 = arith.constant 0 : index
    %c9_20 = arith.constant 9 : index
    %c0_21 = arith.constant 0 : index
    %14 = vector.load %arg7[%c0_18, %c0_19, %c9_20, %c0_21] : memref<1x10x10x4xf32, #tpu.memory_space<vmem>>, vector<1x10x1x4xf32>
    tpu.vector_store %arg7[%c0_18, %c0_19, %c9_20, %c0_21], %10 {strides = array<i32>} : memref<1x10x10x4xf32, #tpu.memory_space<vmem>>, vector<1x10x1x4xf32>,
    %c0_22 = arith.constant 0 : index
    %c1_23 = arith.constant 1 : index
    %c1_24 = arith.constant 1 : index
    %c0_25 = arith.constant 0 : index
    %15 = vector.load %arg7[%c0_22, %c1_23, %c1_24, %c0_25] : memref<1x10x10x4xf32, #tpu.memory_space<vmem>>, vector<1x8x8x4xf32>
    tpu.vector_store %arg7[%c0_22, %c1_23, %c1_24, %c0_25], %8 {strides = array<i32>} : memref<1x10x10x4xf32, #tpu.memory_space<vmem>>, vector<1x8x8x4xf32>,
    %cst_26 = arith.constant 0.000000e+00 : f32
    %16 = vector.broadcast %cst_26 : f32 to vector<64x8xf32>
    %c0_27 = arith.constant 0 : index
    %c0_28 = arith.constant 0 : index
    %c0_29 = arith.constant 0 : index
    %c0_30 = arith.constant 0 : index
    %17 = vector.load %arg7[%c0_27, %c0_28, %c0_29, %c0_30] : memref<1x10x10x4xf32, #tpu.memory_space<vmem>>, vector<1x8x8x4xf32>
    %18 = vector.shape_cast %17 : vector<1x8x8x4xf32> to vector<64x4xf32>
    %c0_31 = arith.constant 0 : index
    %c0_32 = arith.constant 0 : index
    %c0_33 = arith.constant 0 : index
    %c0_34 = arith.constant 0 : index
    %19 = vector.load %arg2[%c0_31, %c0_32, %c0_33, %c0_34] : memref<3x3x4x8xf32, #tpu.memory_space<vmem>>, vector<1x1x4x8xf32>
    %20 = vector.shape_cast %19 : vector<1x1x4x8xf32> to vector<4x8xf32>
    %cst_35 = arith.constant dense<0.000000e+00> : vector<64x8xf32>
    %21 = tpu.matmul %18, %20, %cst_35 {dimension_numbers = #tpu.dot_dimension_numbers<[1], [0], [0], [1], [0, 0, 1, 1], [], []>} : vector<64x4xf32>, vector<4x8xf32>, vector<64x8xf32> -> vector<64x8xf32>
    %22 = arith.addf %16, %21 : vector<64x8xf32>
    %c0_36 = arith.constant 0 : index
    %c0_37 = arith.constant 0 : index
    %c1_38 = arith.constant 1 : index
    %c0_39 = arith.constant 0 : index
    %23 = vector.load %arg7[%c0_36, %c0_37, %c1_38, %c0_39] : memref<1x10x10x4xf32, #tpu.memory_space<vmem>>, vector<1x8x8x4xf32>
    %24 = vector.shape_cast %23 : vector<1x8x8x4xf32> to vector<64x4xf32>
    %c0_40 = arith.constant 0 : index
    %c1_41 = arith.constant 1 : index
    %c0_42 = arith.constant 0 : index
    %c0_43 = arith.constant 0 : index
    %25 = vector.load %arg2[%c0_40, %c1_41, %c0_42, %c0_43] : memref<3x3x4x8xf32, #tpu.memory_space<vmem>>, vector<1x1x4x8xf32>
    %26 = vector.shape_cast %25 : vector<1x1x4x8xf32> to vector<4x8xf32>
    %cst_44 = arith.constant dense<0.000000e+00> : vector<64x8xf32>
    %27 = tpu.matmul %24, %26, %cst_44 {dimension_numbers = #tpu.dot_dimension_numbers<[1], [0], [0], [1], [0, 0, 1, 1], [], []>} : vector<64x4xf32>, vector<4x8xf32>, vector<64x8xf32> -> vector<64x8xf32>
    %28 = arith.addf %22, %27 : vector<64x8xf32>
    %c0_45 = arith.constant 0 : index
    %c0_46 = arith.constant 0 : index
    %c2 = arith.constant 2 : index
    %c0_47 = arith.constant 0 : index
    %29 = vector.load %arg7[%c0_45, %c0_46, %c2, %c0_47] : memref<1x10x10x4xf32, #tpu.memory_space<vmem>>, vector<1x8x8x4xf32>
    %30 = vector.shape_cast %29 : vector<1x8x8x4xf32> to vector<64x4xf32>
    %c0_48 = arith.constant 0 : index
    %c2_49 = arith.constant 2 : index
    %c0_50 = arith.constant 0 : index
    %c0_51 = arith.constant 0 : index
    %31 = vector.load %arg2[%c0_48, %c2_49, %c0_50, %c0_51] : memref<3x3x4x8xf32, #tpu.memory_space<vmem>>, vector<1x1x4x8xf32>
    %32 = vector.shape_cast %31 : vector<1x1x4x8xf32> to vector<4x8xf32>
    %cst_52 = arith.constant dense<0.000000e+00> : vector<64x8xf32>
    %33 = tpu.matmul %30, %32, %cst_52 {dimension_numbers = #tpu.dot_dimension_numbers<[1], [0], [0], [1], [0, 0, 1, 1], [], []>} : vector<64x4xf32>, vector<4x8xf32>, vector<64x8xf32> -> vector<64x8xf32>
    %34 = arith.addf %28, %33 : vector<64x8xf32>
    %c0_53 = arith.constant 0 : index
    %c1_54 = arith.constant 1 : index
    %c0_55 = arith.constant 0 : index
    %c0_56 = arith.constant 0 : index
    %35 = vector.load %arg7[%c0_53, %c1_54, %c0_55, %c0_56] : memref<1x10x10x4xf32, #tpu.memory_space<vmem>>, vector<1x8x8x4xf32>
    %36 = vector.shape_cast %35 : vector<1x8x8x4xf32> to vector<64x4xf32>
    %c1_57 = arith.constant 1 : index
    %c0_58 = arith.constant 0 : index
    %c0_59 = arith.constant 0 : index
    %c0_60 = arith.constant 0 : index
    %37 = vector.load %arg2[%c1_57, %c0_58, %c0_59, %c0_60] : memref<3x3x4x8xf32, #tpu.memory_space<vmem>>, vector<1x1x4x8xf32>
    %38 = vector.shape_cast %37 : vector<1x1x4x8xf32> to vector<4x8xf32>
    %cst_61 = arith.constant dense<0.000000e+00> : vector<64x8xf32>
    %39 = tpu.matmul %36, %38, %cst_61 {dimension_numbers = #tpu.dot_dimension_numbers<[1], [0], [0], [1], [0, 0, 1, 1], [], []>} : vector<64x4xf32>, vector<4x8xf32>, vector<64x8xf32> -> vector<64x8xf32>
    %40 = arith.addf %34, %39 : vector<64x8xf32>
    %c0_62 = arith.constant 0 : index
    %c1_63 = arith.constant 1 : index
    %c1_64 = arith.constant 1 : index
    %c0_65 = arith.constant 0 : index
    %41 = vector.load %arg7[%c0_62, %c1_63, %c1_64, %c0_65] : memref<1x10x10x4xf32, #tpu.memory_space<vmem>>, vector<1x8x8x4xf32>
    %42 = vector.shape_cast %41 : vector<1x8x8x4xf32> to vector<64x4xf32>
    %c1_66 = arith.constant 1 : index
    %c1_67 = arith.constant 1 : index
    %c0_68 = arith.constant 0 : index
    %c0_69 = arith.constant 0 : index
    %43 = vector.load %arg2[%c1_66, %c1_67, %c0_68, %c0_69] : memref<3x3x4x8xf32, #tpu.memory_space<vmem>>, vector<1x1x4x8xf32>
    %44 = vector.shape_cast %43 : vector<1x1x4x8xf32> to vector<4x8xf32>
    %cst_70 = arith.constant dense<0.000000e+00> : vector<64x8xf32>
    %45 = tpu.matmul %42, %44, %cst_70 {dimension_numbers = #tpu.dot_dimension_numbers<[1], [0], [0], [1], [0, 0, 1, 1], [], []>} : vector<64x4xf32>, vector<4x8xf32>, vector<64x8xf32> -> vector<64x8xf32>
    %46 = arith.addf %40, %45 : vector<64x8xf32>
    %c0_71 = arith.constant 0 : index
    %c1_72 = arith.constant 1 : index
    %c2_73 = arith.constant 2 : index
    %c0_74 = arith.constant 0 : index
    %47 = vector.load %arg7[%c0_71, %c1_72, %c2_73, %c0_74] : memref<1x10x10x4xf32, #tpu.memory_space<vmem>>, vector<1x8x8x4xf32>
    %48 = vector.shape_cast %47 : vector<1x8x8x4xf32> to vector<64x4xf32>
    %c1_75 = arith.constant 1 : index
    %c2_76 = arith.constant 2 : index
    %c0_77 = arith.constant 0 : index
    %c0_78 = arith.constant 0 : index
    %49 = vector.load %arg2[%c1_75, %c2_76, %c0_77, %c0_78] : memref<3x3x4x8xf32, #tpu.memory_space<vmem>>, vector<1x1x4x8xf32>
    %50 = vector.shape_cast %49 : vector<1x1x4x8xf32> to vector<4x8xf32>
    %cst_79 = arith.constant dense<0.000000e+00> : vector<64x8xf32>
    %51 = tpu.matmul %48, %50, %cst_79 {dimension_numbers = #tpu.dot_dimension_numbers<[1], [0], [0], [1], [0, 0, 1, 1], [], []>} : vector<64x4xf32>, vector<4x8xf32>, vector<64x8xf32> -> vector<64x8xf32>
    %52 = arith.addf %46, %51 : vector<64x8xf32>
    %c0_80 = arith.constant 0 : index
    %c2_81 = arith.constant 2 : index
    %c0_82 = arith.constant 0 : index
    %c0_83 = arith.constant 0 : index
    %53 = vector.load %arg7[%c0_80, %c2_81, %c0_82, %c0_83] : memref<1x10x10x4xf32, #tpu.memory_space<vmem>>, vector<1x8x8x4xf32>
    %54 = vector.shape_cast %53 : vector<1x8x8x4xf32> to vector<64x4xf32>
    %c2_84 = arith.constant 2 : index
    %c0_85 = arith.constant 0 : index
    %c0_86 = arith.constant 0 : index
    %c0_87 = arith.constant 0 : index
    %55 = vector.load %arg2[%c2_84, %c0_85, %c0_86, %c0_87] : memref<3x3x4x8xf32, #tpu.memory_space<vmem>>, vector<1x1x4x8xf32>
    %56 = vector.shape_cast %55 : vector<1x1x4x8xf32> to vector<4x8xf32>
    %cst_88 = arith.constant dense<0.000000e+00> : vector<64x8xf32>
    %57 = tpu.matmul %54, %56, %cst_88 {dimension_numbers = #tpu.dot_dimension_numbers<[1], [0], [0], [1], [0, 0, 1, 1], [], []>} : vector<64x4xf32>, vector<4x8xf32>, vector<64x8xf32> -> vector<64x8xf32>
    %58 = arith.addf %52, %57 : vector<64x8xf32>
    %c0_89 = arith.constant 0 : index
    %c2_90 = arith.constant 2 : index
    %c1_91 = arith.constant 1 : index
    %c0_92 = arith.constant 0 : index
    %59 = vector.load %arg7[%c0_89, %c2_90, %c1_91, %c0_92] : memref<1x10x10x4xf32, #tpu.memory_space<vmem>>, vector<1x8x8x4xf32>
    %60 = vector.shape_cast %59 : vector<1x8x8x4xf32> to vector<64x4xf32>
    %c2_93 = arith.constant 2 : index
    %c1_94 = arith.constant 1 : index
    %c0_95 = arith.constant 0 : index
    %c0_96 = arith.constant 0 : index
    %61 = vector.load %arg2[%c2_93, %c1_94, %c0_95, %c0_96] : memref<3x3x4x8xf32, #tpu.memory_space<vmem>>, vector<1x1x4x8xf32>
    %62 = vector.shape_cast %61 : vector<1x1x4x8xf32> to vector<4x8xf32>
    %cst_97 = arith.constant dense<0.000000e+00> : vector<64x8xf32>
    %63 = tpu.matmul %60, %62, %cst_97 {dimension_numbers = #tpu.dot_dimension_numbers<[1], [0], [0], [1], [0, 0, 1, 1], [], []>} : vector<64x4xf32>, vector<4x8xf32>, vector<64x8xf32> -> vector<64x8xf32>
    %64 = arith.addf %58, %63 : vector<64x8xf32>
    %c0_98 = arith.constant 0 : index
    %c2_99 = arith.constant 2 : index
    %c2_100 = arith.constant 2 : index
    %c0_101 = arith.constant 0 : index
    %65 = vector.load %arg7[%c0_98, %c2_99, %c2_100, %c0_101] : memref<1x10x10x4xf32, #tpu.memory_space<vmem>>, vector<1x8x8x4xf32>
    %66 = vector.shape_cast %65 : vector<1x8x8x4xf32> to vector<64x4xf32>
    %c2_102 = arith.constant 2 : index
    %c2_103 = arith.constant 2 : index
    %c0_104 = arith.constant 0 : index
    %c0_105 = arith.constant 0 : index
    %67 = vector.load %arg2[%c2_102, %c2_103, %c0_104, %c0_105] : memref<3x3x4x8xf32, #tpu.memory_space<vmem>>, vector<1x1x4x8xf32>
    %68 = vector.shape_cast %67 : vector<1x1x4x8xf32> to vector<4x8xf32>
    %cst_106 = arith.constant dense<0.000000e+00> : vector<64x8xf32>
    %69 = tpu.matmul %66, %68, %cst_106 {dimension_numbers = #tpu.dot_dimension_numbers<[1], [0], [0], [1], [0, 0, 1, 1], [], []>} : vector<64x4xf32>, vector<4x8xf32>, vector<64x8xf32> -> vector<64x8xf32>
    %70 = arith.addf %64, %69 : vector<64x8xf32>
    %c0_107 = arith.constant 0 : index
    %c0_108 = arith.constant 0 : index
    %71 = vector.load %arg3[%c0_107, %c0_108] : memref<1x8xf32, #tpu.memory_space<vmem>>, vector<1x8xf32>
    %72 = vector.broadcast %71 : vector<1x8xf32> to vector<64x8xf32>
    %73 = arith.addf %70, %72 : vector<64x8xf32>
    %cst_109 = arith.constant 0.000000e+00 : f32
    %74 = vector.broadcast %cst_109 : f32 to vector<64x8xf32>
    %75 = arith.maximumf %73, %74 : vector<64x8xf32>
    %cst_110 = arith.constant 0.000000e+00 : f32
    %76 = vector.broadcast %cst_110 : f32 to vector<1x1x10x8xf32>
    %cst_111 = arith.constant 0.000000e+00 : f32
    %77 = vector.broadcast %cst_111 : f32 to vector<1x10x1x8xf32>
    %c0_112 = arith.constant 0 : index
    %c0_113 = arith.constant 0 : index
    %c0_114 = arith.constant 0 : index
    %c0_115 = arith.constant 0 : index
    %78 = vector.load %arg8[%c0_112, %c0_113, %c0_114, %c0_115] : memref<1x10x10x8xf32, #tpu.memory_space<vmem>>, vector<1x1x10x8xf32>
    tpu.vector_store %arg8[%c0_112, %c0_113, %c0_114, %c0_115], %76 {strides = array<i32>} : memref<1x10x10x8xf32, #tpu.memory_space<vmem>>, vector<1x1x10x8xf32>,
    %c0_116 = arith.constant 0 : index
    %c9_117 = arith.constant 9 : index
    %c0_118 = arith.constant 0 : index
    %c0_119 = arith.constant 0 : index
    %79 = vector.load %arg8[%c0_116, %c9_117, %c0_118, %c0_119] : memref<1x10x10x8xf32, #tpu.memory_space<vmem>>, vector<1x1x10x8xf32>
    tpu.vector_store %arg8[%c0_116, %c9_117, %c0_118, %c0_119], %76 {strides = array<i32>} : memref<1x10x10x8xf32, #tpu.memory_space<vmem>>, vector<1x1x10x8xf32>,
    %c0_120 = arith.constant 0 : index
    %c0_121 = arith.constant 0 : index
    %c0_122 = arith.constant 0 : index
    %c0_123 = arith.constant 0 : index
    %80 = vector.load %arg8[%c0_120, %c0_121, %c0_122, %c0_123] : memref<1x10x10x8xf32, #tpu.memory_space<vmem>>, vector<1x10x1x8xf32>
    tpu.vector_store %arg8[%c0_120, %c0_121, %c0_122, %c0_123], %77 {strides = array<i32>} : memref<1x10x10x8xf32, #tpu.memory_space<vmem>>, vector<1x10x1x8xf32>,
    %c0_124 = arith.constant 0 : index
    %c0_125 = arith.constant 0 : index
    %c9_126 = arith.constant 9 : index
    %c0_127 = arith.constant 0 : index
    %81 = vector.load %arg8[%c0_124, %c0_125, %c9_126, %c0_127] : memref<1x10x10x8xf32, #tpu.memory_space<vmem>>, vector<1x10x1x8xf32>
    tpu.vector_store %arg8[%c0_124, %c0_125, %c9_126, %c0_127], %77 {strides = array<i32>} : memref<1x10x10x8xf32, #tpu.memory_space<vmem>>, vector<1x10x1x8xf32>,
    %82 = vector.shape_cast %75 : vector<64x8xf32> to vector<1x8x8x8xf32>
    %c0_128 = arith.constant 0 : index
    %c1_129 = arith.constant 1 : index
    %c1_130 = arith.constant 1 : index
    %c0_131 = arith.constant 0 : index
    %83 = vector.load %arg8[%c0_128, %c1_129, %c1_130, %c0_131] : memref<1x10x10x8xf32, #tpu.memory_space<vmem>>, vector<1x8x8x8xf32>
    tpu.vector_store %arg8[%c0_128, %c1_129, %c1_130, %c0_131], %82 {strides = array<i32>} : memref<1x10x10x8xf32, #tpu.memory_space<vmem>>, vector<1x8x8x8xf32>,
    %cst_132 = arith.constant 0.000000e+00 : f32
    %84 = vector.broadcast %cst_132 : f32 to vector<64x8xf32>
    %c0_133 = arith.constant 0 : index
    %c0_134 = arith.constant 0 : index
    %c0_135 = arith.constant 0 : index
    %c0_136 = arith.constant 0 : index
    %85 = vector.load %arg8[%c0_133, %c0_134, %c0_135, %c0_136] : memref<1x10x10x8xf32, #tpu.memory_space<vmem>>, vector<1x8x8x8xf32>
    %86 = vector.shape_cast %85 : vector<1x8x8x8xf32> to vector<64x8xf32>
    %c0_137 = arith.constant 0 : index
    %c0_138 = arith.constant 0 : index
    %c0_139 = arith.constant 0 : index
    %c0_140 = arith.constant 0 : index
    %87 = vector.load %arg4[%c0_137, %c0_138, %c0_139, %c0_140] : memref<3x3x8x8xf32, #tpu.memory_space<vmem>>, vector<1x1x8x8xf32>
    %88 = vector.shape_cast %87 : vector<1x1x8x8xf32> to vector<8x8xf32>
    %cst_141 = arith.constant dense<0.000000e+00> : vector<64x8xf32>
    %89 = tpu.matmul %86, %88, %cst_141 {dimension_numbers = #tpu.dot_dimension_numbers<[1], [0], [0], [1], [0, 0, 1, 1], [], []>} : vector<64x8xf32>, vector<8x8xf32>, vector<64x8xf32> -> vector<64x8xf32>
    %90 = arith.addf %84, %89 : vector<64x8xf32>
    %c0_142 = arith.constant 0 : index
    %c0_143 = arith.constant 0 : index
    %c1_144 = arith.constant 1 : index
    %c0_145 = arith.constant 0 : index
    %91 = vector.load %arg8[%c0_142, %c0_143, %c1_144, %c0_145] : memref<1x10x10x8xf32, #tpu.memory_space<vmem>>, vector<1x8x8x8xf32>
    %92 = vector.shape_cast %91 : vector<1x8x8x8xf32> to vector<64x8xf32>
    %c0_146 = arith.constant 0 : index
    %c1_147 = arith.constant 1 : index
    %c0_148 = arith.constant 0 : index
    %c0_149 = arith.constant 0 : index
    %93 = vector.load %arg4[%c0_146, %c1_147, %c0_148, %c0_149] : memref<3x3x8x8xf32, #tpu.memory_space<vmem>>, vector<1x1x8x8xf32>
    %94 = vector.shape_cast %93 : vector<1x1x8x8xf32> to vector<8x8xf32>
    %cst_150 = arith.constant dense<0.000000e+00> : vector<64x8xf32>
    %95 = tpu.matmul %92, %94, %cst_150 {dimension_numbers = #tpu.dot_dimension_numbers<[1], [0], [0], [1], [0, 0, 1, 1], [], []>} : vector<64x8xf32>, vector<8x8xf32>, vector<64x8xf32> -> vector<64x8xf32>
    %96 = arith.addf %90, %95 : vector<64x8xf32>
    %c0_151 = arith.constant 0 : index
    %c0_152 = arith.constant 0 : index
    %c2_153 = arith.constant 2 : index
    %c0_154 = arith.constant 0 : index
    %97 = vector.load %arg8[%c0_151, %c0_152, %c2_153, %c0_154] : memref<1x10x10x8xf32, #tpu.memory_space<vmem>>, vector<1x8x8x8xf32>
    %98 = vector.shape_cast %97 : vector<1x8x8x8xf32> to vector<64x8xf32>
    %c0_155 = arith.constant 0 : index
    %c2_156 = arith.constant 2 : index
    %c0_157 = arith.constant 0 : index
    %c0_158 = arith.constant 0 : index
    %99 = vector.load %arg4[%c0_155, %c2_156, %c0_157, %c0_158] : memref<3x3x8x8xf32, #tpu.memory_space<vmem>>, vector<1x1x8x8xf32>
    %100 = vector.shape_cast %99 : vector<1x1x8x8xf32> to vector<8x8xf32>
    %cst_159 = arith.constant dense<0.000000e+00> : vector<64x8xf32>
    %101 = tpu.matmul %98, %100, %cst_159 {dimension_numbers = #tpu.dot_dimension_numbers<[1], [0], [0], [1], [0, 0, 1, 1], [], []>} : vector<64x8xf32>, vector<8x8xf32>, vector<64x8xf32> -> vector<64x8xf32>
    %102 = arith.addf %96, %101 : vector<64x8xf32>
    %c0_160 = arith.constant 0 : index
    %c1_161 = arith.constant 1 : index
    %c0_162 = arith.constant 0 : index
    %c0_163 = arith.constant 0 : index
    %103 = vector.load %arg8[%c0_160, %c1_161, %c0_162, %c0_163] : memref<1x10x10x8xf32, #tpu.memory_space<vmem>>, vector<1x8x8x8xf32>
    %104 = vector.shape_cast %103 : vector<1x8x8x8xf32> to vector<64x8xf32>
    %c1_164 = arith.constant 1 : index
    %c0_165 = arith.constant 0 : index
    %c0_166 = arith.constant 0 : index
    %c0_167 = arith.constant 0 : index
    %105 = vector.load %arg4[%c1_164, %c0_165, %c0_166, %c0_167] : memref<3x3x8x8xf32, #tpu.memory_space<vmem>>, vector<1x1x8x8xf32>
    %106 = vector.shape_cast %105 : vector<1x1x8x8xf32> to vector<8x8xf32>
    %cst_168 = arith.constant dense<0.000000e+00> : vector<64x8xf32>
    %107 = tpu.matmul %104, %106, %cst_168 {dimension_numbers = #tpu.dot_dimension_numbers<[1], [0], [0], [1], [0, 0, 1, 1], [], []>} : vector<64x8xf32>, vector<8x8xf32>, vector<64x8xf32> -> vector<64x8xf32>
    %108 = arith.addf %102, %107 : vector<64x8xf32>
    %c0_169 = arith.constant 0 : index
    %c1_170 = arith.constant 1 : index
    %c1_171 = arith.constant 1 : index
    %c0_172 = arith.constant 0 : index
    %109 = vector.load %arg8[%c0_169, %c1_170, %c1_171, %c0_172] : memref<1x10x10x8xf32, #tpu.memory_space<vmem>>, vector<1x8x8x8xf32>
    %110 = vector.shape_cast %109 : vector<1x8x8x8xf32> to vector<64x8xf32>
    %c1_173 = arith.constant 1 : index
    %c1_174 = arith.constant 1 : index
    %c0_175 = arith.constant 0 : index
    %c0_176 = arith.constant 0 : index
    %111 = vector.load %arg4[%c1_173, %c1_174, %c0_175, %c0_176] : memref<3x3x8x8xf32, #tpu.memory_space<vmem>>, vector<1x1x8x8xf32>
    %112 = vector.shape_cast %111 : vector<1x1x8x8xf32> to vector<8x8xf32>
    %cst_177 = arith.constant dense<0.000000e+00> : vector<64x8xf32>
    %113 = tpu.matmul %110, %112, %cst_177 {dimension_numbers = #tpu.dot_dimension_numbers<[1], [0], [0], [1], [0, 0, 1, 1], [], []>} : vector<64x8xf32>, vector<8x8xf32>, vector<64x8xf32> -> vector<64x8xf32>
    %114 = arith.addf %108, %113 : vector<64x8xf32>
    %c0_178 = arith.constant 0 : index
    %c1_179 = arith.constant 1 : index
    %c2_180 = arith.constant 2 : index
    %c0_181 = arith.constant 0 : index
    %115 = vector.load %arg8[%c0_178, %c1_179, %c2_180, %c0_181] : memref<1x10x10x8xf32, #tpu.memory_space<vmem>>, vector<1x8x8x8xf32>
    %116 = vector.shape_cast %115 : vector<1x8x8x8xf32> to vector<64x8xf32>
    %c1_182 = arith.constant 1 : index
    %c2_183 = arith.constant 2 : index
    %c0_184 = arith.constant 0 : index
    %c0_185 = arith.constant 0 : index
    %117 = vector.load %arg4[%c1_182, %c2_183, %c0_184, %c0_185] : memref<3x3x8x8xf32, #tpu.memory_space<vmem>>, vector<1x1x8x8xf32>
    %118 = vector.shape_cast %117 : vector<1x1x8x8xf32> to vector<8x8xf32>
    %cst_186 = arith.constant dense<0.000000e+00> : vector<64x8xf32>
    %119 = tpu.matmul %116, %118, %cst_186 {dimension_numbers = #tpu.dot_dimension_numbers<[1], [0], [0], [1], [0, 0, 1, 1], [], []>} : vector<64x8xf32>, vector<8x8xf32>, vector<64x8xf32> -> vector<64x8xf32>
    %120 = arith.addf %114, %119 : vector<64x8xf32>
    %c0_187 = arith.constant 0 : index
    %c2_188 = arith.constant 2 : index
    %c0_189 = arith.constant 0 : index
    %c0_190 = arith.constant 0 : index
    %121 = vector.load %arg8[%c0_187, %c2_188, %c0_189, %c0_190] : memref<1x10x10x8xf32, #tpu.memory_space<vmem>>, vector<1x8x8x8xf32>
    %122 = vector.shape_cast %121 : vector<1x8x8x8xf32> to vector<64x8xf32>
    %c2_191 = arith.constant 2 : index
    %c0_192 = arith.constant 0 : index
    %c0_193 = arith.constant 0 : index
    %c0_194 = arith.constant 0 : index
    %123 = vector.load %arg4[%c2_191, %c0_192, %c0_193, %c0_194] : memref<3x3x8x8xf32, #tpu.memory_space<vmem>>, vector<1x1x8x8xf32>
    %124 = vector.shape_cast %123 : vector<1x1x8x8xf32> to vector<8x8xf32>
    %cst_195 = arith.constant dense<0.000000e+00> : vector<64x8xf32>
    %125 = tpu.matmul %122, %124, %cst_195 {dimension_numbers = #tpu.dot_dimension_numbers<[1], [0], [0], [1], [0, 0, 1, 1], [], []>} : vector<64x8xf32>, vector<8x8xf32>, vector<64x8xf32> -> vector<64x8xf32>
    %126 = arith.addf %120, %125 : vector<64x8xf32>
    %c0_196 = arith.constant 0 : index
    %c2_197 = arith.constant 2 : index
    %c1_198 = arith.constant 1 : index
    %c0_199 = arith.constant 0 : index
    %127 = vector.load %arg8[%c0_196, %c2_197, %c1_198, %c0_199] : memref<1x10x10x8xf32, #tpu.memory_space<vmem>>, vector<1x8x8x8xf32>
    %128 = vector.shape_cast %127 : vector<1x8x8x8xf32> to vector<64x8xf32>
    %c2_200 = arith.constant 2 : index
    %c1_201 = arith.constant 1 : index
    %c0_202 = arith.constant 0 : index
    %c0_203 = arith.constant 0 : index
    %129 = vector.load %arg4[%c2_200, %c1_201, %c0_202, %c0_203] : memref<3x3x8x8xf32, #tpu.memory_space<vmem>>, vector<1x1x8x8xf32>
    %130 = vector.shape_cast %129 : vector<1x1x8x8xf32> to vector<8x8xf32>
    %cst_204 = arith.constant dense<0.000000e+00> : vector<64x8xf32>
    %131 = tpu.matmul %128, %130, %cst_204 {dimension_numbers = #tpu.dot_dimension_numbers<[1], [0], [0], [1], [0, 0, 1, 1], [], []>} : vector<64x8xf32>, vector<8x8xf32>, vector<64x8xf32> -> vector<64x8xf32>
    %132 = arith.addf %126, %131 : vector<64x8xf32>
    %c0_205 = arith.constant 0 : index
    %c2_206 = arith.constant 2 : index
    %c2_207 = arith.constant 2 : index
    %c0_208 = arith.constant 0 : index
    %133 = vector.load %arg8[%c0_205, %c2_206, %c2_207, %c0_208] : memref<1x10x10x8xf32, #tpu.memory_space<vmem>>, vector<1x8x8x8xf32>
    %134 = vector.shape_cast %133 : vector<1x8x8x8xf32> to vector<64x8xf32>
    %c2_209 = arith.constant 2 : index
    %c2_210 = arith.constant 2 : index
    %c0_211 = arith.constant 0 : index
    %c0_212 = arith.constant 0 : index
    %135 = vector.load %arg4[%c2_209, %c2_210, %c0_211, %c0_212] : memref<3x3x8x8xf32, #tpu.memory_space<vmem>>, vector<1x1x8x8xf32>
    %136 = vector.shape_cast %135 : vector<1x1x8x8xf32> to vector<8x8xf32>
    %cst_213 = arith.constant dense<0.000000e+00> : vector<64x8xf32>
    %137 = tpu.matmul %134, %136, %cst_213 {dimension_numbers = #tpu.dot_dimension_numbers<[1], [0], [0], [1], [0, 0, 1, 1], [], []>} : vector<64x8xf32>, vector<8x8xf32>, vector<64x8xf32> -> vector<64x8xf32>
    %138 = arith.addf %132, %137 : vector<64x8xf32>
    %c0_214 = arith.constant 0 : index
    %c0_215 = arith.constant 0 : index
    %139 = vector.load %arg5[%c0_214, %c0_215] : memref<1x8xf32, #tpu.memory_space<vmem>>, vector<1x8xf32>
    %140 = vector.broadcast %139 : vector<1x8xf32> to vector<64x8xf32>
    %141 = arith.addf %138, %140 : vector<64x8xf32>
    %cst_216 = arith.constant 0.000000e+00 : f32
    %142 = vector.broadcast %cst_216 : f32 to vector<64x8xf32>
    %143 = arith.maximumf %141, %142 : vector<64x8xf32>
    %144 = vector.shape_cast %143 : vector<64x8xf32> to vector<1x8x8x8xf32>
    %c0_217 = arith.constant 0 : index
    %c0_218 = arith.constant 0 : index
    %c0_219 = arith.constant 0 : index
    %c0_220 = arith.constant 0 : index
    %145 = vector.load %arg6[%c0_217, %c0_218, %c0_219, %c0_220] : memref<1x8x8x8xf32, #tpu.memory_space<vmem>>, vector<1x8x8x8xf32>
    tpu.vector_store %arg6[%c0_217, %c0_218, %c0_219, %c0_220], %144 {strides = array<i32>} : memref<1x8x8x8xf32, #tpu.memory_space<vmem>>, vector<1x8x8x8xf32>,
    return
  }
  func.func @transform_0(%arg0: i32) -> (i32, i32, i32, i32) {
    %c0_i32 = arith.constant 0 : i32
    %c0_i32_0 = arith.constant 0 : i32
    %c0_i32_1 = arith.constant 0 : i32
    %c0_i32_2 = arith.constant 0 : i32
    return %arg0, %c0_i32, %c0_i32_0, %c0_i32_1 : i32, i32, i32, i32
  }
  func.func @transform_1(%arg0: i32) -> (i32, i32, i32, i32) {
    %c0_i32 = arith.constant 0 : i32
    %c0_i32_0 = arith.constant 0 : i32
    %c0_i32_1 = arith.constant 0 : i32
    %c0_i32_2 = arith.constant 0 : i32
    %c0_i32_3 = arith.constant 0 : i32
    return %c0_i32, %c0_i32_0, %c0_i32_1, %c0_i32_2 : i32, i32, i32, i32
  }
  func.func @transform_2(%arg0: i32) -> (i32, i32) {
    %c0_i32 = arith.constant 0 : i32
    %c0_i32_0 = arith.constant 0 : i32
    %c0_i32_1 = arith.constant 0 : i32
    return %c0_i32, %c0_i32_0 : i32, i32
  }
  func.func @transform_3(%arg0: i32) -> (i32, i32, i32, i32) {
    %c0_i32 = arith.constant 0 : i32
    %c0_i32_0 = arith.constant 0 : i32
    %c0_i32_1 = arith.constant 0 : i32
    %c0_i32_2 = arith.constant 0 : i32
    %c0_i32_3 = arith.constant 0 : i32
    return %c0_i32, %c0_i32_0, %c0_i32_1, %c0_i32_2 : i32, i32, i32, i32
  }
  func.func @transform_4(%arg0: i32) -> (i32, i32) {
    %c0_i32 = arith.constant 0 : i32
    %c0_i32_0 = arith.constant 0 : i32
    %c0_i32_1 = arith.constant 0 : i32
    return %c0_i32, %c0_i32_0 : i32, i32
  }
  func.func @transform_5(%arg0: i32) -> (i32, i32, i32, i32) {
    %c0_i32 = arith.constant 0 : i32
    %c0_i32_0 = arith.constant 0 : i32
    %c0_i32_1 = arith.constant 0 : i32
    %c0_i32_2 = arith.constant 0 : i32
    return %arg0, %c0_i32, %c0_i32_0, %c0_i32_1 : i32, i32, i32, i32
  }
}

</mosaic_0001>

<llo_original>
// kernel: tpu_custom_call.1
$region0: #{tpu_custom_call.1}
  #allocation0 [shape = 'u32[]', space=smem, size = 0x4, offset = 0x4, fixed_abs, tag = 'smem constant byte address 0x4 - core index']
  #allocation1 [shape = 'u32[144,128]{1,0:T(1,128)}', space=vmem, size = 0x12000, scoped, tag = 'internal scratch']
  #allocation2 [shape = 'f32[1,10,10,4]{3,2,1,0:T(8,128)}', space=vmem, size = 0x14000, scoped, tag = 'scratch operand']
  #allocation3 [shape = 'f32[1,10,10,8]{3,2,1,0:T(8,128)}', space=vmem, size = 0x14000, scoped, tag = 'scratch operand']
  %s0 = inlined_call_operand.vmem [shape: f32[2,16,16,4], index: 0, kind: input, shape index: {}]
  %s1 = inlined_call_operand.vmem [shape: f32[3,3,4,8], index: 1, kind: input, shape index: {}]
  %s2 = inlined_call_operand.vmem [shape: f32[1,8], index: 2, kind: input, shape index: {}]
  %s3 = inlined_call_operand.vmem [shape: f32[3,3,8,8], index: 3, kind: input, shape index: {}]
  %s4 = inlined_call_operand.vmem [shape: f32[1,8], index: 4, kind: input, shape index: {}]
  %s5 = inlined_call_operand.hbm [shape: f32[2,8,8,8], index: 5, kind: output, shape index: {}]
  %s6 = sld [smem:[#allocation0]]
  $region53: #{tpu_custom_call.1} parent=0
    _
  %s8 = ssub.s32 1, %s6
  %s9 = scalar_select 0, %s8, %s6
  $region1: #{tpu_custom_call.1} parent=0
    #allocation4 [shape = 'u8[65536]{0}', space=vmem, size = 0x10000, scoped, tag = 'output window, operand 0']
    #allocation5 [shape = 's32[2]{0}', space=sflag, size = 0x8, scoped, tag = 'scoped memory for tpu_custom_call.1']
    %10 = vsyncpa [#allocation5], 0
    %s11 = scalar_lea.sflag [#allocation5], 1
    %12 = vsyncpa %s11, 0
    loop: start=0, step=1, limit=4
    $region2: #{tpu_custom_call.1} parent=1 // loop_pre_header
      _
    $region3: #{tpu_custom_call.1} parent=1 // loop_header
      %s14 = sphi 0, %s18
      %p15 = scmp.ge.s32.totalorder %s14, 4
      %s24 = sphi 0, %s26
      %s27 = sphi 0, %s24
      %s28 = sphi 0, %s27
      %s44 = sphi 0, %s28
      %s48 = sphi 0, %s48
      %s50 = sphi 0, %s48
      %s51 = sphi 0, %s50
      %s65 = sphi 0, %s51
      %s69 = sphi 0, %s69
      %s71 = sphi 0, %s69
      %s72 = sphi 0, %s71
      %s86 = sphi 0, %s72
      %s90 = sphi 0, %s90
      %s92 = sphi 0, %s90
      %s93 = sphi 0, %s92
      %s107 = sphi 0, %s93
      %s111 = sphi 0, %s111
      %s113 = sphi 0, %s111
      %s114 = sphi 0, %s113
      %s128 = sphi 0, %s114
      %s134 = sphi 0, %s136
      %s137 = sphi 0, %s134
      %s138 = sphi 0, %s137
      %s154 = sphi 0, %s138
    $region4: #{tpu_custom_call.1} parent=1 // loop_header_branch
      %17 = sbr.rel (%p15) target = $region8
    $region5: #{tpu_custom_call.1} parent=1 // loop_body
      %s19 = ssub.s32 %s14, 1
      %s20 = ssub.s32 %s14, 2
      %s21 = sadd.s32 %s14, 1
      %s22 = ssub.s32 %s14, %s21
      %p23 = scmp.eq.s32.totalorder %s22, 0
      %s25 = sadd.s32 %s24, 1
      %s26 = scalar_select %p23, %s24, %s25
      %p29 = pneg %p23
      %p30 = scmp.eq.s32.totalorder %s14, 1
      %p31 = por %p29, %p30
      %p32 = scmp.ne.s32.totalorder %s24, %s27
      %p33 = scmp.eq.s32.totalorder %s14, 0
      %p34 = por %p32, %p33
      %p35 = scmp.ne.s32.totalorder %s24, %s27
      %p36 = scmp.eq.s32.totalorder %s19, 1
      %p37 = por %p35, %p36
      %p38 = scmp.ne.s32.totalorder %s27, %s28
      %p39 = scmp.eq.s32.totalorder %s19, 0
      %p40 = por %p38, %p39
      %p41 = scmp.ne.s32.totalorder %s27, %s28
      %p42 = scmp.eq.s32.totalorder %s20, 1
      %p43 = por %p41, %p42
      %p45 = scmp.ne.s32.totalorder %s28, %s44
      %p46 = scmp.eq.s32.totalorder %s20, 0
      %p47 = por %p45, %p46
      %s49 = sadd.s32 %s48, 1
      %p52 = scmp.eq.s32.totalorder %s14, 1
      %p53 = scmp.ne.s32.totalorder %s48, %s50
      %p54 = scmp.eq.s32.totalorder %s14, 0
      %p55 = por %p53, %p54
      %p56 = scmp.ne.s32.totalorder %s48, %s50
      %p57 = scmp.eq.s32.totalorder %s19, 1
      %p58 = por %p56, %p57
      %p59 = scmp.ne.s32.totalorder %s50, %s51
      %p60 = scmp.eq.s32.totalorder %s19, 0
      %p61 = por %p59, %p60
      %p62 = scmp.ne.s32.totalorder %s50, %s51
      %p63 = scmp.eq.s32.totalorder %s20, 1
      %p64 = por %p62, %p63
      %p66 = scmp.ne.s32.totalorder %s51, %s65
      %p67 = scmp.eq.s32.totalorder %s20, 0
      %p68 = por %p66, %p67
      %s70 = sadd.s32 %s69, 1
      %p73 = scmp.eq.s32.totalorder %s14, 1
      %p74 = scmp.ne.s32.totalorder %s69, %s71
      %p75 = scmp.eq.s32.totalorder %s14, 0
      %p76 = por %p74, %p75
      %p77 = scmp.ne.s32.totalorder %s69, %s71
      %p78 = scmp.eq.s32.totalorder %s19, 1
      %p79 = por %p77, %p78
      %p80 = scmp.ne.s32.totalorder %s71, %s72
      %p81 = scmp.eq.s32.totalorder %s19, 0
      %p82 = por %p80, %p81
      %p83 = scmp.ne.s32.totalorder %s71, %s72
      %p84 = scmp.eq.s32.totalorder %s20, 1
      %p85 = por %p83, %p84
      %p87 = scmp.ne.s32.totalorder %s72, %s86
      %p88 = scmp.eq.s32.totalorder %s20, 0
      %p89 = por %p87, %p88
      %s91 = sadd.s32 %s90, 1
      %p94 = scmp.eq.s32.totalorder %s14, 1
      %p95 = scmp.ne.s32.totalorder %s90, %s92
      %p96 = scmp.eq.s32.totalorder %s14, 0
      %p97 = por %p95, %p96
      %p98 = scmp.ne.s32.totalorder %s90, %s92
      %p99 = scmp.eq.s32.totalorder %s19, 1
      %p100 = por %p98, %p99
      %p101 = scmp.ne.s32.totalorder %s92, %s93
      %p102 = scmp.eq.s32.totalorder %s19, 0
      %p103 = por %p101, %p102
      %p104 = scmp.ne.s32.totalorder %s92, %s93
      %p105 = scmp.eq.s32.totalorder %s20, 1
      %p106 = por %p104, %p105
      %p108 = scmp.ne.s32.totalorder %s93, %s107
      %p109 = scmp.eq.s32.totalorder %s20, 0
      %p110 = por %p108, %p109
      %s112 = sadd.s32 %s111, 1
      %p115 = scmp.eq.s32.totalorder %s14, 1
      %p116 = scmp.ne.s32.totalorder %s111, %s113
      %p117 = scmp.eq.s32.totalorder %s14, 0
      %p118 = por %p116, %p117
      %p119 = scmp.ne.s32.totalorder %s111, %s113
      %p120 = scmp.eq.s32.totalorder %s19, 1
      %p121 = por %p119, %p120
      %p122 = scmp.ne.s32.totalorder %s113, %s114
      %p123 = scmp.eq.s32.totalorder %s19, 0
      %p124 = por %p122, %p123
      %p125 = scmp.ne.s32.totalorder %s113, %s114
      %p126 = scmp.eq.s32.totalorder %s20, 1
      %p127 = por %p125, %p126
      %p129 = scmp.ne.s32.totalorder %s114, %s128
      %p130 = scmp.eq.s32.totalorder %s20, 0
      %p131 = por %p129, %p130
      %s132 = ssub.s32 %s14, %s21
      %p133 = scmp.eq.s32.totalorder %s132, 0
      %s135 = sadd.s32 %s134, 1
      %s136 = scalar_select %p133, %s134, %s135
      %p139 = pneg %p133
      %p140 = scmp.eq.s32.totalorder %s14, 1
      %p141 = por %p139, %p140
      %p142 = scmp.ne.s32.totalorder %s134, %s137
      %p143 = scmp.eq.s32.totalorder %s14, 0
      %p144 = por %p142, %p143
      %p145 = scmp.ne.s32.totalorder %s134, %s137
      %p146 = scmp.eq.s32.totalorder %s19, 1
      %p147 = por %p145, %p146
      %p148 = scmp.ne.s32.totalorder %s137, %s138
      %p149 = scmp.eq.s32.totalorder %s19, 0
      %p150 = por %p148, %p149
      %p151 = scmp.ne.s32.totalorder %s137, %s138
      %p152 = scmp.eq.s32.totalorder %s20, 1
      %p153 = por %p151, %p152
      %p155 = scmp.ne.s32.totalorder %s138, %s154
      %p156 = scmp.eq.s32.totalorder %s20, 0
      %p157 = por %p155, %p156
      %p158 = scmp.le.s32.totalorder 1, %s14
      %p159 = scmp.lt.s32.totalorder %s14, 3
      %p160 = pnand %p158, %p159
      %p161 = pneg %p160
      // Predicated region
      $region9: #{tpu_custom_call.1} parent=5 // pred_check
        _
      $region10: #{tpu_custom_call.1} parent=5 // pred_check_branch
        %163 = sbr.rel (%p160) target = $region12
      $region11: #{tpu_custom_call.1} parent=5 // pred_region
        %s164 = ssub.s32 %s14, 1
        // Predicated region
        $region13: #{tpu_custom_call.1} parent=11 // pred_check
          %p165 = pneg %p61
        $region14: #{tpu_custom_call.1} parent=11 // pred_check_branch
          %167 = sbr.rel (%p165) target = $region16
        $region15: #{tpu_custom_call.1} parent=11 // pred_region
          _
        $region16: #{tpu_custom_call.1} parent=11 // pred_fallthru
          _
        // Predicated region
        $region17: #{tpu_custom_call.1} parent=11 // pred_check
          %p168 = pneg %p82
        $region18: #{tpu_custom_call.1} parent=11 // pred_check_branch
          %170 = sbr.rel (%p168) target = $region20
        $region19: #{tpu_custom_call.1} parent=11 // pred_region
          _
        $region20: #{tpu_custom_call.1} parent=11 // pred_fallthru
          _
        // Predicated region
        $region21: #{tpu_custom_call.1} parent=11 // pred_check
          %p171 = pneg %p103
        $region22: #{tpu_custom_call.1} parent=11 // pred_check_branch
          %173 = sbr.rel (%p171) target = $region24
        $region23: #{tpu_custom_call.1} parent=11 // pred_region
          _
        $region24: #{tpu_custom_call.1} parent=11 // pred_fallthru
          _
        // Predicated region
        $region25: #{tpu_custom_call.1} parent=11 // pred_check
          %p174 = pneg %p124
        $region26: #{tpu_custom_call.1} parent=11 // pred_check_branch
          %176 = sbr.rel (%p174) target = $region28
        $region27: #{tpu_custom_call.1} parent=11 // pred_region
          _
        $region28: #{tpu_custom_call.1} parent=11 // pred_fallthru
          _
      $region12: #{tpu_custom_call.1} parent=5 // pred_fallthru
        _
      %p177 = scmp.lt.s32.totalorder %s14, 2
      // Predicated region
      $region29: #{tpu_custom_call.1} parent=5 // pred_check
        %p178 = pneg %p177
      $region30: #{tpu_custom_call.1} parent=5 // pred_check_branch
        %180 = sbr.rel (%p178) target = $region32
      $region31: #{tpu_custom_call.1} parent=5 // pred_region
        // Predicated region
        $region33: #{tpu_custom_call.1} parent=31 // pred_check
          %p181 = pneg %p34
        $region34: #{tpu_custom_call.1} parent=31 // pred_check_branch
          %183 = sbr.rel (%p181) target = $region36
        $region35: #{tpu_custom_call.1} parent=31 // pred_region
          %p184 = scmp.lt.s32.totalorder %s14, 1
          %s185 = scalar_select %p184, %s14, 1
          %s186 = smul.addr %s185, 32
          %s187 = smul.addr %s186, 8
          %s188 = scalar_lea.vmem %s0, %s187
        $region36: #{tpu_custom_call.1} parent=31 // pred_fallthru
          _
      $region32: #{tpu_custom_call.1} parent=5 // pred_fallthru
        _
      %p189 = scmp.le.s32.totalorder 1, %s14
      %p190 = scmp.lt.s32.totalorder %s14, 3
      %p191 = pnand %p189, %p190
      %p192 = pneg %p191
      // Predicated region
      $region37: #{tpu_custom_call.1} parent=5 // pred_check
        _
      $region38: #{tpu_custom_call.1} parent=5 // pred_check_branch
        %194 = sbr.rel (%p191) target = $region40
      $region39: #{tpu_custom_call.1} parent=5 // pred_region
        %s195 = ssub.s32 %s14, 1
        %p196 = scmp.lt.s32.totalorder %s19, 1
        %s197 = scalar_select %p196, %s19, 1
        %s198 = smul.addr %s197, 32
        %s199 = smul.addr %s198, 8
        %s200 = scalar_lea.vmem %s0, %s199
        %p201 = pneg %p40
        %p202 = pneg %p37
        %p203 = pneg %p61
        %p204 = pneg %p58
        %p205 = pneg %p82
        %p206 = pneg %p79
        %p207 = pneg %p103
        %p208 = pneg %p100
        %p209 = pneg %p124
        %p210 = pneg %p121
        %p211 = pneg %p150
        %p212 = pneg %p147
        %s213 = sand.u32 %s137, 1
        %s214 = scalar_lea.sflag [#allocation5], %s213
        %s215 = sand.u32 %s137, 1
        %s216 = smul.addr %s215, 64
        %s217 = scalar_lea.vmem [#allocation4], %s216
        %p218 = scmp.lt.s32.totalorder %s19, 1
        %s219 = scalar_select %p218, %s19, 1
        %s220 = smul.addr %s219, 32
        %s221 = smul.addr %s220, 8
        %s222 = scalar_lea.vmem %s0, %s221
        %v223 = vld [vmem:[%s222] ss:$2 sm:$0xff]
        %s224 = scalar_lea.vmem %s222, 16
        %v225 = vld [vmem:[%s224] ss:$2 sm:$0xff]
        %s226 = scalar_lea.vmem %s222, 32
        %v227 = vld [vmem:[%s226] ss:$2 sm:$0xff]
        %s228 = scalar_lea.vmem %s222, 48
        %v229 = vld [vmem:[%s228] ss:$2 sm:$0xff]
        %s230 = scalar_lea.vmem %s222, 64
        %v231 = vld [vmem:[%s230] ss:$2 sm:$0xff]
        %s232 = scalar_lea.vmem %s222, 80
        %v233 = vld [vmem:[%s232] ss:$2 sm:$0xff]
        %s234 = scalar_lea.vmem %s222, 96
        %v235 = vld [vmem:[%s234] ss:$2 sm:$0xff]
        %s236 = scalar_lea.vmem %s222, 112
        %v237 = vld [vmem:[%s236] ss:$2 sm:$0xff]
        %s238 = scalar_lea.vmem %s222, 128
        %v239 = vld [vmem:[%s238] ss:$2 sm:$0xff]
        %s240 = scalar_lea.vmem %s222, 144
        %v241 = vld [vmem:[%s240] ss:$2 sm:$0xff]
        %s242 = scalar_lea.vmem %s222, 160
        %v243 = vld [vmem:[%s242] ss:$2 sm:$0xff]
        %s244 = scalar_lea.vmem %s222, 176
        %v245 = vld [vmem:[%s244] ss:$2 sm:$0xff]
        %s246 = scalar_lea.vmem %s222, 192
        %v247 = vld [vmem:[%s246] ss:$2 sm:$0xff]
        %s248 = scalar_lea.vmem %s222, 208
        %v249 = vld [vmem:[%s248] ss:$2 sm:$0xff]
        %s250 = scalar_lea.vmem %s222, 224
        %v251 = vld [vmem:[%s250] ss:$2 sm:$0xff]
        %s252 = scalar_lea.vmem %s222, 240
        %v253 = vld [vmem:[%s252] ss:$2 sm:$0xff]
        %s254 = scalar_lea.vmem %s222, 1
        %v255 = vld [vmem:[%s254] ss:$2 sm:$0xff]
        %s256 = scalar_lea.vmem %s222, 17
        %v257 = vld [vmem:[%s256] ss:$2 sm:$0xff]
        %s258 = scalar_lea.vmem %s222, 33
        %v259 = vld [vmem:[%s258] ss:$2 sm:$0xff]
        %s260 = scalar_lea.vmem %s222, 49
        %v261 = vld [vmem:[%s260] ss:$2 sm:$0xff]
        %s262 = scalar_lea.vmem %s222, 65
        %v263 = vld [vmem:[%s262] ss:$2 sm:$0xff]
        %s264 = scalar_lea.vmem %s222, 81
        %v265 = vld [vmem:[%s264] ss:$2 sm:$0xff]
        %s266 = scalar_lea.vmem %s222, 97
        %v267 = vld [vmem:[%s266] ss:$2 sm:$0xff]
        %s268 = scalar_lea.vmem %s222, 113
        %v269 = vld [vmem:[%s268] ss:$2 sm:$0xff]
        %s270 = scalar_lea.vmem %s222, 129
        %v271 = vld [vmem:[%s270] ss:$2 sm:$0xff]
        %s272 = scalar_lea.vmem %s222, 145
        %v273 = vld [vmem:[%s272] ss:$2 sm:$0xff]
        %s274 = scalar_lea.vmem %s222, 161
        %v275 = vld [vmem:[%s274] ss:$2 sm:$0xff]
        %s276 = scalar_lea.vmem %s222, 177
        %v277 = vld [vmem:[%s276] ss:$2 sm:$0xff]
        %s278 = scalar_lea.vmem %s222, 193
        %v279 = vld [vmem:[%s278] ss:$2 sm:$0xff]
        %s280 = scalar_lea.vmem %s222, 209
        %v281 = vld [vmem:[%s280] ss:$2 sm:$0xff]
        %s282 = scalar_lea.vmem %s222, 225
        %v283 = vld [vmem:[%s282] ss:$2 sm:$0xff]
        %s284 = scalar_lea.vmem %s222, 241
        %v285 = vld [vmem:[%s284] ss:$2 sm:$0xff]
        %v286 = vmax.f32 %v223, %v255
        %v287 = vmax.f32 %v225, %v257
        %v288 = vmax.f32 %v227, %v259
        %v289 = vmax.f32 %v229, %v261
        %v290 = vmax.f32 %v231, %v263
        %v291 = vmax.f32 %v233, %v265
        %v292 = vmax.f32 %v235, %v267
        %v293 = vmax.f32 %v237, %v269
        %v294 = vmax.f32 %v239, %v271
        %v295 = vmax.f32 %v241, %v273
        %v296 = vmax.f32 %v243, %v275
        %v297 = vmax.f32 %v245, %v277
        %v298 = vmax.f32 %v247, %v279
        %v299 = vmax.f32 %v249, %v281
        %v300 = vmax.f32 %v251, %v283
        %v301 = vmax.f32 %v253, %v285
        %v302 = vmax.f32 %v286, %v287
        %v303 = vmax.f32 %v288, %v289
        %v304 = vmax.f32 %v290, %v291
        %v305 = vmax.f32 %v292, %v293
        %v306 = vmax.f32 %v294, %v295
        %v307 = vmax.f32 %v296, %v297
        %v308 = vmax.f32 %v298, %v299
        %v309 = vmax.f32 %v300, %v301
        %vm310 = vcmask 31744
        %311 = vst.msk [vmem:[#allocation2] sm:$0xff] %vm310, 0.0
        %vm312 = vcmask 25600
        %313 = vst.msk [vmem:[#allocation2 + $0x8] sm:$0x3] %vm312, 0.0
        %s314 = scalar_lea.vmem [#allocation2], 144
        %315 = vst.msk [vmem:[%s314] sm:$0xff] %vm310, 0.0
        %316 = vst.msk [vmem:[%s314 + $0x8] sm:$0x3] %vm312, 0.0
        %vm317 = vcmask 24576
        %318 = vst.msk [vmem:[#allocation2] sm:$0x1] %vm317, 0.0
        %319 = vst.msk [vmem:[#allocation2 + $0x10] sm:$0x1] %vm317, 0.0
        %320 = vst.msk [vmem:[#allocation2 + $0x20] sm:$0x1] %vm317, 0.0
        %321 = vst.msk [vmem:[#allocation2 + $0x30] sm:$0x1] %vm317, 0.0
        %322 = vst.msk [vmem:[#allocation2 + $0x40] sm:$0x1] %vm317, 0.0
        %323 = vst.msk [vmem:[#allocation2 + $0x50] sm:$0x1] %vm317, 0.0
        %324 = vst.msk [vmem:[#allocation2 + $0x60] sm:$0x1] %vm317, 0.0
        %325 = vst.msk [vmem:[#allocation2 + $0x70] sm:$0x1] %vm317, 0.0
        %326 = vst.msk [vmem:[#allocation2 + $0x80] sm:$0x1] %vm317, 0.0
        %327 = vst.msk [vmem:[#allocation2 + $0x90] sm:$0x1] %vm317, 0.0
        %328 = vst.msk [vmem:[#allocation2 + $0x9] sm:$0x1] %vm317, 0.0
        %329 = vst.msk [vmem:[#allocation2 + $0x19] sm:$0x1] %vm317, 0.0
        %330 = vst.msk [vmem:[#allocation2 + $0x29] sm:$0x1] %vm317, 0.0
        %331 = vst.msk [vmem:[#allocation2 + $0x39] sm:$0x1] %vm317, 0.0
        %332 = vst.msk [vmem:[#allocation2 + $0x49] sm:$0x1] %vm317, 0.0
        %333 = vst.msk [vmem:[#allocation2 + $0x59] sm:$0x1] %vm317, 0.0
        %334 = vst.msk [vmem:[#allocation2 + $0x69] sm:$0x1] %vm317, 0.0
        %335 = vst.msk [vmem:[#allocation2 + $0x79] sm:$0x1] %vm317, 0.0
        %336 = vst.msk [vmem:[#allocation2 + $0x89] sm:$0x1] %vm317, 0.0
        %337 = vst.msk [vmem:[#allocation2 + $0x99] sm:$0x1] %vm317, 0.0
        %s338 = scalar_lea.vmem [#allocation2], 16
        %339 = vst.msk [vmem:[%s338 + $0x1] sm:$0xff] %vm310, %v302
        %340 = vst.msk [vmem:[%s338 + $0x11] sm:$0xff] %vm310, %v303
        %341 = vst.msk [vmem:[%s338 + $0x21] sm:$0xff] %vm310, %v304
        %342 = vst.msk [vmem:[%s338 + $0x31] sm:$0xff] %vm310, %v305
        %343 = vst.msk [vmem:[%s338 + $0x41] sm:$0xff] %vm310, %v306
        %344 = vst.msk [vmem:[%s338 + $0x51] sm:$0xff] %vm310, %v307
        %345 = vst.msk [vmem:[%s338 + $0x61] sm:$0xff] %vm310, %v308
        %346 = vst.msk [vmem:[%s338 + $0x71] sm:$0xff] %vm310, %v309
        %v347 = vld [vmem:[#allocation2] sm:$0xff]
        %v348 = vld [vmem:[#allocation2 + $0x10] sm:$0xff]
        %v349 = vld [vmem:[#allocation2 + $0x20] sm:$0xff]
        %v350 = vld [vmem:[#allocation2 + $0x30] sm:$0xff]
        %v351 = vld [vmem:[#allocation2 + $0x40] sm:$0xff]
        %v352 = vld [vmem:[#allocation2 + $0x50] sm:$0xff]
        %v353 = vld [vmem:[#allocation2 + $0x60] sm:$0xff]
        %v354 = vld [vmem:[#allocation2 + $0x70] sm:$0xff]
        %v355 = vld [vmem:[%s1] sm:$0xf]
        %v356 = vld [vmem:[#allocation2 + $0x1] sm:$0xff]
        %v357 = vld [vmem:[#allocation2 + $0x11] sm:$0xff]
        %v358 = vld [vmem:[#allocation2 + $0x21] sm:$0xff]
        %v359 = vld [vmem:[#allocation2 + $0x31] sm:$0xff]
        %v360 = vld [vmem:[#allocation2 + $0x41] sm:$0xff]
        %v361 = vld [vmem:[#allocation2 + $0x51] sm:$0xff]
        %v362 = vld [vmem:[#allocation2 + $0x61] sm:$0xff]
        %v363 = vld [vmem:[#allocation2 + $0x71] sm:$0xff]
        %s364 = scalar_lea.vmem %s1, 4
        %v365 = vld [vmem:[%s364] sm:$0xf]
        %v367 = vsel %vm310, %v356, 0
        %v370 = vsel %vm310, %v357, 0
        %v373 = vsel %vm310, %v358, 0
        %v376 = vsel %vm310, %v359, 0
        %v379 = vsel %vm310, %v360, 0
        %v382 = vsel %vm310, %v361, 0
        %v385 = vsel %vm310, %v362, 0
        %v388 = vsel %vm310, %v363, 0
        %vm390 = vcmask 1043456
        %v392 = vsel %vm390, %v365, 0
        %394 = vmatprep.subr.mxu0 0.0
        %395 = vmatpush1.msra.mxu0 %v392
        %396 = vmatprep.subr.mxu0 0.0
        %397 = vmatpush1.msra.mxu0 0.0
        %398 = vmatprep.subr.mxu0 0.0
        %399 = vmatpush1.msra.mxu0 0.0
        %400 = vmatprep.subr.mxu0 0.0
        %401 = vmatpush1.msra.mxu0 0.0
        %402 = vmatprep.subr.mxu0 0.0
        %403 = vmatpush1.msra.mxu0 0.0
        %404 = vmatprep.subr.mxu0 0.0
        %405 = vmatpush1.msra.mxu0 0.0
        %406 = vmatprep.subr.mxu0 0.0
        %407 = vmatpush1.msra.mxu0 0.0
        %408 = vmatprep.subr.mxu0 0.0
        %409 = vmatpush1.msra.mxu0 0.0
        %410 = vmatprep.subr.mxu0 0.0
        %411 = vmatpush1.msra.mxu0 0.0
        %412 = vmatprep.subr.mxu0 0.0
        %413 = vmatpush1.msra.mxu0 0.0
        %414 = vmatprep.subr.mxu0 0.0
        %415 = vmatpush1.msra.mxu0 0.0
        %416 = vmatprep.subr.mxu0 0.0
        %417 = vmatpush1.msra.mxu0 0.0
        %418 = vmatprep.subr.mxu0 0.0
        %419 = vmatpush1.msra.mxu0 0.0
        %420 = vmatprep.subr.mxu0 0.0
        %421 = vmatpush1.msra.mxu0 0.0
        %422 = vmatprep.subr.mxu0 0.0
        %423 = vmatpush1.msra.mxu0 0.0
        %424 = vmatprep.subr.mxu0 0.0
        %425 = vmatpush1.msra.mxu0 0.0
        %426 = vmatprep.subr.mxu0 0.0
        %427 = vmatpush1.msra.mxu0 0.0
        %428 = vmatprep.subr.mxu0 0.0
        %429 = vmatpush1.msra.mxu0 0.0
        %430 = vmatprep.subr.mxu0 0.0
        %431 = vmatpush1.msra.mxu0 0.0
        %432 = vmatprep.subr.mxu0 0.0
        %433 = vmatpush1.msra.mxu0 0.0
        %434 = vmatprep.subr.mxu0 0.0
        %435 = vmatpush1.msra.mxu0 0.0
        %436 = vmatprep.subr.mxu0 0.0
        %437 = vmatpush1.msra.mxu0 0.0
        %438 = vmatprep.subr.mxu0 0.0
        %439 = vmatpush1.msra.mxu0 0.0
        %440 = vmatprep.subr.mxu0 0.0
        %441 = vmatpush1.msra.mxu0 0.0
        %442 = vmatprep.subr.mxu0 0.0
        %443 = vmatpush1.msra.mxu0 0.0
        %444 = vmatprep.subr.mxu0 0.0
        %445 = vmatpush1.msra.mxu0 0.0
        %446 = vmatprep.subr.mxu0 0.0
        %447 = vmatpush1.msra.mxu0 0.0
        %448 = vmatprep.subr.mxu0 0.0
        %449 = vmatpush1.msra.mxu0 0.0
        %450 = vmatprep.subr.mxu0 0.0
        %451 = vmatpush1.msra.mxu0 0.0
        %452 = vmatprep.subr.mxu0 0.0
        %453 = vmatpush1.msra.mxu0 0.0
        %454 = vmatprep.subr.mxu0 0.0
        %455 = vmatpush1.msra.mxu0 0.0
        %456 = vmatprep.subr.mxu0 0.0
        %457 = vmatpush1.msra.mxu0 0.0
        %458 = vmatprep.mubr.f32.mxu0 0.0
        %459 = vmatmul.mubr.f32.gmra.mrb[0].mxu0 %v367
        %v460 = vpop.f32.mrb[0].mxu0
        %v461 = vadd.f32 0.0, %v460
        %v462 = vpop.f32.mrb[0].mxu0
        %463 = vmatprep.mubr.f32.mxu0 0.0
        %464 = vmatmul.mubr.f32.gmra.mrb[0].mxu0 %v370
        %v465 = vpop.f32.mrb[0].mxu0
        %v466 = vadd.f32 0.0, %v465
        %v467 = vpop.f32.mrb[0].mxu0
        %468 = vmatprep.mubr.f32.mxu0 0.0
        %469 = vmatmul.mubr.f32.gmra.mrb[0].mxu0 %v373
        %v470 = vpop.f32.mrb[0].mxu0
        %v471 = vadd.f32 0.0, %v470
        %v472 = vpop.f32.mrb[0].mxu0
        %473 = vmatprep.mubr.f32.mxu0 0.0
        %474 = vmatmul.mubr.f32.gmra.mrb[0].mxu0 %v376
        %v475 = vpop.f32.mrb[0].mxu0
        %v476 = vadd.f32 0.0, %v475
        %v477 = vpop.f32.mrb[0].mxu0
        %478 = vmatprep.mubr.f32.mxu0 0.0
        %479 = vmatmul.mubr.f32.gmra.mrb[0].mxu0 %v379
        %v480 = vpop.f32.mrb[0].mxu0
        %v481 = vadd.f32 0.0, %v480
        %v482 = vpop.f32.mrb[0].mxu0
        %483 = vmatprep.mubr.f32.mxu0 0.0
        %484 = vmatmul.mubr.f32.gmra.mrb[0].mxu0 %v382
        %v485 = vpop.f32.mrb[0].mxu0
        %v486 = vadd.f32 0.0, %v485
        %v487 = vpop.f32.mrb[0].mxu0
        %488 = vmatprep.mubr.f32.mxu0 0.0
        %489 = vmatmul.mubr.f32.gmra.mrb[0].mxu0 %v385
        %v490 = vpop.f32.mrb[0].mxu0
        %v491 = vadd.f32 0.0, %v490
        %v492 = vpop.f32.mrb[0].mxu0
        %493 = vmatprep.mubr.f32.mxu0 0.0
        %494 = vmatmul.mubr.f32.gmra.mrb[0].mxu0 %v388
        %v495 = vpop.f32.mrb[0].mxu0
        %v496 = vadd.f32 0.0, %v495
        %v497 = vpop.f32.mrb[0].mxu0
        %498 = vdwg.mxu0
        %v500 = vsel %vm310, %v347, 0
        %v503 = vsel %vm310, %v348, 0
        %v506 = vsel %vm310, %v349, 0
        %v509 = vsel %vm310, %v350, 0
        %v512 = vsel %vm310, %v351, 0
        %v515 = vsel %vm310, %v352, 0
        %v518 = vsel %vm310, %v353, 0
        %v521 = vsel %vm310, %v354, 0
        %v524 = vsel %vm390, %v355, 0
        %526 = vmatprep.subr.mxu0 0.0
        %527 = vmatpush1.msra.mxu0 %v524
        %528 = vmatprep.subr.mxu0 0.0
        %529 = vmatpush1.msra.mxu0 0.0
        %530 = vmatprep.subr.mxu0 0.0
        %531 = vmatpush1.msra.mxu0 0.0
        %532 = vmatprep.subr.mxu0 0.0
        %533 = vmatpush1.msra.mxu0 0.0
        %534 = vmatprep.subr.mxu0 0.0
        %535 = vmatpush1.msra.mxu0 0.0
        %536 = vmatprep.subr.mxu0 0.0
        %537 = vmatpush1.msra.mxu0 0.0
        %538 = vmatprep.subr.mxu0 0.0
        %539 = vmatpush1.msra.mxu0 0.0
        %540 = vmatprep.subr.mxu0 0.0
        %541 = vmatpush1.msra.mxu0 0.0
        %542 = vmatprep.subr.mxu0 0.0
        %543 = vmatpush1.msra.mxu0 0.0
        %544 = vmatprep.subr.mxu0 0.0
        %545 = vmatpush1.msra.mxu0 0.0
        %546 = vmatprep.subr.mxu0 0.0
        %547 = vmatpush1.msra.mxu0 0.0
        %548 = vmatprep.subr.mxu0 0.0
        %549 = vmatpush1.msra.mxu0 0.0
        %550 = vmatprep.subr.mxu0 0.0
        %551 = vmatpush1.msra.mxu0 0.0
        %552 = vmatprep.subr.mxu0 0.0
        %553 = vmatpush1.msra.mxu0 0.0
        %554 = vmatprep.subr.mxu0 0.0
        %555 = vmatpush1.msra.mxu0 0.0
        %556 = vmatprep.subr.mxu0 0.0
        %557 = vmatpush1.msra.mxu0 0.0
        %558 = vmatprep.subr.mxu0 0.0
        %559 = vmatpush1.msra.mxu0 0.0
        %560 = vmatprep.subr.mxu0 0.0
        %561 = vmatpush1.msra.mxu0 0.0
        %562 = vmatprep.subr.mxu0 0.0
        %563 = vmatpush1.msra.mxu0 0.0
        %564 = vmatprep.subr.mxu0 0.0
        %565 = vmatpush1.msra.mxu0 0.0
        %566 = vmatprep.subr.mxu0 0.0
        %567 = vmatpush1.msra.mxu0 0.0
        %568 = vmatprep.subr.mxu0 0.0
        %569 = vmatpush1.msra.mxu0 0.0
        %570 = vmatprep.subr.mxu0 0.0
        %571 = vmatpush1.msra.mxu0 0.0
        %572 = vmatprep.subr.mxu0 0.0
        %573 = vmatpush1.msra.mxu0 0.0
        %574 = vmatprep.subr.mxu0 0.0
        %575 = vmatpush1.msra.mxu0 0.0
        %576 = vmatprep.subr.mxu0 0.0
        %577 = vmatpush1.msra.mxu0 0.0
        %578 = vmatprep.subr.mxu0 0.0
        %579 = vmatpush1.msra.mxu0 0.0
        %580 = vmatprep.subr.mxu0 0.0
        %581 = vmatpush1.msra.mxu0 0.0
        %582 = vmatprep.subr.mxu0 0.0
        %583 = vmatpush1.msra.mxu0 0.0
        %584 = vmatprep.subr.mxu0 0.0
        %585 = vmatpush1.msra.mxu0 0.0
        %586 = vmatprep.subr.mxu0 0.0
        %587 = vmatpush1.msra.mxu0 0.0
        %588 = vmatprep.subr.mxu0 0.0
        %589 = vmatpush1.msra.mxu0 0.0
        %590 = vmatprep.mubr.f32.mxu0 0.0
        %591 = vmatmul.mubr.f32.gmra.mrb[0].mxu0 %v500
        %v592 = vpop.f32.mrb[0].mxu0
        %v593 = vadd.f32 %v461, %v592
        %v594 = vpop.f32.mrb[0].mxu0
        %595 = vmatprep.mubr.f32.mxu0 0.0
        %596 = vmatmul.mubr.f32.gmra.mrb[0].mxu0 %v503
        %v597 = vpop.f32.mrb[0].mxu0
        %v598 = vadd.f32 %v466, %v597
        %v599 = vpop.f32.mrb[0].mxu0
        %600 = vmatprep.mubr.f32.mxu0 0.0
        %601 = vmatmul.mubr.f32.gmra.mrb[0].mxu0 %v506
        %v602 = vpop.f32.mrb[0].mxu0
        %v603 = vadd.f32 %v471, %v602
        %v604 = vpop.f32.mrb[0].mxu0
        %605 = vmatprep.mubr.f32.mxu0 0.0
        %606 = vmatmul.mubr.f32.gmra.mrb[0].mxu0 %v509
        %v607 = vpop.f32.mrb[0].mxu0
        %v608 = vadd.f32 %v476, %v607
        %v609 = vpop.f32.mrb[0].mxu0
        %610 = vmatprep.mubr.f32.mxu0 0.0
        %611 = vmatmul.mubr.f32.gmra.mrb[0].mxu0 %v512
        %v612 = vpop.f32.mrb[0].mxu0
        %v613 = vadd.f32 %v481, %v612
        %v614 = vpop.f32.mrb[0].mxu0
        %615 = vmatprep.mubr.f32.mxu0 0.0
        %616 = vmatmul.mubr.f32.gmra.mrb[0].mxu0 %v515
        %v617 = vpop.f32.mrb[0].mxu0
        %v618 = vadd.f32 %v486, %v617
        %v619 = vpop.f32.mrb[0].mxu0
        %620 = vmatprep.mubr.f32.mxu0 0.0
        %621 = vmatmul.mubr.f32.gmra.mrb[0].mxu0 %v518
        %v622 = vpop.f32.mrb[0].mxu0
        %v623 = vadd.f32 %v491, %v622
        %v624 = vpop.f32.mrb[0].mxu0
        %625 = vmatprep.mubr.f32.mxu0 0.0
        %626 = vmatmul.mubr.f32.gmra.mrb[0].mxu0 %v521
        %v627 = vpop.f32.mrb[0].mxu0
        %v628 = vadd.f32 %v496, %v627
        %v629 = vpop.f32.mrb[0].mxu0
        %630 = vdwg.mxu0
        %v631 = vld [vmem:[#allocation2 + $0x2] sm:$0xff]
        %v632 = vld [vmem:[#allocation2 + $0x12] sm:$0xff]
        %v633 = vld [vmem:[#allocation2 + $0x22] sm:$0xff]
        %v634 = vld [vmem:[#allocation2 + $0x32] sm:$0xff]
        %v635 = vld [vmem:[#allocation2 + $0x42] sm:$0xff]
        %v636 = vld [vmem:[#allocation2 + $0x52] sm:$0xff]
        %v637 = vld [vmem:[#allocation2 + $0x62] sm:$0xff]
        %v638 = vld [vmem:[#allocation2 + $0x72] sm:$0xff]
        %s639 = scalar_lea.vmem %s1, 8
        %v640 = vld [vmem:[%s639] sm:$0xf]
        %v642 = vsel %vm310, %v631, 0
        %v645 = vsel %vm310, %v632, 0
        %v648 = vsel %vm310, %v633, 0
        %v651 = vsel %vm310, %v634, 0
        %v654 = vsel %vm310, %v635, 0
        %v657 = vsel %vm310, %v636, 0
        %v660 = vsel %vm310, %v637, 0
        %v663 = vsel %vm310, %v638, 0
        %v666 = vsel %vm390, %v640, 0
        %668 = vmatprep.subr.mxu0 0.0
        %669 = vmatpush1.msra.mxu0 %v666
        %670 = vmatprep.subr.mxu0 0.0
        %671 = vmatpush1.msra.mxu0 0.0
        %672 = vmatprep.subr.mxu0 0.0
        %673 = vmatpush1.msra.mxu0 0.0
        %674 = vmatprep.subr.mxu0 0.0
        %675 = vmatpush1.msra.mxu0 0.0
        %676 = vmatprep.subr.mxu0 0.0
        %677 = vmatpush1.msra.mxu0 0.0
        %678 = vmatprep.subr.mxu0 0.0
        %679 = vmatpush1.msra.mxu0 0.0
        %680 = vmatprep.subr.mxu0 0.0
        %681 = vmatpush1.msra.mxu0 0.0
        %682 = vmatprep.subr.mxu0 0.0
        %683 = vmatpush1.msra.mxu0 0.0
        %684 = vmatprep.subr.mxu0 0.0
        %685 = vmatpush1.msra.mxu0 0.0
        %686 = vmatprep.subr.mxu0 0.0
        %687 = vmatpush1.msra.mxu0 0.0
        %688 = vmatprep.subr.mxu0 0.0
        %689 = vmatpush1.msra.mxu0 0.0
        %690 = vmatprep.subr.mxu0 0.0
        %691 = vmatpush1.msra.mxu0 0.0
        %692 = vmatprep.subr.mxu0 0.0
        %693 = vmatpush1.msra.mxu0 0.0
        %694 = vmatprep.subr.mxu0 0.0
        %695 = vmatpush1.msra.mxu0 0.0
        %696 = vmatprep.subr.mxu0 0.0
        %697 = vmatpush1.msra.mxu0 0.0
        %698 = vmatprep.subr.mxu0 0.0
        %699 = vmatpush1.msra.mxu0 0.0
        %700 = vmatprep.subr.mxu0 0.0
        %701 = vmatpush1.msra.mxu0 0.0
        %702 = vmatprep.subr.mxu0 0.0
        %703 = vmatpush1.msra.mxu0 0.0
        %704 = vmatprep.subr.mxu0 0.0
        %705 = vmatpush1.msra.mxu0 0.0
        %706 = vmatprep.subr.mxu0 0.0
        %707 = vmatpush1.msra.mxu0 0.0
        %708 = vmatprep.subr.mxu0 0.0
        %709 = vmatpush1.msra.mxu0 0.0
        %710 = vmatprep.subr.mxu0 0.0
        %711 = vmatpush1.msra.mxu0 0.0
        %712 = vmatprep.subr.mxu0 0.0
        %713 = vmatpush1.msra.mxu0 0.0
        %714 = vmatprep.subr.mxu0 0.0
        %715 = vmatpush1.msra.mxu0 0.0
        %716 = vmatprep.subr.mxu0 0.0
        %717 = vmatpush1.msra.mxu0 0.0
        %718 = vmatprep.subr.mxu0 0.0
        %719 = vmatpush1.msra.mxu0 0.0
        %720 = vmatprep.subr.mxu0 0.0
        %721 = vmatpush1.msra.mxu0 0.0
        %722 = vmatprep.subr.mxu0 0.0
        %723 = vmatpush1.msra.mxu0 0.0
        %724 = vmatprep.subr.mxu0 0.0
        %725 = vmatpush1.msra.mxu0 0.0
        %726 = vmatprep.subr.mxu0 0.0
        %727 = vmatpush1.msra.mxu0 0.0
        %728 = vmatprep.subr.mxu0 0.0
        %729 = vmatpush1.msra.mxu0 0.0
        %730 = vmatprep.subr.mxu0 0.0
        %731 = vmatpush1.msra.mxu0 0.0
        %732 = vmatprep.mubr.f32.mxu0 0.0
        %733 = vmatmul.mubr.f32.gmra.mrb[0].mxu0 %v642
        %v734 = vpop.f32.mrb[0].mxu0
        %v735 = vadd.f32 0.0, %v734
        %v736 = vpop.f32.mrb[0].mxu0
        %737 = vmatprep.mubr.f32.mxu0 0.0
        %738 = vmatmul.mubr.f32.gmra.mrb[0].mxu0 %v645
        %v739 = vpop.f32.mrb[0].mxu0
        %v740 = vadd.f32 0.0, %v739
        %v741 = vpop.f32.mrb[0].mxu0
        %742 = vmatprep.mubr.f32.mxu0 0.0
        %743 = vmatmul.mubr.f32.gmra.mrb[0].mxu0 %v648
        %v744 = vpop.f32.mrb[0].mxu0
        %v745 = vadd.f32 0.0, %v744
        %v746 = vpop.f32.mrb[0].mxu0
        %747 = vmatprep.mubr.f32.mxu0 0.0
        %748 = vmatmul.mubr.f32.gmra.mrb[0].mxu0 %v651
        %v749 = vpop.f32.mrb[0].mxu0
        %v750 = vadd.f32 0.0, %v749
        %v751 = vpop.f32.mrb[0].mxu0
        %752 = vmatprep.mubr.f32.mxu0 0.0
        %753 = vmatmul.mubr.f32.gmra.mrb[0].mxu0 %v654
        %v754 = vpop.f32.mrb[0].mxu0
        %v755 = vadd.f32 0.0, %v754
        %v756 = vpop.f32.mrb[0].mxu0
        %757 = vmatprep.mubr.f32.mxu0 0.0
        %758 = vmatmul.mubr.f32.gmra.mrb[0].mxu0 %v657
        %v759 = vpop.f32.mrb[0].mxu0
        %v760 = vadd.f32 0.0, %v759
        %v761 = vpop.f32.mrb[0].mxu0
        %762 = vmatprep.mubr.f32.mxu0 0.0
        %763 = vmatmul.mubr.f32.gmra.mrb[0].mxu0 %v660
        %v764 = vpop.f32.mrb[0].mxu0
        %v765 = vadd.f32 0.0, %v764
        %v766 = vpop.f32.mrb[0].mxu0
        %767 = vmatprep.mubr.f32.mxu0 0.0
        %768 = vmatmul.mubr.f32.gmra.mrb[0].mxu0 %v663
        %v769 = vpop.f32.mrb[0].mxu0
        %v770 = vadd.f32 0.0, %v769
        %v771 = vpop.f32.mrb[0].mxu0
        %772 = vdwg.mxu0
        %v773 = vadd.f32 %v593, %v735
        %v774 = vadd.f32 %v598, %v740
        %v775 = vadd.f32 %v603, %v745
        %v776 = vadd.f32 %v608, %v750
        %v777 = vadd.f32 %v613, %v755
        %v778 = vadd.f32 %v618, %v760
        %v779 = vadd.f32 %v623, %v765
        %v780 = vadd.f32 %v628, %v770
        %v781 = vld [vmem:[%s338] sm:$0xff]
        %v782 = vld [vmem:[%s338 + $0x10] sm:$0xff]
        %v783 = vld [vmem:[%s338 + $0x20] sm:$0xff]
        %v784 = vld [vmem:[%s338 + $0x30] sm:$0xff]
        %v785 = vld [vmem:[%s338 + $0x40] sm:$0xff]
        %v786 = vld [vmem:[%s338 + $0x50] sm:$0xff]
        %v787 = vld [vmem:[%s338 + $0x60] sm:$0xff]
        %v788 = vld [vmem:[%s338 + $0x70] sm:$0xff]
        %s789 = scalar_lea.vmem %s1, 12
        %v790 = vld [vmem:[%s789] sm:$0xf]
        %v792 = vsel %vm310, %v781, 0
        %v795 = vsel %vm310, %v782, 0
        %v798 = vsel %vm310, %v783, 0
        %v801 = vsel %vm310, %v784, 0
        %v804 = vsel %vm310, %v785, 0
        %v807 = vsel %vm310, %v786, 0
        %v810 = vsel %vm310, %v787, 0
        %v813 = vsel %vm310, %v788, 0
        %v816 = vsel %vm390, %v790, 0
        %818 = vmatprep.subr.mxu0 0.0
        %819 = vmatpush1.msra.mxu0 %v816
        %820 = vmatprep.subr.mxu0 0.0
        %821 = vmatpush1.msra.mxu0 0.0
        %822 = vmatprep.subr.mxu0 0.0
        %823 = vmatpush1.msra.mxu0 0.0
        %824 = vmatprep.subr.mxu0 0.0
        %825 = vmatpush1.msra.mxu0 0.0
        %826 = vmatprep.subr.mxu0 0.0
        %827 = vmatpush1.msra.mxu0 0.0
        %828 = vmatprep.subr.mxu0 0.0
        %829 = vmatpush1.msra.mxu0 0.0
        %830 = vmatprep.subr.mxu0 0.0
        %831 = vmatpush1.msra.mxu0 0.0
        %832 = vmatprep.subr.mxu0 0.0
        %833 = vmatpush1.msra.mxu0 0.0
        %834 = vmatprep.subr.mxu0 0.0
        %835 = vmatpush1.msra.mxu0 0.0
        %836 = vmatprep.subr.mxu0 0.0
        %837 = vmatpush1.msra.mxu0 0.0
        %838 = vmatprep.subr.mxu0 0.0
        %839 = vmatpush1.msra.mxu0 0.0
        %840 = vmatprep.subr.mxu0 0.0
        %841 = vmatpush1.msra.mxu0 0.0
        %842 = vmatprep.subr.mxu0 0.0
        %843 = vmatpush1.msra.mxu0 0.0
        %844 = vmatprep.subr.mxu0 0.0
        %845 = vmatpush1.msra.mxu0 0.0
        %846 = vmatprep.subr.mxu0 0.0
        %847 = vmatpush1.msra.mxu0 0.0
        %848 = vmatprep.subr.mxu0 0.0
        %849 = vmatpush1.msra.mxu0 0.0
        %850 = vmatprep.subr.mxu0 0.0
        %851 = vmatpush1.msra.mxu0 0.0
        %852 = vmatprep.subr.mxu0 0.0
        %853 = vmatpush1.msra.mxu0 0.0
        %854 = vmatprep.subr.mxu0 0.0
        %855 = vmatpush1.msra.mxu0 0.0
        %856 = vmatprep.subr.mxu0 0.0
        %857 = vmatpush1.msra.mxu0 0.0
        %858 = vmatprep.subr.mxu0 0.0
        %859 = vmatpush1.msra.mxu0 0.0
        %860 = vmatprep.subr.mxu0 0.0
        %861 = vmatpush1.msra.mxu0 0.0
        %862 = vmatprep.subr.mxu0 0.0
        %863 = vmatpush1.msra.mxu0 0.0
        %864 = vmatprep.subr.mxu0 0.0
        %865 = vmatpush1.msra.mxu0 0.0
        %866 = vmatprep.subr.mxu0 0.0
        %867 = vmatpush1.msra.mxu0 0.0
        %868 = vmatprep.subr.mxu0 0.0
        %869 = vmatpush1.msra.mxu0 0.0
        %870 = vmatprep.subr.mxu0 0.0
        %871 = vmatpush1.msra.mxu0 0.0
        %872 = vmatprep.subr.mxu0 0.0
        %873 = vmatpush1.msra.mxu0 0.0
        %874 = vmatprep.subr.mxu0 0.0
        %875 = vmatpush1.msra.mxu0 0.0
        %876 = vmatprep.subr.mxu0 0.0
        %877 = vmatpush1.msra.mxu0 0.0
        %878 = vmatprep.subr.mxu0 0.0
        %879 = vmatpush1.msra.mxu0 0.0
        %880 = vmatprep.subr.mxu0 0.0
        %881 = vmatpush1.msra.mxu0 0.0
        %882 = vmatprep.mubr.f32.mxu0 0.0
        %883 = vmatmul.mubr.f32.gmra.mrb[0].mxu0 %v792
        %v884 = vpop.f32.mrb[0].mxu0
        %v885 = vadd.f32 0.0, %v884
        %v886 = vpop.f32.mrb[0].mxu0
        %887 = vmatprep.mubr.f32.mxu0 0.0
        %888 = vmatmul.mubr.f32.gmra.mrb[0].mxu0 %v795
        %v889 = vpop.f32.mrb[0].mxu0
        %v890 = vadd.f32 0.0, %v889
        %v891 = vpop.f32.mrb[0].mxu0
        %892 = vmatprep.mubr.f32.mxu0 0.0
        %893 = vmatmul.mubr.f32.gmra.mrb[0].mxu0 %v798
        %v894 = vpop.f32.mrb[0].mxu0
        %v895 = vadd.f32 0.0, %v894
        %v896 = vpop.f32.mrb[0].mxu0
        %897 = vmatprep.mubr.f32.mxu0 0.0
        %898 = vmatmul.mubr.f32.gmra.mrb[0].mxu0 %v801
        %v899 = vpop.f32.mrb[0].mxu0
        %v900 = vadd.f32 0.0, %v899
        %v901 = vpop.f32.mrb[0].mxu0
        %902 = vmatprep.mubr.f32.mxu0 0.0
        %903 = vmatmul.mubr.f32.gmra.mrb[0].mxu0 %v804
        %v904 = vpop.f32.mrb[0].mxu0
        %v905 = vadd.f32 0.0, %v904
        %v906 = vpop.f32.mrb[0].mxu0
        %907 = vmatprep.mubr.f32.mxu0 0.0
        %908 = vmatmul.mubr.f32.gmra.mrb[0].mxu0 %v807
        %v909 = vpop.f32.mrb[0].mxu0
        %v910 = vadd.f32 0.0, %v909
        %v911 = vpop.f32.mrb[0].mxu0
        %912 = vmatprep.mubr.f32.mxu0 0.0
        %913 = vmatmul.mubr.f32.gmra.mrb[0].mxu0 %v810
        %v914 = vpop.f32.mrb[0].mxu0
        %v915 = vadd.f32 0.0, %v914
        %v916 = vpop.f32.mrb[0].mxu0
        %917 = vmatprep.mubr.f32.mxu0 0.0
        %918 = vmatmul.mubr.f32.gmra.mrb[0].mxu0 %v813
        %v919 = vpop.f32.mrb[0].mxu0
        %v920 = vadd.f32 0.0, %v919
        %v921 = vpop.f32.mrb[0].mxu0
        %922 = vdwg.mxu0
        %v923 = vadd.f32 %v773, %v885
        %v924 = vadd.f32 %v774, %v890
        %v925 = vadd.f32 %v775, %v895
        %v926 = vadd.f32 %v776, %v900
        %v927 = vadd.f32 %v777, %v905
        %v928 = vadd.f32 %v778, %v910
        %v929 = vadd.f32 %v779, %v915
        %v930 = vadd.f32 %v780, %v920
        %v931 = vld [vmem:[%s338 + $0x1] sm:$0xff]
        %v932 = vld [vmem:[%s338 + $0x11] sm:$0xff]
        %v933 = vld [vmem:[%s338 + $0x21] sm:$0xff]
        %v934 = vld [vmem:[%s338 + $0x31] sm:$0xff]
        %v935 = vld [vmem:[%s338 + $0x41] sm:$0xff]
        %v936 = vld [vmem:[%s338 + $0x51] sm:$0xff]
        %v937 = vld [vmem:[%s338 + $0x61] sm:$0xff]
        %v938 = vld [vmem:[%s338 + $0x71] sm:$0xff]
        %s939 = scalar_lea.vmem %s1, 16
        %v940 = vld [vmem:[%s939] sm:$0xf]
        %v942 = vsel %vm310, %v931, 0
        %v945 = vsel %vm310, %v932, 0
        %v948 = vsel %vm310, %v933, 0
        %v951 = vsel %vm310, %v934, 0
        %v954 = vsel %vm310, %v935, 0
        %v957 = vsel %vm310, %v936, 0
        %v960 = vsel %vm310, %v937, 0
        %v963 = vsel %vm310, %v938, 0
        %v966 = vsel %vm390, %v940, 0
        %968 = vmatprep.subr.mxu0 0.0
        %969 = vmatpush1.msra.mxu0 %v966
        %970 = vmatprep.subr.mxu0 0.0
        %971 = vmatpush1.msra.mxu0 0.0
        %972 = vmatprep.subr.mxu0 0.0
        %973 = vmatpush1.msra.mxu0 0.0
        %974 = vmatprep.subr.mxu0 0.0
        %975 = vmatpush1.msra.mxu0 0.0
        %976 = vmatprep.subr.mxu0 0.0
        %977 = vmatpush1.msra.mxu0 0.0
        %978 = vmatprep.subr.mxu0 0.0
        %979 = vmatpush1.msra.mxu0 0.0
        %980 = vmatprep.subr.mxu0 0.0
        %981 = vmatpush1.msra.mxu0 0.0
        %982 = vmatprep.subr.mxu0 0.0
        %983 = vmatpush1.msra.mxu0 0.0
        %984 = vmatprep.subr.mxu0 0.0
        %985 = vmatpush1.msra.mxu0 0.0
        %986 = vmatprep.subr.mxu0 0.0
        %987 = vmatpush1.msra.mxu0 0.0
        %988 = vmatprep.subr.mxu0 0.0
        %989 = vmatpush1.msra.mxu0 0.0
        %990 = vmatprep.subr.mxu0 0.0
        %991 = vmatpush1.msra.mxu0 0.0
        %992 = vmatprep.subr.mxu0 0.0
        %993 = vmatpush1.msra.mxu0 0.0
        %994 = vmatprep.subr.mxu0 0.0
        %995 = vmatpush1.msra.mxu0 0.0
        %996 = vmatprep.subr.mxu0 0.0
        %997 = vmatpush1.msra.mxu0 0.0
        %998 = vmatprep.subr.mxu0 0.0
        %999 = vmatpush1.msra.mxu0 0.0
        %1000 = vmatprep.subr.mxu0 0.0
        %1001 = vmatpush1.msra.mxu0 0.0
        %1002 = vmatprep.subr.mxu0 0.0
        %1003 = vmatpush1.msra.mxu0 0.0
        %1004 = vmatprep.subr.mxu0 0.0
        %1005 = vmatpush1.msra.mxu0 0.0
        %1006 = vmatprep.subr.mxu0 0.0
        %1007 = vmatpush1.msra.mxu0 0.0
        %1008 = vmatprep.subr.mxu0 0.0
        %1009 = vmatpush1.msra.mxu0 0.0
        %1010 = vmatprep.subr.mxu0 0.0
        %1011 = vmatpush1.msra.mxu0 0.0
        %1012 = vmatprep.subr.mxu0 0.0
        %1013 = vmatpush1.msra.mxu0 0.0
        %1014 = vmatprep.subr.mxu0 0.0
        %1015 = vmatpush1.msra.mxu0 0.0
        %1016 = vmatprep.subr.mxu0 0.0
        %1017 = vmatpush1.msra.mxu0 0.0
        %1018 = vmatprep.subr.mxu0 0.0
        %1019 = vmatpush1.msra.mxu0 0.0
        %1020 = vmatprep.subr.mxu0 0.0
        %1021 = vmatpush1.msra.mxu0 0.0
        %1022 = vmatprep.subr.mxu0 0.0
        %1023 = vmatpush1.msra.mxu0 0.0
        %1024 = vmatprep.subr.mxu0 0.0
        %1025 = vmatpush1.msra.mxu0 0.0
        %1026 = vmatprep.subr.mxu0 0.0
        %1027 = vmatpush1.msra.mxu0 0.0
        %1028 = vmatprep.subr.mxu0 0.0
        %1029 = vmatpush1.msra.mxu0 0.0
        %1030 = vmatprep.subr.mxu0 0.0
        %1031 = vmatpush1.msra.mxu0 0.0
        %1032 = vmatprep.mubr.f32.mxu0 0.0
        %1033 = vmatmul.mubr.f32.gmra.mrb[0].mxu0 %v942
        %v1034 = vpop.f32.mrb[0].mxu0
        %v1035 = vadd.f32 0.0, %v1034
        %v1036 = vpop.f32.mrb[0].mxu0
        %1037 = vmatprep.mubr.f32.mxu0 0.0
        %1038 = vmatmul.mubr.f32.gmra.mrb[0].mxu0 %v945
        %v1039 = vpop.f32.mrb[0].mxu0
        %v1040 = vadd.f32 0.0, %v1039
        %v1041 = vpop.f32.mrb[0].mxu0
        %1042 = vmatprep.mubr.f32.mxu0 0.0
        %1043 = vmatmul.mubr.f32.gmra.mrb[0].mxu0 %v948
        %v1044 = vpop.f32.mrb[0].mxu0
        %v1045 = vadd.f32 0.0, %v1044
        %v1046 = vpop.f32.mrb[0].mxu0
        %1047 = vmatprep.mubr.f32.mxu0 0.0
        %1048 = vmatmul.mubr.f32.gmra.mrb[0].mxu0 %v951
        %v1049 = vpop.f32.mrb[0].mxu0
        %v1050 = vadd.f32 0.0, %v1049
        %v1051 = vpop.f32.mrb[0].mxu0
        %1052 = vmatprep.mubr.f32.mxu0 0.0
        %1053 = vmatmul.mubr.f32.gmra.mrb[0].mxu0 %v954
        %v1054 = vpop.f32.mrb[0].mxu0
        %v1055 = vadd.f32 0.0, %v1054
        %v1056 = vpop.f32.mrb[0].mxu0
        %1057 = vmatprep.mubr.f32.mxu0 0.0
        %1058 = vmatmul.mubr.f32.gmra.mrb[0].mxu0 %v957
        %v1059 = vpop.f32.mrb[0].mxu0
        %v1060 = vadd.f32 0.0, %v1059
        %v1061 = vpop.f32.mrb[0].mxu0
        %1062 = vmatprep.mubr.f32.mxu0 0.0
        %1063 = vmatmul.mubr.f32.gmra.mrb[0].mxu0 %v960
        %v1064 = vpop.f32.mrb[0].mxu0
        %v1065 = vadd.f32 0.0, %v1064
        %v1066 = vpop.f32.mrb[0].mxu0
        %1067 = vmatprep.mubr.f32.mxu0 0.0
        %1068 = vmatmul.mubr.f32.gmra.mrb[0].mxu0 %v963
        %v1069 = vpop.f32.mrb[0].mxu0
        %v1070 = vadd.f32 0.0, %v1069
        %v1071 = vpop.f32.mrb[0].mxu0
        %1072 = vdwg.mxu0
        %v1073 = vadd.f32 %v923, %v1035
        %v1074 = vadd.f32 %v924, %v1040
        %v1075 = vadd.f32 %v925, %v1045
        %v1076 = vadd.f32 %v926, %v1050
        %v1077 = vadd.f32 %v927, %v1055
        %v1078 = vadd.f32 %v928, %v1060
        %v1079 = vadd.f32 %v929, %v1065
        %v1080 = vadd.f32 %v930, %v1070
        %v1081 = vld [vmem:[%s338 + $0x2] sm:$0xff]
        %v1082 = vld [vmem:[%s338 + $0x12] sm:$0xff]
        %v1083 = vld [vmem:[%s338 + $0x22] sm:$0xff]
        %v1084 = vld [vmem:[%s338 + $0x32] sm:$0xff]
        %v1085 = vld [vmem:[%s338 + $0x42] sm:$0xff]
        %v1086 = vld [vmem:[%s338 + $0x52] sm:$0xff]
        %v1087 = vld [vmem:[%s338 + $0x62] sm:$0xff]
        %v1088 = vld [vmem:[%s338 + $0x72] sm:$0xff]
        %s1089 = scalar_lea.vmem %s1, 20
        %v1090 = vld [vmem:[%s1089] sm:$0xf]
        %v1092 = vsel %vm310, %v1081, 0
        %v1095 = vsel %vm310, %v1082, 0
        %v1098 = vsel %vm310, %v1083, 0
        %v1101 = vsel %vm310, %v1084, 0
        %v1104 = vsel %vm310, %v1085, 0
        %v1107 = vsel %vm310, %v1086, 0
        %v1110 = vsel %vm310, %v1087, 0
        %v1113 = vsel %vm310, %v1088, 0
        %v1116 = vsel %vm390, %v1090, 0
        %1118 = vmatprep.subr.mxu0 0.0
        %1119 = vmatpush1.msra.mxu0 %v1116
        %1120 = vmatprep.subr.mxu0 0.0
        %1121 = vmatpush1.msra.mxu0 0.0
        %1122 = vmatprep.subr.mxu0 0.0
        %1123 = vmatpush1.msra.mxu0 0.0
        %1124 = vmatprep.subr.mxu0 0.0
        %1125 = vmatpush1.msra.mxu0 0.0
        %1126 = vmatprep.subr.mxu0 0.0
        %1127 = vmatpush1.msra.mxu0 0.0
        %1128 = vmatprep.subr.mxu0 0.0
        %1129 = vmatpush1.msra.mxu0 0.0
        %1130 = vmatprep.subr.mxu0 0.0
        %1131 = vmatpush1.msra.mxu0 0.0
        %1132 = vmatprep.subr.mxu0 0.0
        %1133 = vmatpush1.msra.mxu0 0.0
        %1134 = vmatprep.subr.mxu0 0.0
        %1135 = vmatpush1.msra.mxu0 0.0
        %1136 = vmatprep.subr.mxu0 0.0
        %1137 = vmatpush1.msra.mxu0 0.0
        %1138 = vmatprep.subr.mxu0 0.0
        %1139 = vmatpush1.msra.mxu0 0.0
        %1140 = vmatprep.subr.mxu0 0.0
        %1141 = vmatpush1.msra.mxu0 0.0
        %1142 = vmatprep.subr.mxu0 0.0
        %1143 = vmatpush1.msra.mxu0 0.0
        %1144 = vmatprep.subr.mxu0 0.0
        %1145 = vmatpush1.msra.mxu0 0.0
        %1146 = vmatprep.subr.mxu0 0.0
        %1147 = vmatpush1.msra.mxu0 0.0
        %1148 = vmatprep.subr.mxu0 0.0
        %1149 = vmatpush1.msra.mxu0 0.0
        %1150 = vmatprep.subr.mxu0 0.0
        %1151 = vmatpush1.msra.mxu0 0.0
        %1152 = vmatprep.subr.mxu0 0.0
        %1153 = vmatpush1.msra.mxu0 0.0
        %1154 = vmatprep.subr.mxu0 0.0
        %1155 = vmatpush1.msra.mxu0 0.0
        %1156 = vmatprep.subr.mxu0 0.0
        %1157 = vmatpush1.msra.mxu0 0.0
        %1158 = vmatprep.subr.mxu0 0.0
        %1159 = vmatpush1.msra.mxu0 0.0
        %1160 = vmatprep.subr.mxu0 0.0
        %1161 = vmatpush1.msra.mxu0 0.0
        %1162 = vmatprep.subr.mxu0 0.0
        %1163 = vmatpush1.msra.mxu0 0.0
        %1164 = vmatprep.subr.mxu0 0.0
        %1165 = vmatpush1.msra.mxu0 0.0
        %1166 = vmatprep.subr.mxu0 0.0
        %1167 = vmatpush1.msra.mxu0 0.0
        %1168 = vmatprep.subr.mxu0 0.0
        %1169 = vmatpush1.msra.mxu0 0.0
        %1170 = vmatprep.subr.mxu0 0.0
        %1171 = vmatpush1.msra.mxu0 0.0
        %1172 = vmatprep.subr.mxu0 0.0
        %1173 = vmatpush1.msra.mxu0 0.0
        %1174 = vmatprep.subr.mxu0 0.0
        %1175 = vmatpush1.msra.mxu0 0.0
        %1176 = vmatprep.subr.mxu0 0.0
        %1177 = vmatpush1.msra.mxu0 0.0
        %1178 = vmatprep.subr.mxu0 0.0
        %1179 = vmatpush1.msra.mxu0 0.0
        %1180 = vmatprep.subr.mxu0 0.0
        %1181 = vmatpush1.msra.mxu0 0.0
        %1182 = vmatprep.mubr.f32.mxu0 0.0
        %1183 = vmatmul.mubr.f32.gmra.mrb[0].mxu0 %v1092
        %v1184 = vpop.f32.mrb[0].mxu0
        %v1185 = vadd.f32 0.0, %v1184
        %v1186 = vpop.f32.mrb[0].mxu0
        %1187 = vmatprep.mubr.f32.mxu0 0.0
        %1188 = vmatmul.mubr.f32.gmra.mrb[0].mxu0 %v1095
        %v1189 = vpop.f32.mrb[0].mxu0
        %v1190 = vadd.f32 0.0, %v1189
        %v1191 = vpop.f32.mrb[0].mxu0
        %1192 = vmatprep.mubr.f32.mxu0 0.0
        %1193 = vmatmul.mubr.f32.gmra.mrb[0].mxu0 %v1098
        %v1194 = vpop.f32.mrb[0].mxu0
        %v1195 = vadd.f32 0.0, %v1194
        %v1196 = vpop.f32.mrb[0].mxu0
        %1197 = vmatprep.mubr.f32.mxu0 0.0
        %1198 = vmatmul.mubr.f32.gmra.mrb[0].mxu0 %v1101
        %v1199 = vpop.f32.mrb[0].mxu0
        %v1200 = vadd.f32 0.0, %v1199
        %v1201 = vpop.f32.mrb[0].mxu0
        %1202 = vmatprep.mubr.f32.mxu0 0.0
        %1203 = vmatmul.mubr.f32.gmra.mrb[0].mxu0 %v1104
        %v1204 = vpop.f32.mrb[0].mxu0
        %v1205 = vadd.f32 0.0, %v1204
        %v1206 = vpop.f32.mrb[0].mxu0
        %1207 = vmatprep.mubr.f32.mxu0 0.0
        %1208 = vmatmul.mubr.f32.gmra.mrb[0].mxu0 %v1107
        %v1209 = vpop.f32.mrb[0].mxu0
        %v1210 = vadd.f32 0.0, %v1209
        %v1211 = vpop.f32.mrb[0].mxu0
        %1212 = vmatprep.mubr.f32.mxu0 0.0
        %1213 = vmatmul.mubr.f32.gmra.mrb[0].mxu0 %v1110
        %v1214 = vpop.f32.mrb[0].mxu0
        %v1215 = vadd.f32 0.0, %v1214
        %v1216 = vpop.f32.mrb[0].mxu0
        %1217 = vmatprep.mubr.f32.mxu0 0.0
        %1218 = vmatmul.mubr.f32.gmra.mrb[0].mxu0 %v1113
        %v1219 = vpop.f32.mrb[0].mxu0
        %v1220 = vadd.f32 0.0, %v1219
        %v1221 = vpop.f32.mrb[0].mxu0
        %1222 = vdwg.mxu0
        %v1223 = vadd.f32 %v1073, %v1185
        %v1224 = vadd.f32 %v1074, %v1190
        %v1225 = vadd.f32 %v1075, %v1195
        %v1226 = vadd.f32 %v1076, %v1200
        %v1227 = vadd.f32 %v1077, %v1205
        %v1228 = vadd.f32 %v1078, %v1210
        %v1229 = vadd.f32 %v1079, %v1215
        %v1230 = vadd.f32 %v1080, %v1220
        %s1231 = scalar_lea.vmem [#allocation2], 32
        %v1232 = vld [vmem:[%s1231] sm:$0xff]
        %v1233 = vld [vmem:[%s1231 + $0x10] sm:$0xff]
        %v1234 = vld [vmem:[%s1231 + $0x20] sm:$0xff]
        %v1235 = vld [vmem:[%s1231 + $0x30] sm:$0xff]
        %v1236 = vld [vmem:[%s1231 + $0x40] sm:$0xff]
        %v1237 = vld [vmem:[%s1231 + $0x50] sm:$0xff]
        %v1238 = vld [vmem:[%s1231 + $0x60] sm:$0xff]
        %v1239 = vld [vmem:[%s1231 + $0x70] sm:$0xff]
        %s1240 = scalar_lea.vmem %s1, 24
        %v1241 = vld [vmem:[%s1240] sm:$0xf]
        %v1243 = vsel %vm310, %v1232, 0
        %v1246 = vsel %vm310, %v1233, 0
        %v1249 = vsel %vm310, %v1234, 0
        %v1252 = vsel %vm310, %v1235, 0
        %v1255 = vsel %vm310, %v1236, 0
        %v1258 = vsel %vm310, %v1237, 0
        %v1261 = vsel %vm310, %v1238, 0
        %v1264 = vsel %vm310, %v1239, 0
        %v1267 = vsel %vm390, %v1241, 0
        %1269 = vmatprep.subr.mxu0 0.0
        %1270 = vmatpush1.msra.mxu0 %v1267
        %1271 = vmatprep.subr.mxu0 0.0
        %1272 = vmatpush1.msra.mxu0 0.0
        %1273 = vmatprep.subr.mxu0 0.0
        %1274 = vmatpush1.msra.mxu0 0.0
        %1275 = vmatprep.subr.mxu0 0.0
        %1276 = vmatpush1.msra.mxu0 0.0
        %1277 = vmatprep.subr.mxu0 0.0
        %1278 = vmatpush1.msra.mxu0 0.0
        %1279 = vmatprep.subr.mxu0 0.0
        %1280 = vmatpush1.msra.mxu0 0.0
        %1281 = vmatprep.subr.mxu0 0.0
        %1282 = vmatpush1.msra.mxu0 0.0
        %1283 = vmatprep.subr.mxu0 0.0
        %1284 = vmatpush1.msra.mxu0 0.0
        %1285 = vmatprep.subr.mxu0 0.0
        %1286 = vmatpush1.msra.mxu0 0.0
        %1287 = vmatprep.subr.mxu0 0.0
        %1288 = vmatpush1.msra.mxu0 0.0
        %1289 = vmatprep.subr.mxu0 0.0
        %1290 = vmatpush1.msra.mxu0 0.0
        %1291 = vmatprep.subr.mxu0 0.0
        %1292 = vmatpush1.msra.mxu0 0.0
        %1293 = vmatprep.subr.mxu0 0.0
        %1294 = vmatpush1.msra.mxu0 0.0
        %1295 = vmatprep.subr.mxu0 0.0
        %1296 = vmatpush1.msra.mxu0 0.0
        %1297 = vmatprep.subr.mxu0 0.0
        %1298 = vmatpush1.msra.mxu0 0.0
        %1299 = vmatprep.subr.mxu0 0.0
        %1300 = vmatpush1.msra.mxu0 0.0
        %1301 = vmatprep.subr.mxu0 0.0
        %1302 = vmatpush1.msra.mxu0 0.0
        %1303 = vmatprep.subr.mxu0 0.0
        %1304 = vmatpush1.msra.mxu0 0.0
        %1305 = vmatprep.subr.mxu0 0.0
        %1306 = vmatpush1.msra.mxu0 0.0
        %1307 = vmatprep.subr.mxu0 0.0
        %1308 = vmatpush1.msra.mxu0 0.0
        %1309 = vmatprep.subr.mxu0 0.0
        %1310 = vmatpush1.msra.mxu0 0.0
        %1311 = vmatprep.subr.mxu0 0.0
        %1312 = vmatpush1.msra.mxu0 0.0
        %1313 = vmatprep.subr.mxu0 0.0
        %1314 = vmatpush1.msra.mxu0 0.0
        %1315 = vmatprep.subr.mxu0 0.0
        %1316 = vmatpush1.msra.mxu0 0.0
        %1317 = vmatprep.subr.mxu0 0.0
        %1318 = vmatpush1.msra.mxu0 0.0
        %1319 = vmatprep.subr.mxu0 0.0
        %1320 = vmatpush1.msra.mxu0 0.0
        %1321 = vmatprep.subr.mxu0 0.0
        %1322 = vmatpush1.msra.mxu0 0.0
        %1323 = vmatprep.subr.mxu0 0.0
        %1324 = vmatpush1.msra.mxu0 0.0
        %1325 = vmatprep.subr.mxu0 0.0
        %1326 = vmatpush1.msra.mxu0 0.0
        %1327 = vmatprep.subr.mxu0 0.0
        %1328 = vmatpush1.msra.mxu0 0.0
        %1329 = vmatprep.subr.mxu0 0.0
        %1330 = vmatpush1.msra.mxu0 0.0
        %1331 = vmatprep.subr.mxu0 0.0
        %1332 = vmatpush1.msra.mxu0 0.0
        %1333 = vmatprep.mubr.f32.mxu0 0.0
        %1334 = vmatmul.mubr.f32.gmra.mrb[0].mxu0 %v1243
        %v1335 = vpop.f32.mrb[0].mxu0
        %v1336 = vadd.f32 0.0, %v1335
        %v1337 = vpop.f32.mrb[0].mxu0
        %1338 = vmatprep.mubr.f32.mxu0 0.0
        %1339 = vmatmul.mubr.f32.gmra.mrb[0].mxu0 %v1246
        %v1340 = vpop.f32.mrb[0].mxu0
        %v1341 = vadd.f32 0.0, %v1340
        %v1342 = vpop.f32.mrb[0].mxu0
        %1343 = vmatprep.mubr.f32.mxu0 0.0
        %1344 = vmatmul.mubr.f32.gmra.mrb[0].mxu0 %v1249
        %v1345 = vpop.f32.mrb[0].mxu0
        %v1346 = vadd.f32 0.0, %v1345
        %v1347 = vpop.f32.mrb[0].mxu0
        %1348 = vmatprep.mubr.f32.mxu0 0.0
        %1349 = vmatmul.mubr.f32.gmra.mrb[0].mxu0 %v1252
        %v1350 = vpop.f32.mrb[0].mxu0
        %v1351 = vadd.f32 0.0, %v1350
        %v1352 = vpop.f32.mrb[0].mxu0
        %1353 = vmatprep.mubr.f32.mxu0 0.0
        %1354 = vmatmul.mubr.f32.gmra.mrb[0].mxu0 %v1255
        %v1355 = vpop.f32.mrb[0].mxu0
        %v1356 = vadd.f32 0.0, %v1355
        %v1357 = vpop.f32.mrb[0].mxu0
        %1358 = vmatprep.mubr.f32.mxu0 0.0
        %1359 = vmatmul.mubr.f32.gmra.mrb[0].mxu0 %v1258
        %v1360 = vpop.f32.mrb[0].mxu0
        %v1361 = vadd.f32 0.0, %v1360
        %v1362 = vpop.f32.mrb[0].mxu0
        %1363 = vmatprep.mubr.f32.mxu0 0.0
        %1364 = vmatmul.mubr.f32.gmra.mrb[0].mxu0 %v1261
        %v1365 = vpop.f32.mrb[0].mxu0
        %v1366 = vadd.f32 0.0, %v1365
        %v1367 = vpop.f32.mrb[0].mxu0
        %1368 = vmatprep.mubr.f32.mxu0 0.0
        %1369 = vmatmul.mubr.f32.gmra.mrb[0].mxu0 %v1264
        %v1370 = vpop.f32.mrb[0].mxu0
        %v1371 = vadd.f32 0.0, %v1370
        %v1372 = vpop.f32.mrb[0].mxu0
        %1373 = vdwg.mxu0
        %v1374 = vadd.f32 %v1223, %v1336
        %v1375 = vadd.f32 %v1224, %v1341
        %v1376 = vadd.f32 %v1225, %v1346
        %v1377 = vadd.f32 %v1226, %v1351
        %v1378 = vadd.f32 %v1227, %v1356
        %v1379 = vadd.f32 %v1228, %v1361
        %v1380 = vadd.f32 %v1229, %v1366
        %v1381 = vadd.f32 %v1230, %v1371
        %v1382 = vld [vmem:[%s1231 + $0x1] sm:$0xff]
        %v1383 = vld [vmem:[%s1231 + $0x11] sm:$0xff]
        %v1384 = vld [vmem:[%s1231 + $0x21] sm:$0xff]
        %v1385 = vld [vmem:[%s1231 + $0x31] sm:$0xff]
        %v1386 = vld [vmem:[%s1231 + $0x41] sm:$0xff]
        %v1387 = vld [vmem:[%s1231 + $0x51] sm:$0xff]
        %v1388 = vld [vmem:[%s1231 + $0x61] sm:$0xff]
        %v1389 = vld [vmem:[%s1231 + $0x71] sm:$0xff]
        %s1390 = scalar_lea.vmem %s1, 28
        %v1391 = vld [vmem:[%s1390] sm:$0xf]
        %v1393 = vsel %vm310, %v1382, 0
        %v1396 = vsel %vm310, %v1383, 0
        %v1399 = vsel %vm310, %v1384, 0
        %v1402 = vsel %vm310, %v1385, 0
        %v1405 = vsel %vm310, %v1386, 0
        %v1408 = vsel %vm310, %v1387, 0
        %v1411 = vsel %vm310, %v1388, 0
        %v1414 = vsel %vm310, %v1389, 0
        %v1417 = vsel %vm390, %v1391, 0
        %1419 = vmatprep.subr.mxu0 0.0
        %1420 = vmatpush1.msra.mxu0 %v1417
        %1421 = vmatprep.subr.mxu0 0.0
        %1422 = vmatpush1.msra.mxu0 0.0
        %1423 = vmatprep.subr.mxu0 0.0
        %1424 = vmatpush1.msra.mxu0 0.0
        %1425 = vmatprep.subr.mxu0 0.0
        %1426 = vmatpush1.msra.mxu0 0.0
        %1427 = vmatprep.subr.mxu0 0.0
        %1428 = vmatpush1.msra.mxu0 0.0
        %1429 = vmatprep.subr.mxu0 0.0
        %1430 = vmatpush1.msra.mxu0 0.0
        %1431 = vmatprep.subr.mxu0 0.0
        %1432 = vmatpush1.msra.mxu0 0.0
        %1433 = vmatprep.subr.mxu0 0.0
        %1434 = vmatpush1.msra.mxu0 0.0
        %1435 = vmatprep.subr.mxu0 0.0
        %1436 = vmatpush1.msra.mxu0 0.0
        %1437 = vmatprep.subr.mxu0 0.0
        %1438 = vmatpush1.msra.mxu0 0.0
        %1439 = vmatprep.subr.mxu0 0.0
        %1440 = vmatpush1.msra.mxu0 0.0
        %1441 = vmatprep.subr.mxu0 0.0
        %1442 = vmatpush1.msra.mxu0 0.0
        %1443 = vmatprep.subr.mxu0 0.0
        %1444 = vmatpush1.msra.mxu0 0.0
        %1445 = vmatprep.subr.mxu0 0.0
        %1446 = vmatpush1.msra.mxu0 0.0
        %1447 = vmatprep.subr.mxu0 0.0
        %1448 = vmatpush1.msra.mxu0 0.0
        %1449 = vmatprep.subr.mxu0 0.0
        %1450 = vmatpush1.msra.mxu0 0.0
        %1451 = vmatprep.subr.mxu0 0.0
        %1452 = vmatpush1.msra.mxu0 0.0
        %1453 = vmatprep.subr.mxu0 0.0
        %1454 = vmatpush1.msra.mxu0 0.0
        %1455 = vmatprep.subr.mxu0 0.0
        %1456 = vmatpush1.msra.mxu0 0.0
        %1457 = vmatprep.subr.mxu0 0.0
        %1458 = vmatpush1.msra.mxu0 0.0
        %1459 = vmatprep.subr.mxu0 0.0
        %1460 = vmatpush1.msra.mxu0 0.0
        %1461 = vmatprep.subr.mxu0 0.0
        %1462 = vmatpush1.msra.mxu0 0.0
        %1463 = vmatprep.subr.mxu0 0.0
        %1464 = vmatpush1.msra.mxu0 0.0
        %1465 = vmatprep.subr.mxu0 0.0
        %1466 = vmatpush1.msra.mxu0 0.0
        %1467 = vmatprep.subr.mxu0 0.0
        %1468 = vmatpush1.msra.mxu0 0.0
        %1469 = vmatprep.subr.mxu0 0.0
        %1470 = vmatpush1.msra.mxu0 0.0
        %1471 = vmatprep.subr.mxu0 0.0
        %1472 = vmatpush1.msra.mxu0 0.0
        %1473 = vmatprep.subr.mxu0 0.0
        %1474 = vmatpush1.msra.mxu0 0.0
        %1475 = vmatprep.subr.mxu0 0.0
        %1476 = vmatpush1.msra.mxu0 0.0
        %1477 = vmatprep.subr.mxu0 0.0
        %1478 = vmatpush1.msra.mxu0 0.0
        %1479 = vmatprep.subr.mxu0 0.0
        %1480 = vmatpush1.msra.mxu0 0.0
        %1481 = vmatprep.subr.mxu0 0.0
        %1482 = vmatpush1.msra.mxu0 0.0
        %1483 = vmatprep.mubr.f32.mxu0 0.0
        %1484 = vmatmul.mubr.f32.gmra.mrb[0].mxu0 %v1393
        %v1485 = vpop.f32.mrb[0].mxu0
        %v1486 = vadd.f32 0.0, %v1485
        %v1487 = vpop.f32.mrb[0].mxu0
        %1488 = vmatprep.mubr.f32.mxu0 0.0
        %1489 = vmatmul.mubr.f32.gmra.mrb[0].mxu0 %v1396
        %v1490 = vpop.f32.mrb[0].mxu0
        %v1491 = vadd.f32 0.0, %v1490
        %v1492 = vpop.f32.mrb[0].mxu0
        %1493 = vmatprep.mubr.f32.mxu0 0.0
        %1494 = vmatmul.mubr.f32.gmra.mrb[0].mxu0 %v1399
        %v1495 = vpop.f32.mrb[0].mxu0
        %v1496 = vadd.f32 0.0, %v1495
        %v1497 = vpop.f32.mrb[0].mxu0
        %1498 = vmatprep.mubr.f32.mxu0 0.0
        %1499 = vmatmul.mubr.f32.gmra.mrb[0].mxu0 %v1402
        %v1500 = vpop.f32.mrb[0].mxu0
        %v1501 = vadd.f32 0.0, %v1500
        %v1502 = vpop.f32.mrb[0].mxu0
        %1503 = vmatprep.mubr.f32.mxu0 0.0
        %1504 = vmatmul.mubr.f32.gmra.mrb[0].mxu0 %v1405
        %v1505 = vpop.f32.mrb[0].mxu0
        %v1506 = vadd.f32 0.0, %v1505
        %v1507 = vpop.f32.mrb[0].mxu0
        %1508 = vmatprep.mubr.f32.mxu0 0.0
        %1509 = vmatmul.mubr.f32.gmra.mrb[0].mxu0 %v1408
        %v1510 = vpop.f32.mrb[0].mxu0
        %v1511 = vadd.f32 0.0, %v1510
        %v1512 = vpop.f32.mrb[0].mxu0
        %1513 = vmatprep.mubr.f32.mxu0 0.0
        %1514 = vmatmul.mubr.f32.gmra.mrb[0].mxu0 %v1411
        %v1515 = vpop.f32.mrb[0].mxu0
        %v1516 = vadd.f32 0.0, %v1515
        %v1517 = vpop.f32.mrb[0].mxu0
        %1518 = vmatprep.mubr.f32.mxu0 0.0
        %1519 = vmatmul.mubr.f32.gmra.mrb[0].mxu0 %v1414
        %v1520 = vpop.f32.mrb[0].mxu0
        %v1521 = vadd.f32 0.0, %v1520
        %v1522 = vpop.f32.mrb[0].mxu0
        %1523 = vdwg.mxu0
        %v1524 = vadd.f32 %v1374, %v1486
        %v1525 = vadd.f32 %v1375, %v1491
        %v1526 = vadd.f32 %v1376, %v1496
        %v1527 = vadd.f32 %v1377, %v1501
        %v1528 = vadd.f32 %v1378, %v1506
        %v1529 = vadd.f32 %v1379, %v1511
        %v1530 = vadd.f32 %v1380, %v1516
        %v1531 = vadd.f32 %v1381, %v1521
        %v1532 = vld [vmem:[%s1231 + $0x2] sm:$0xff]
        %v1533 = vld [vmem:[%s1231 + $0x12] sm:$0xff]
        %v1534 = vld [vmem:[%s1231 + $0x22] sm:$0xff]
        %v1535 = vld [vmem:[%s1231 + $0x32] sm:$0xff]
        %v1536 = vld [vmem:[%s1231 + $0x42] sm:$0xff]
        %v1537 = vld [vmem:[%s1231 + $0x52] sm:$0xff]
        %v1538 = vld [vmem:[%s1231 + $0x62] sm:$0xff]
        %v1539 = vld [vmem:[%s1231 + $0x72] sm:$0xff]
        %s1540 = scalar_lea.vmem %s1, 32
        %v1541 = vld [vmem:[%s1540] sm:$0xf]
        %v1543 = vsel %vm310, %v1532, 0
        %v1546 = vsel %vm310, %v1533, 0
        %v1549 = vsel %vm310, %v1534, 0
        %v1552 = vsel %vm310, %v1535, 0
        %v1555 = vsel %vm310, %v1536, 0
        %v1558 = vsel %vm310, %v1537, 0
        %v1561 = vsel %vm310, %v1538, 0
        %v1564 = vsel %vm310, %v1539, 0
        %v1567 = vsel %vm390, %v1541, 0
        %1569 = vmatprep.subr.mxu0 0.0
        %1570 = vmatpush1.msra.mxu0 %v1567
        %1571 = vmatprep.subr.mxu0 0.0
        %1572 = vmatpush1.msra.mxu0 0.0
        %1573 = vmatprep.subr.mxu0 0.0
        %1574 = vmatpush1.msra.mxu0 0.0
        %1575 = vmatprep.subr.mxu0 0.0
        %1576 = vmatpush1.msra.mxu0 0.0
        %1577 = vmatprep.subr.mxu0 0.0
        %1578 = vmatpush1.msra.mxu0 0.0
        %1579 = vmatprep.subr.mxu0 0.0
        %1580 = vmatpush1.msra.mxu0 0.0
        %1581 = vmatprep.subr.mxu0 0.0
        %1582 = vmatpush1.msra.mxu0 0.0
        %1583 = vmatprep.subr.mxu0 0.0
        %1584 = vmatpush1.msra.mxu0 0.0
        %1585 = vmatprep.subr.mxu0 0.0
        %1586 = vmatpush1.msra.mxu0 0.0
        %1587 = vmatprep.subr.mxu0 0.0
        %1588 = vmatpush1.msra.mxu0 0.0
        %1589 = vmatprep.subr.mxu0 0.0
        %1590 = vmatpush1.msra.mxu0 0.0
        %1591 = vmatprep.subr.mxu0 0.0
        %1592 = vmatpush1.msra.mxu0 0.0
        %1593 = vmatprep.subr.mxu0 0.0
        %1594 = vmatpush1.msra.mxu0 0.0
        %1595 = vmatprep.subr.mxu0 0.0
        %1596 = vmatpush1.msra.mxu0 0.0
        %1597 = vmatprep.subr.mxu0 0.0
        %1598 = vmatpush1.msra.mxu0 0.0
        %1599 = vmatprep.subr.mxu0 0.0
        %1600 = vmatpush1.msra.mxu0 0.0
        %1601 = vmatprep.subr.mxu0 0.0
        %1602 = vmatpush1.msra.mxu0 0.0
        %1603 = vmatprep.subr.mxu0 0.0
        %1604 = vmatpush1.msra.mxu0 0.0
        %1605 = vmatprep.subr.mxu0 0.0
        %1606 = vmatpush1.msra.mxu0 0.0
        %1607 = vmatprep.subr.mxu0 0.0
        %1608 = vmatpush1.msra.mxu0 0.0
        %1609 = vmatprep.subr.mxu0 0.0
        %1610 = vmatpush1.msra.mxu0 0.0
        %1611 = vmatprep.subr.mxu0 0.0
        %1612 = vmatpush1.msra.mxu0 0.0
        %1613 = vmatprep.subr.mxu0 0.0
        %1614 = vmatpush1.msra.mxu0 0.0
        %1615 = vmatprep.subr.mxu0 0.0
        %1616 = vmatpush1.msra.mxu0 0.0
        %1617 = vmatprep.subr.mxu0 0.0
        %1618 = vmatpush1.msra.mxu0 0.0
        %1619 = vmatprep.subr.mxu0 0.0
        %1620 = vmatpush1.msra.mxu0 0.0
        %1621 = vmatprep.subr.mxu0 0.0
        %1622 = vmatpush1.msra.mxu0 0.0
        %1623 = vmatprep.subr.mxu0 0.0
        %1624 = vmatpush1.msra.mxu0 0.0
        %1625 = vmatprep.subr.mxu0 0.0
        %1626 = vmatpush1.msra.mxu0 0.0
        %1627 = vmatprep.subr.mxu0 0.0
        %1628 = vmatpush1.msra.mxu0 0.0
        %1629 = vmatprep.subr.mxu0 0.0
        %1630 = vmatpush1.msra.mxu0 0.0
        %1631 = vmatprep.subr.mxu0 0.0
        %1632 = vmatpush1.msra.mxu0 0.0
        %1633 = vmatprep.mubr.f32.mxu0 0.0
        %1634 = vmatmul.mubr.f32.gmra.mrb[0].mxu0 %v1543
        %v1635 = vpop.f32.mrb[0].mxu0
        %v1636 = vadd.f32 0.0, %v1635
        %v1637 = vpop.f32.mrb[0].mxu0
        %1638 = vmatprep.mubr.f32.mxu0 0.0
        %1639 = vmatmul.mubr.f32.gmra.mrb[0].mxu0 %v1546
        %v1640 = vpop.f32.mrb[0].mxu0
        %v1641 = vadd.f32 0.0, %v1640
        %v1642 = vpop.f32.mrb[0].mxu0
        %1643 = vmatprep.mubr.f32.mxu0 0.0
        %1644 = vmatmul.mubr.f32.gmra.mrb[0].mxu0 %v1549
        %v1645 = vpop.f32.mrb[0].mxu0
        %v1646 = vadd.f32 0.0, %v1645
        %v1647 = vpop.f32.mrb[0].mxu0
        %1648 = vmatprep.mubr.f32.mxu0 0.0
        %1649 = vmatmul.mubr.f32.gmra.mrb[0].mxu0 %v1552
        %v1650 = vpop.f32.mrb[0].mxu0
        %v1651 = vadd.f32 0.0, %v1650
        %v1652 = vpop.f32.mrb[0].mxu0
        %1653 = vmatprep.mubr.f32.mxu0 0.0
        %1654 = vmatmul.mubr.f32.gmra.mrb[0].mxu0 %v1555
        %v1655 = vpop.f32.mrb[0].mxu0
        %v1656 = vadd.f32 0.0, %v1655
        %v1657 = vpop.f32.mrb[0].mxu0
        %1658 = vmatprep.mubr.f32.mxu0 0.0
        %1659 = vmatmul.mubr.f32.gmra.mrb[0].mxu0 %v1558
        %v1660 = vpop.f32.mrb[0].mxu0
        %v1661 = vadd.f32 0.0, %v1660
        %v1662 = vpop.f32.mrb[0].mxu0
        %1663 = vmatprep.mubr.f32.mxu0 0.0
        %1664 = vmatmul.mubr.f32.gmra.mrb[0].mxu0 %v1561
        %v1665 = vpop.f32.mrb[0].mxu0
        %v1666 = vadd.f32 0.0, %v1665
        %v1667 = vpop.f32.mrb[0].mxu0
        %1668 = vmatprep.mubr.f32.mxu0 0.0
        %1669 = vmatmul.mubr.f32.gmra.mrb[0].mxu0 %v1564
        %v1670 = vpop.f32.mrb[0].mxu0
        %v1671 = vadd.f32 0.0, %v1670
        %v1672 = vpop.f32.mrb[0].mxu0
        %1673 = vdwg.mxu0
        %v1674 = vadd.f32 %v1524, %v1636
        %v1675 = vadd.f32 %v1525, %v1641
        %v1676 = vadd.f32 %v1526, %v1646
        %v1677 = vadd.f32 %v1527, %v1651
        %v1678 = vadd.f32 %v1528, %v1656
        %v1679 = vadd.f32 %v1529, %v1661
        %v1680 = vadd.f32 %v1530, %v1666
        %v1681 = vadd.f32 %v1531, %v1671
        %v1682 = vld [vmem:[%s2] sm:$0x1]
        %v1684 = vlaneseq
        %v1685 = vshrl.u32 %v1684, 7
        %v1686 = vsub.s32 0, %v1685
        %v1687 = vrot.slane %v1682, %v1686
        %v1689 = vadd.f32 %v1674, %v1687
        %v1690 = vadd.f32 %v1675, %v1687
        %v1691 = vadd.f32 %v1676, %v1687
        %v1692 = vadd.f32 %v1677, %v1687
        %v1693 = vadd.f32 %v1678, %v1687
        %v1694 = vadd.f32 %v1679, %v1687
        %v1695 = vadd.f32 %v1680, %v1687
        %v1696 = vadd.f32 %v1681, %v1687
        %v1697 = vmax.f32 %v1689, 0.0
        %v1698 = vmax.f32 %v1690, 0.0
        %v1699 = vmax.f32 %v1691, 0.0
        %v1700 = vmax.f32 %v1692, 0.0
        %v1701 = vmax.f32 %v1693, 0.0
        %v1702 = vmax.f32 %v1694, 0.0
        %v1703 = vmax.f32 %v1695, 0.0
        %v1704 = vmax.f32 %v1696, 0.0
        %vm1705 = vcmask 64512
        %1706 = vst.msk [vmem:[#allocation3] sm:$0xff] %vm1705, 0.0
        %vm1707 = vcmask 58368
        %1708 = vst.msk [vmem:[#allocation3 + $0x8] sm:$0x3] %vm1707, 0.0
        %s1709 = scalar_lea.vmem [#allocation3], 144
        %1710 = vst.msk [vmem:[%s1709] sm:$0xff] %vm1705, 0.0
        %1711 = vst.msk [vmem:[%s1709 + $0x8] sm:$0x3] %vm1707, 0.0
        %vm1712 = vcmask 57344
        %1713 = vst.msk [vmem:[#allocation3] sm:$0x1] %vm1712, 0.0
        %1714 = vst.msk [vmem:[#allocation3 + $0x10] sm:$0x1] %vm1712, 0.0
        %1715 = vst.msk [vmem:[#allocation3 + $0x20] sm:$0x1] %vm1712, 0.0
        %1716 = vst.msk [vmem:[#allocation3 + $0x30] sm:$0x1] %vm1712, 0.0
        %1717 = vst.msk [vmem:[#allocation3 + $0x40] sm:$0x1] %vm1712, 0.0
        %1718 = vst.msk [vmem:[#allocation3 + $0x50] sm:$0x1] %vm1712, 0.0
        %1719 = vst.msk [vmem:[#allocation3 + $0x60] sm:$0x1] %vm1712, 0.0
        %1720 = vst.msk [vmem:[#allocation3 + $0x70] sm:$0x1] %vm1712, 0.0
        %1721 = vst.msk [vmem:[#allocation3 + $0x80] sm:$0x1] %vm1712, 0.0
        %1722 = vst.msk [vmem:[#allocation3 + $0x90] sm:$0x1] %vm1712, 0.0
        %1723 = vst.msk [vmem:[#allocation3 + $0x9] sm:$0x1] %vm1712, 0.0
        %1724 = vst.msk [vmem:[#allocation3 + $0x19] sm:$0x1] %vm1712, 0.0
        %1725 = vst.msk [vmem:[#allocation3 + $0x29] sm:$0x1] %vm1712, 0.0
        %1726 = vst.msk [vmem:[#allocation3 + $0x39] sm:$0x1] %vm1712, 0.0
        %1727 = vst.msk [vmem:[#allocation3 + $0x49] sm:$0x1] %vm1712, 0.0
        %1728 = vst.msk [vmem:[#allocation3 + $0x59] sm:$0x1] %vm1712, 0.0
        %1729 = vst.msk [vmem:[#allocation3 + $0x69] sm:$0x1] %vm1712, 0.0
        %1730 = vst.msk [vmem:[#allocation3 + $0x79] sm:$0x1] %vm1712, 0.0
        %1731 = vst.msk [vmem:[#allocation3 + $0x89] sm:$0x1] %vm1712, 0.0
        %1732 = vst.msk [vmem:[#allocation3 + $0x99] sm:$0x1] %vm1712, 0.0
        %s1733 = scalar_lea.vmem [#allocation3], 16
        %1734 = vst.msk [vmem:[%s1733 + $0x1] sm:$0xff] %vm1705, %v1697
        %1735 = vst.msk [vmem:[%s1733 + $0x11] sm:$0xff] %vm1705, %v1698
        %1736 = vst.msk [vmem:[%s1733 + $0x21] sm:$0xff] %vm1705, %v1699
        %1737 = vst.msk [vmem:[%s1733 + $0x31] sm:$0xff] %vm1705, %v1700
        %1738 = vst.msk [vmem:[%s1733 + $0x41] sm:$0xff] %vm1705, %v1701
        %1739 = vst.msk [vmem:[%s1733 + $0x51] sm:$0xff] %vm1705, %v1702
        %1740 = vst.msk [vmem:[%s1733 + $0x61] sm:$0xff] %vm1705, %v1703
        %1741 = vst.msk [vmem:[%s1733 + $0x71] sm:$0xff] %vm1705, %v1704
        %v1742 = vld [vmem:[#allocation3] sm:$0xff]
        %v1743 = vld [vmem:[#allocation3 + $0x10] sm:$0xff]
        %v1744 = vld [vmem:[#allocation3 + $0x20] sm:$0xff]
        %v1745 = vld [vmem:[#allocation3 + $0x30] sm:$0xff]
        %v1746 = vld [vmem:[#allocation3 + $0x40] sm:$0xff]
        %v1747 = vld [vmem:[#allocation3 + $0x50] sm:$0xff]
        %v1748 = vld [vmem:[#allocation3 + $0x60] sm:$0xff]
        %v1749 = vld [vmem:[#allocation3 + $0x70] sm:$0xff]
        %v1750 = vld [vmem:[%s3] sm:$0xff]
        %v1751 = vld [vmem:[#allocation3 + $0x1] sm:$0xff]
        %v1752 = vld [vmem:[#allocation3 + $0x11] sm:$0xff]
        %v1753 = vld [vmem:[#allocation3 + $0x21] sm:$0xff]
        %v1754 = vld [vmem:[#allocation3 + $0x31] sm:$0xff]
        %v1755 = vld [vmem:[#allocation3 + $0x41] sm:$0xff]
        %v1756 = vld [vmem:[#allocation3 + $0x51] sm:$0xff]
        %v1757 = vld [vmem:[#allocation3 + $0x61] sm:$0xff]
        %v1758 = vld [vmem:[#allocation3 + $0x71] sm:$0xff]
        %s1759 = scalar_lea.vmem %s3, 8
        %v1760 = vld [vmem:[%s1759] sm:$0xff]
        %v1762 = vsel %vm1705, %v1751, 0
        %v1765 = vsel %vm1705, %v1752, 0
        %v1768 = vsel %vm1705, %v1753, 0
        %v1771 = vsel %vm1705, %v1754, 0
        %v1774 = vsel %vm1705, %v1755, 0
        %v1777 = vsel %vm1705, %v1756, 0
        %v1780 = vsel %vm1705, %v1757, 0
        %v1783 = vsel %vm1705, %v1758, 0
        %1785 = vmatprep.subr.mxu0 0.0
        %1786 = vmatpush1.msra.mxu0 %v1760
        %1787 = vmatprep.subr.mxu0 0.0
        %1788 = vmatpush1.msra.mxu0 0.0
        %1789 = vmatprep.subr.mxu0 0.0
        %1790 = vmatpush1.msra.mxu0 0.0
        %1791 = vmatprep.subr.mxu0 0.0
        %1792 = vmatpush1.msra.mxu0 0.0
        %1793 = vmatprep.subr.mxu0 0.0
        %1794 = vmatpush1.msra.mxu0 0.0
        %1795 = vmatprep.subr.mxu0 0.0
        %1796 = vmatpush1.msra.mxu0 0.0
        %1797 = vmatprep.subr.mxu0 0.0
        %1798 = vmatpush1.msra.mxu0 0.0
        %1799 = vmatprep.subr.mxu0 0.0
        %1800 = vmatpush1.msra.mxu0 0.0
        %1801 = vmatprep.subr.mxu0 0.0
        %1802 = vmatpush1.msra.mxu0 0.0
        %1803 = vmatprep.subr.mxu0 0.0
        %1804 = vmatpush1.msra.mxu0 0.0
        %1805 = vmatprep.subr.mxu0 0.0
        %1806 = vmatpush1.msra.mxu0 0.0
        %1807 = vmatprep.subr.mxu0 0.0
        %1808 = vmatpush1.msra.mxu0 0.0
        %1809 = vmatprep.subr.mxu0 0.0
        %1810 = vmatpush1.msra.mxu0 0.0
        %1811 = vmatprep.subr.mxu0 0.0
        %1812 = vmatpush1.msra.mxu0 0.0
        %1813 = vmatprep.subr.mxu0 0.0
        %1814 = vmatpush1.msra.mxu0 0.0
        %1815 = vmatprep.subr.mxu0 0.0
        %1816 = vmatpush1.msra.mxu0 0.0
        %1817 = vmatprep.subr.mxu0 0.0
        %1818 = vmatpush1.msra.mxu0 0.0
        %1819 = vmatprep.subr.mxu0 0.0
        %1820 = vmatpush1.msra.mxu0 0.0
        %1821 = vmatprep.subr.mxu0 0.0
        %1822 = vmatpush1.msra.mxu0 0.0
        %1823 = vmatprep.subr.mxu0 0.0
        %1824 = vmatpush1.msra.mxu0 0.0
        %1825 = vmatprep.subr.mxu0 0.0
        %1826 = vmatpush1.msra.mxu0 0.0
        %1827 = vmatprep.subr.mxu0 0.0
        %1828 = vmatpush1.msra.mxu0 0.0
        %1829 = vmatprep.subr.mxu0 0.0
        %1830 = vmatpush1.msra.mxu0 0.0
        %1831 = vmatprep.subr.mxu0 0.0
        %1832 = vmatpush1.msra.mxu0 0.0
        %1833 = vmatprep.subr.mxu0 0.0
        %1834 = vmatpush1.msra.mxu0 0.0
        %1835 = vmatprep.subr.mxu0 0.0
        %1836 = vmatpush1.msra.mxu0 0.0
        %1837 = vmatprep.subr.mxu0 0.0
        %1838 = vmatpush1.msra.mxu0 0.0
        %1839 = vmatprep.subr.mxu0 0.0
        %1840 = vmatpush1.msra.mxu0 0.0
        %1841 = vmatprep.subr.mxu0 0.0
        %1842 = vmatpush1.msra.mxu0 0.0
        %1843 = vmatprep.subr.mxu0 0.0
        %1844 = vmatpush1.msra.mxu0 0.0
        %1845 = vmatprep.subr.mxu0 0.0
        %1846 = vmatpush1.msra.mxu0 0.0
        %1847 = vmatprep.subr.mxu0 0.0
        %1848 = vmatpush1.msra.mxu0 0.0
        %1849 = vmatprep.mubr.f32.mxu0 0.0
        %1850 = vmatmul.mubr.f32.gmra.mrb[0].mxu0 %v1762
        %v1851 = vpop.f32.mrb[0].mxu0
        %v1852 = vadd.f32 0.0, %v1851
        %v1853 = vpop.f32.mrb[0].mxu0
        %1854 = vmatprep.mubr.f32.mxu0 0.0
        %1855 = vmatmul.mubr.f32.gmra.mrb[0].mxu0 %v1765
        %v1856 = vpop.f32.mrb[0].mxu0
        %v1857 = vadd.f32 0.0, %v1856
        %v1858 = vpop.f32.mrb[0].mxu0
        %1859 = vmatprep.mubr.f32.mxu0 0.0
        %1860 = vmatmul.mubr.f32.gmra.mrb[0].mxu0 %v1768
        %v1861 = vpop.f32.mrb[0].mxu0
        %v1862 = vadd.f32 0.0, %v1861
        %v1863 = vpop.f32.mrb[0].mxu0
        %1864 = vmatprep.mubr.f32.mxu0 0.0
        %1865 = vmatmul.mubr.f32.gmra.mrb[0].mxu0 %v1771
        %v1866 = vpop.f32.mrb[0].mxu0
        %v1867 = vadd.f32 0.0, %v1866
        %v1868 = vpop.f32.mrb[0].mxu0
        %1869 = vmatprep.mubr.f32.mxu0 0.0
        %1870 = vmatmul.mubr.f32.gmra.mrb[0].mxu0 %v1774
        %v1871 = vpop.f32.mrb[0].mxu0
        %v1872 = vadd.f32 0.0, %v1871
        %v1873 = vpop.f32.mrb[0].mxu0
        %1874 = vmatprep.mubr.f32.mxu0 0.0
        %1875 = vmatmul.mubr.f32.gmra.mrb[0].mxu0 %v1777
        %v1876 = vpop.f32.mrb[0].mxu0
        %v1877 = vadd.f32 0.0, %v1876
        %v1878 = vpop.f32.mrb[0].mxu0
        %1879 = vmatprep.mubr.f32.mxu0 0.0
        %1880 = vmatmul.mubr.f32.gmra.mrb[0].mxu0 %v1780
        %v1881 = vpop.f32.mrb[0].mxu0
        %v1882 = vadd.f32 0.0, %v1881
        %v1883 = vpop.f32.mrb[0].mxu0
        %1884 = vmatprep.mubr.f32.mxu0 0.0
        %1885 = vmatmul.mubr.f32.gmra.mrb[0].mxu0 %v1783
        %v1886 = vpop.f32.mrb[0].mxu0
        %v1887 = vadd.f32 0.0, %v1886
        %v1888 = vpop.f32.mrb[0].mxu0
        %1889 = vdwg.mxu0
        %v1891 = vsel %vm1705, %v1742, 0
        %v1894 = vsel %vm1705, %v1743, 0
        %v1897 = vsel %vm1705, %v1744, 0
        %v1900 = vsel %vm1705, %v1745, 0
        %v1903 = vsel %vm1705, %v1746, 0
        %v1906 = vsel %vm1705, %v1747, 0
        %v1909 = vsel %vm1705, %v1748, 0
        %v1912 = vsel %vm1705, %v1749, 0
        %1914 = vmatprep.subr.mxu0 0.0
        %1915 = vmatpush1.msra.mxu0 %v1750
        %1916 = vmatprep.subr.mxu0 0.0
        %1917 = vmatpush1.msra.mxu0 0.0
        %1918 = vmatprep.subr.mxu0 0.0
        %1919 = vmatpush1.msra.mxu0 0.0
        %1920 = vmatprep.subr.mxu0 0.0
        %1921 = vmatpush1.msra.mxu0 0.0
        %1922 = vmatprep.subr.mxu0 0.0
        %1923 = vmatpush1.msra.mxu0 0.0
        %1924 = vmatprep.subr.mxu0 0.0
        %1925 = vmatpush1.msra.mxu0 0.0
        %1926 = vmatprep.subr.mxu0 0.0
        %1927 = vmatpush1.msra.mxu0 0.0
        %1928 = vmatprep.subr.mxu0 0.0
        %1929 = vmatpush1.msra.mxu0 0.0
        %1930 = vmatprep.subr.mxu0 0.0
        %1931 = vmatpush1.msra.mxu0 0.0
        %1932 = vmatprep.subr.mxu0 0.0
        %1933 = vmatpush1.msra.mxu0 0.0
        %1934 = vmatprep.subr.mxu0 0.0
        %1935 = vmatpush1.msra.mxu0 0.0
        %1936 = vmatprep.subr.mxu0 0.0
        %1937 = vmatpush1.msra.mxu0 0.0
        %1938 = vmatprep.subr.mxu0 0.0
        %1939 = vmatpush1.msra.mxu0 0.0
        %1940 = vmatprep.subr.mxu0 0.0
        %1941 = vmatpush1.msra.mxu0 0.0
        %1942 = vmatprep.subr.mxu0 0.0
        %1943 = vmatpush1.msra.mxu0 0.0
        %1944 = vmatprep.subr.mxu0 0.0
        %1945 = vmatpush1.msra.mxu0 0.0
        %1946 = vmatprep.subr.mxu0 0.0
        %1947 = vmatpush1.msra.mxu0 0.0
        %1948 = vmatprep.subr.mxu0 0.0
        %1949 = vmatpush1.msra.mxu0 0.0
        %1950 = vmatprep.subr.mxu0 0.0
        %1951 = vmatpush1.msra.mxu0 0.0
        %1952 = vmatprep.subr.mxu0 0.0
        %1953 = vmatpush1.msra.mxu0 0.0
        %1954 = vmatprep.subr.mxu0 0.0
        %1955 = vmatpush1.msra.mxu0 0.0
        %1956 = vmatprep.subr.mxu0 0.0
        %1957 = vmatpush1.msra.mxu0 0.0
        %1958 = vmatprep.subr.mxu0 0.0
        %1959 = vmatpush1.msra.mxu0 0.0
        %1960 = vmatprep.subr.mxu0 0.0
        %1961 = vmatpush1.msra.mxu0 0.0
        %1962 = vmatprep.subr.mxu0 0.0
        %1963 = vmatpush1.msra.mxu0 0.0
        %1964 = vmatprep.subr.mxu0 0.0
        %1965 = vmatpush1.msra.mxu0 0.0
        %1966 = vmatprep.subr.mxu0 0.0
        %1967 = vmatpush1.msra.mxu0 0.0
        %1968 = vmatprep.subr.mxu0 0.0
        %1969 = vmatpush1.msra.mxu0 0.0
        %1970 = vmatprep.subr.mxu0 0.0
        %1971 = vmatpush1.msra.mxu0 0.0
        %1972 = vmatprep.subr.mxu0 0.0
        %1973 = vmatpush1.msra.mxu0 0.0
        %1974 = vmatprep.subr.mxu0 0.0
        %1975 = vmatpush1.msra.mxu0 0.0
        %1976 = vmatprep.subr.mxu0 0.0
        %1977 = vmatpush1.msra.mxu0 0.0
        %1978 = vmatprep.mubr.f32.mxu0 0.0
        %1979 = vmatmul.mubr.f32.gmra.mrb[0].mxu0 %v1891
        %v1980 = vpop.f32.mrb[0].mxu0
        %v1981 = vadd.f32 %v1852, %v1980
        %v1982 = vpop.f32.mrb[0].mxu0
        %1983 = vmatprep.mubr.f32.mxu0 0.0
        %1984 = vmatmul.mubr.f32.gmra.mrb[0].mxu0 %v1894
        %v1985 = vpop.f32.mrb[0].mxu0
        %v1986 = vadd.f32 %v1857, %v1985
        %v1987 = vpop.f32.mrb[0].mxu0
        %1988 = vmatprep.mubr.f32.mxu0 0.0
        %1989 = vmatmul.mubr.f32.gmra.mrb[0].mxu0 %v1897
        %v1990 = vpop.f32.mrb[0].mxu0
        %v1991 = vadd.f32 %v1862, %v1990
        %v1992 = vpop.f32.mrb[0].mxu0
        %1993 = vmatprep.mubr.f32.mxu0 0.0
        %1994 = vmatmul.mubr.f32.gmra.mrb[0].mxu0 %v1900
        %v1995 = vpop.f32.mrb[0].mxu0
        %v1996 = vadd.f32 %v1867, %v1995
        %v1997 = vpop.f32.mrb[0].mxu0
        %1998 = vmatprep.mubr.f32.mxu0 0.0
        %1999 = vmatmul.mubr.f32.gmra.mrb[0].mxu0 %v1903
        %v2000 = vpop.f32.mrb[0].mxu0
        %v2001 = vadd.f32 %v1872, %v2000
        %v2002 = vpop.f32.mrb[0].mxu0
        %2003 = vmatprep.mubr.f32.mxu0 0.0
        %2004 = vmatmul.mubr.f32.gmra.mrb[0].mxu0 %v1906
        %v2005 = vpop.f32.mrb[0].mxu0
        %v2006 = vadd.f32 %v1877, %v2005
        %v2007 = vpop.f32.mrb[0].mxu0
        %2008 = vmatprep.mubr.f32.mxu0 0.0
        %2009 = vmatmul.mubr.f32.gmra.mrb[0].mxu0 %v1909
        %v2010 = vpop.f32.mrb[0].mxu0
        %v2011 = vadd.f32 %v1882, %v2010
        %v2012 = vpop.f32.mrb[0].mxu0
        %2013 = vmatprep.mubr.f32.mxu0 0.0
        %2014 = vmatmul.mubr.f32.gmra.mrb[0].mxu0 %v1912
        %v2015 = vpop.f32.mrb[0].mxu0
        %v2016 = vadd.f32 %v1887, %v2015
        %v2017 = vpop.f32.mrb[0].mxu0
        %2018 = vdwg.mxu0
        %v2019 = vld [vmem:[#allocation3 + $0x2] sm:$0xff]
        %v2020 = vld [vmem:[#allocation3 + $0x12] sm:$0xff]
        %v2021 = vld [vmem:[#allocation3 + $0x22] sm:$0xff]
        %v2022 = vld [vmem:[#allocation3 + $0x32] sm:$0xff]
        %v2023 = vld [vmem:[#allocation3 + $0x42] sm:$0xff]
        %v2024 = vld [vmem:[#allocation3 + $0x52] sm:$0xff]
        %v2025 = vld [vmem:[#allocation3 + $0x62] sm:$0xff]
        %v2026 = vld [vmem:[#allocation3 + $0x72] sm:$0xff]
        %s2027 = scalar_lea.vmem %s3, 16
        %v2028 = vld [vmem:[%s2027] sm:$0xff]
        %v2030 = vsel %vm1705, %v2019, 0
        %v2033 = vsel %vm1705, %v2020, 0
        %v2036 = vsel %vm1705, %v2021, 0
        %v2039 = vsel %vm1705, %v2022, 0
        %v2042 = vsel %vm1705, %v2023, 0
        %v2045 = vsel %vm1705, %v2024, 0
        %v2048 = vsel %vm1705, %v2025, 0
        %v2051 = vsel %vm1705, %v2026, 0
        %2053 = vmatprep.subr.mxu0 0.0
        %2054 = vmatpush1.msra.mxu0 %v2028
        %2055 = vmatprep.subr.mxu0 0.0
        %2056 = vmatpush1.msra.mxu0 0.0
        %2057 = vmatprep.subr.mxu0 0.0
        %2058 = vmatpush1.msra.mxu0 0.0
        %2059 = vmatprep.subr.mxu0 0.0
        %2060 = vmatpush1.msra.mxu0 0.0
        %2061 = vmatprep.subr.mxu0 0.0
        %2062 = vmatpush1.msra.mxu0 0.0
        %2063 = vmatprep.subr.mxu0 0.0
        %2064 = vmatpush1.msra.mxu0 0.0
        %2065 = vmatprep.subr.mxu0 0.0
        %2066 = vmatpush1.msra.mxu0 0.0
        %2067 = vmatprep.subr.mxu0 0.0
        %2068 = vmatpush1.msra.mxu0 0.0
        %2069 = vmatprep.subr.mxu0 0.0
        %2070 = vmatpush1.msra.mxu0 0.0
        %2071 = vmatprep.subr.mxu0 0.0
        %2072 = vmatpush1.msra.mxu0 0.0
        %2073 = vmatprep.subr.mxu0 0.0
        %2074 = vmatpush1.msra.mxu0 0.0
        %2075 = vmatprep.subr.mxu0 0.0
        %2076 = vmatpush1.msra.mxu0 0.0
        %2077 = vmatprep.subr.mxu0 0.0
        %2078 = vmatpush1.msra.mxu0 0.0
        %2079 = vmatprep.subr.mxu0 0.0
        %2080 = vmatpush1.msra.mxu0 0.0
        %2081 = vmatprep.subr.mxu0 0.0
        %2082 = vmatpush1.msra.mxu0 0.0
        %2083 = vmatprep.subr.mxu0 0.0
        %2084 = vmatpush1.msra.mxu0 0.0
        %2085 = vmatprep.subr.mxu0 0.0
        %2086 = vmatpush1.msra.mxu0 0.0
        %2087 = vmatprep.subr.mxu0 0.0
        %2088 = vmatpush1.msra.mxu0 0.0
        %2089 = vmatprep.subr.mxu0 0.0
        %2090 = vmatpush1.msra.mxu0 0.0
        %2091 = vmatprep.subr.mxu0 0.0
        %2092 = vmatpush1.msra.mxu0 0.0
        %2093 = vmatprep.subr.mxu0 0.0
        %2094 = vmatpush1.msra.mxu0 0.0
        %2095 = vmatprep.subr.mxu0 0.0
        %2096 = vmatpush1.msra.mxu0 0.0
        %2097 = vmatprep.subr.mxu0 0.0
        %2098 = vmatpush1.msra.mxu0 0.0
        %2099 = vmatprep.subr.mxu0 0.0
        %2100 = vmatpush1.msra.mxu0 0.0
        %2101 = vmatprep.subr.mxu0 0.0
        %2102 = vmatpush1.msra.mxu0 0.0
        %2103 = vmatprep.subr.mxu0 0.0
        %2104 = vmatpush1.msra.mxu0 0.0
        %2105 = vmatprep.subr.mxu0 0.0
        %2106 = vmatpush1.msra.mxu0 0.0
        %2107 = vmatprep.subr.mxu0 0.0
        %2108 = vmatpush1.msra.mxu0 0.0
        %2109 = vmatprep.subr.mxu0 0.0
        %2110 = vmatpush1.msra.mxu0 0.0
        %2111 = vmatprep.subr.mxu0 0.0
        %2112 = vmatpush1.msra.mxu0 0.0
        %2113 = vmatprep.subr.mxu0 0.0
        %2114 = vmatpush1.msra.mxu0 0.0
        %2115 = vmatprep.subr.mxu0 0.0
        %2116 = vmatpush1.msra.mxu0 0.0
        %2117 = vmatprep.mubr.f32.mxu0 0.0
        %2118 = vmatmul.mubr.f32.gmra.mrb[0].mxu0 %v2030
        %v2119 = vpop.f32.mrb[0].mxu0
        %v2120 = vadd.f32 0.0, %v2119
        %v2121 = vpop.f32.mrb[0].mxu0
        %2122 = vmatprep.mubr.f32.mxu0 0.0
        %2123 = vmatmul.mubr.f32.gmra.mrb[0].mxu0 %v2033
        %v2124 = vpop.f32.mrb[0].mxu0
        %v2125 = vadd.f32 0.0, %v2124
        %v2126 = vpop.f32.mrb[0].mxu0
        %2127 = vmatprep.mubr.f32.mxu0 0.0
        %2128 = vmatmul.mubr.f32.gmra.mrb[0].mxu0 %v2036
        %v2129 = vpop.f32.mrb[0].mxu0
        %v2130 = vadd.f32 0.0, %v2129
        %v2131 = vpop.f32.mrb[0].mxu0
        %2132 = vmatprep.mubr.f32.mxu0 0.0
        %2133 = vmatmul.mubr.f32.gmra.mrb[0].mxu0 %v2039
        %v2134 = vpop.f32.mrb[0].mxu0
        %v2135 = vadd.f32 0.0, %v2134
        %v2136 = vpop.f32.mrb[0].mxu0
        %2137 = vmatprep.mubr.f32.mxu0 0.0
        %2138 = vmatmul.mubr.f32.gmra.mrb[0].mxu0 %v2042
        %v2139 = vpop.f32.mrb[0].mxu0
        %v2140 = vadd.f32 0.0, %v2139
        %v2141 = vpop.f32.mrb[0].mxu0
        %2142 = vmatprep.mubr.f32.mxu0 0.0
        %2143 = vmatmul.mubr.f32.gmra.mrb[0].mxu0 %v2045
        %v2144 = vpop.f32.mrb[0].mxu0
        %v2145 = vadd.f32 0.0, %v2144
        %v2146 = vpop.f32.mrb[0].mxu0
        %2147 = vmatprep.mubr.f32.mxu0 0.0
        %2148 = vmatmul.mubr.f32.gmra.mrb[0].mxu0 %v2048
        %v2149 = vpop.f32.mrb[0].mxu0
        %v2150 = vadd.f32 0.0, %v2149
        %v2151 = vpop.f32.mrb[0].mxu0
        %2152 = vmatprep.mubr.f32.mxu0 0.0
        %2153 = vmatmul.mubr.f32.gmra.mrb[0].mxu0 %v2051
        %v2154 = vpop.f32.mrb[0].mxu0
        %v2155 = vadd.f32 0.0, %v2154
        %v2156 = vpop.f32.mrb[0].mxu0
        %2157 = vdwg.mxu0
        %v2158 = vadd.f32 %v1981, %v2120
        %v2159 = vadd.f32 %v1986, %v2125
        %v2160 = vadd.f32 %v1991, %v2130
        %v2161 = vadd.f32 %v1996, %v2135
        %v2162 = vadd.f32 %v2001, %v2140
        %v2163 = vadd.f32 %v2006, %v2145
        %v2164 = vadd.f32 %v2011, %v2150
        %v2165 = vadd.f32 %v2016, %v2155
        %v2166 = vld [vmem:[%s1733] sm:$0xff]
        %v2167 = vld [vmem:[%s1733 + $0x10] sm:$0xff]
        %v2168 = vld [vmem:[%s1733 + $0x20] sm:$0xff]
        %v2169 = vld [vmem:[%s1733 + $0x30] sm:$0xff]
        %v2170 = vld [vmem:[%s1733 + $0x40] sm:$0xff]
        %v2171 = vld [vmem:[%s1733 + $0x50] sm:$0xff]
        %v2172 = vld [vmem:[%s1733 + $0x60] sm:$0xff]
        %v2173 = vld [vmem:[%s1733 + $0x70] sm:$0xff]
        %s2174 = scalar_lea.vmem %s3, 24
        %v2175 = vld [vmem:[%s2174] sm:$0xff]
        %v2177 = vsel %vm1705, %v2166, 0
        %v2180 = vsel %vm1705, %v2167, 0
        %v2183 = vsel %vm1705, %v2168, 0
        %v2186 = vsel %vm1705, %v2169, 0
        %v2189 = vsel %vm1705, %v2170, 0
        %v2192 = vsel %vm1705, %v2171, 0
        %v2195 = vsel %vm1705, %v2172, 0
        %v2198 = vsel %vm1705, %v2173, 0
        %2200 = vmatprep.subr.mxu0 0.0
        %2201 = vmatpush1.msra.mxu0 %v2175
        %2202 = vmatprep.subr.mxu0 0.0
        %2203 = vmatpush1.msra.mxu0 0.0
        %2204 = vmatprep.subr.mxu0 0.0
        %2205 = vmatpush1.msra.mxu0 0.0
        %2206 = vmatprep.subr.mxu0 0.0
        %2207 = vmatpush1.msra.mxu0 0.0
        %2208 = vmatprep.subr.mxu0 0.0
        %2209 = vmatpush1.msra.mxu0 0.0
        %2210 = vmatprep.subr.mxu0 0.0
        %2211 = vmatpush1.msra.mxu0 0.0
        %2212 = vmatprep.subr.mxu0 0.0
        %2213 = vmatpush1.msra.mxu0 0.0
        %2214 = vmatprep.subr.mxu0 0.0
        %2215 = vmatpush1.msra.mxu0 0.0
        %2216 = vmatprep.subr.mxu0 0.0
        %2217 = vmatpush1.msra.mxu0 0.0
        %2218 = vmatprep.subr.mxu0 0.0
        %2219 = vmatpush1.msra.mxu0 0.0
        %2220 = vmatprep.subr.mxu0 0.0
        %2221 = vmatpush1.msra.mxu0 0.0
        %2222 = vmatprep.subr.mxu0 0.0
        %2223 = vmatpush1.msra.mxu0 0.0
        %2224 = vmatprep.subr.mxu0 0.0
        %2225 = vmatpush1.msra.mxu0 0.0
        %2226 = vmatprep.subr.mxu0 0.0
        %2227 = vmatpush1.msra.mxu0 0.0
        %2228 = vmatprep.subr.mxu0 0.0
        %2229 = vmatpush1.msra.mxu0 0.0
        %2230 = vmatprep.subr.mxu0 0.0
        %2231 = vmatpush1.msra.mxu0 0.0
        %2232 = vmatprep.subr.mxu0 0.0
        %2233 = vmatpush1.msra.mxu0 0.0
        %2234 = vmatprep.subr.mxu0 0.0
        %2235 = vmatpush1.msra.mxu0 0.0
        %2236 = vmatprep.subr.mxu0 0.0
        %2237 = vmatpush1.msra.mxu0 0.0
        %2238 = vmatprep.subr.mxu0 0.0
        %2239 = vmatpush1.msra.mxu0 0.0
        %2240 = vmatprep.subr.mxu0 0.0
        %2241 = vmatpush1.msra.mxu0 0.0
        %2242 = vmatprep.subr.mxu0 0.0
        %2243 = vmatpush1.msra.mxu0 0.0
        %2244 = vmatprep.subr.mxu0 0.0
        %2245 = vmatpush1.msra.mxu0 0.0
        %2246 = vmatprep.subr.mxu0 0.0
        %2247 = vmatpush1.msra.mxu0 0.0
        %2248 = vmatprep.subr.mxu0 0.0
        %2249 = vmatpush1.msra.mxu0 0.0
        %2250 = vmatprep.subr.mxu0 0.0
        %2251 = vmatpush1.msra.mxu0 0.0
        %2252 = vmatprep.subr.mxu0 0.0
        %2253 = vmatpush1.msra.mxu0 0.0
        %2254 = vmatprep.subr.mxu0 0.0
        %2255 = vmatpush1.msra.mxu0 0.0
        %2256 = vmatprep.subr.mxu0 0.0
        %2257 = vmatpush1.msra.mxu0 0.0
        %2258 = vmatprep.subr.mxu0 0.0
        %2259 = vmatpush1.msra.mxu0 0.0
        %2260 = vmatprep.subr.mxu0 0.0
        %2261 = vmatpush1.msra.mxu0 0.0
        %2262 = vmatprep.subr.mxu0 0.0
        %2263 = vmatpush1.msra.mxu0 0.0
        %2264 = vmatprep.mubr.f32.mxu0 0.0
        %2265 = vmatmul.mubr.f32.gmra.mrb[0].mxu0 %v2177
        %v2266 = vpop.f32.mrb[0].mxu0
        %v2267 = vadd.f32 0.0, %v2266
        %v2268 = vpop.f32.mrb[0].mxu0
        %2269 = vmatprep.mubr.f32.mxu0 0.0
        %2270 = vmatmul.mubr.f32.gmra.mrb[0].mxu0 %v2180
        %v2271 = vpop.f32.mrb[0].mxu0
        %v2272 = vadd.f32 0.0, %v2271
        %v2273 = vpop.f32.mrb[0].mxu0
        %2274 = vmatprep.mubr.f32.mxu0 0.0
        %2275 = vmatmul.mubr.f32.gmra.mrb[0].mxu0 %v2183
        %v2276 = vpop.f32.mrb[0].mxu0
        %v2277 = vadd.f32 0.0, %v2276
        %v2278 = vpop.f32.mrb[0].mxu0
        %2279 = vmatprep.mubr.f32.mxu0 0.0
        %2280 = vmatmul.mubr.f32.gmra.mrb[0].mxu0 %v2186
        %v2281 = vpop.f32.mrb[0].mxu0
        %v2282 = vadd.f32 0.0, %v2281
        %v2283 = vpop.f32.mrb[0].mxu0
        %2284 = vmatprep.mubr.f32.mxu0 0.0
        %2285 = vmatmul.mubr.f32.gmra.mrb[0].mxu0 %v2189
        %v2286 = vpop.f32.mrb[0].mxu0
        %v2287 = vadd.f32 0.0, %v2286
        %v2288 = vpop.f32.mrb[0].mxu0
        %2289 = vmatprep.mubr.f32.mxu0 0.0
        %2290 = vmatmul.mubr.f32.gmra.mrb[0].mxu0 %v2192
        %v2291 = vpop.f32.mrb[0].mxu0
        %v2292 = vadd.f32 0.0, %v2291
        %v2293 = vpop.f32.mrb[0].mxu0
        %2294 = vmatprep.mubr.f32.mxu0 0.0
        %2295 = vmatmul.mubr.f32.gmra.mrb[0].mxu0 %v2195
        %v2296 = vpop.f32.mrb[0].mxu0
        %v2297 = vadd.f32 0.0, %v2296
        %v2298 = vpop.f32.mrb[0].mxu0
        %2299 = vmatprep.mubr.f32.mxu0 0.0
        %2300 = vmatmul.mubr.f32.gmra.mrb[0].mxu0 %v2198
        %v2301 = vpop.f32.mrb[0].mxu0
        %v2302 = vadd.f32 0.0, %v2301
        %v2303 = vpop.f32.mrb[0].mxu0
        %2304 = vdwg.mxu0
        %v2305 = vadd.f32 %v2158, %v2267
        %v2306 = vadd.f32 %v2159, %v2272
        %v2307 = vadd.f32 %v2160, %v2277
        %v2308 = vadd.f32 %v2161, %v2282
        %v2309 = vadd.f32 %v2162, %v2287
        %v2310 = vadd.f32 %v2163, %v2292
        %v2311 = vadd.f32 %v2164, %v2297
        %v2312 = vadd.f32 %v2165, %v2302
        %v2313 = vld [vmem:[%s1733 + $0x1] sm:$0xff]
        %v2314 = vld [vmem:[%s1733 + $0x11] sm:$0xff]
        %v2315 = vld [vmem:[%s1733 + $0x21] sm:$0xff]
        %v2316 = vld [vmem:[%s1733 + $0x31] sm:$0xff]
        %v2317 = vld [vmem:[%s1733 + $0x41] sm:$0xff]
        %v2318 = vld [vmem:[%s1733 + $0x51] sm:$0xff]
        %v2319 = vld [vmem:[%s1733 + $0x61] sm:$0xff]
        %v2320 = vld [vmem:[%s1733 + $0x71] sm:$0xff]
        %s2321 = scalar_lea.vmem %s3, 32
        %v2322 = vld [vmem:[%s2321] sm:$0xff]
        %v2324 = vsel %vm1705, %v2313, 0
        %v2327 = vsel %vm1705, %v2314, 0
        %v2330 = vsel %vm1705, %v2315, 0
        %v2333 = vsel %vm1705, %v2316, 0
        %v2336 = vsel %vm1705, %v2317, 0
        %v2339 = vsel %vm1705, %v2318, 0
        %v2342 = vsel %vm1705, %v2319, 0
        %v2345 = vsel %vm1705, %v2320, 0
        %2347 = vmatprep.subr.mxu0 0.0
        %2348 = vmatpush1.msra.mxu0 %v2322
        %2349 = vmatprep.subr.mxu0 0.0
        %2350 = vmatpush1.msra.mxu0 0.0
        %2351 = vmatprep.subr.mxu0 0.0
        %2352 = vmatpush1.msra.mxu0 0.0
        %2353 = vmatprep.subr.mxu0 0.0
        %2354 = vmatpush1.msra.mxu0 0.0
        %2355 = vmatprep.subr.mxu0 0.0
        %2356 = vmatpush1.msra.mxu0 0.0
        %2357 = vmatprep.subr.mxu0 0.0
        %2358 = vmatpush1.msra.mxu0 0.0
        %2359 = vmatprep.subr.mxu0 0.0
        %2360 = vmatpush1.msra.mxu0 0.0
        %2361 = vmatprep.subr.mxu0 0.0
        %2362 = vmatpush1.msra.mxu0 0.0
        %2363 = vmatprep.subr.mxu0 0.0
        %2364 = vmatpush1.msra.mxu0 0.0
        %2365 = vmatprep.subr.mxu0 0.0
        %2366 = vmatpush1.msra.mxu0 0.0
        %2367 = vmatprep.subr.mxu0 0.0
        %2368 = vmatpush1.msra.mxu0 0.0
        %2369 = vmatprep.subr.mxu0 0.0
        %2370 = vmatpush1.msra.mxu0 0.0
        %2371 = vmatprep.subr.mxu0 0.0
        %2372 = vmatpush1.msra.mxu0 0.0
        %2373 = vmatprep.subr.mxu0 0.0
        %2374 = vmatpush1.msra.mxu0 0.0
        %2375 = vmatprep.subr.mxu0 0.0
        %2376 = vmatpush1.msra.mxu0 0.0
        %2377 = vmatprep.subr.mxu0 0.0
        %2378 = vmatpush1.msra.mxu0 0.0
        %2379 = vmatprep.subr.mxu0 0.0
        %2380 = vmatpush1.msra.mxu0 0.0
        %2381 = vmatprep.subr.mxu0 0.0
        %2382 = vmatpush1.msra.mxu0 0.0
        %2383 = vmatprep.subr.mxu0 0.0
        %2384 = vmatpush1.msra.mxu0 0.0
        %2385 = vmatprep.subr.mxu0 0.0
        %2386 = vmatpush1.msra.mxu0 0.0
        %2387 = vmatprep.subr.mxu0 0.0
        %2388 = vmatpush1.msra.mxu0 0.0
        %2389 = vmatprep.subr.mxu0 0.0
        %2390 = vmatpush1.msra.mxu0 0.0
        %2391 = vmatprep.subr.mxu0 0.0
        %2392 = vmatpush1.msra.mxu0 0.0
        %2393 = vmatprep.subr.mxu0 0.0
        %2394 = vmatpush1.msra.mxu0 0.0
        %2395 = vmatprep.subr.mxu0 0.0
        %2396 = vmatpush1.msra.mxu0 0.0
        %2397 = vmatprep.subr.mxu0 0.0
        %2398 = vmatpush1.msra.mxu0 0.0
        %2399 = vmatprep.subr.mxu0 0.0
        %2400 = vmatpush1.msra.mxu0 0.0
        %2401 = vmatprep.subr.mxu0 0.0
        %2402 = vmatpush1.msra.mxu0 0.0
        %2403 = vmatprep.subr.mxu0 0.0
        %2404 = vmatpush1.msra.mxu0 0.0
        %2405 = vmatprep.subr.mxu0 0.0
        %2406 = vmatpush1.msra.mxu0 0.0
        %2407 = vmatprep.subr.mxu0 0.0
        %2408 = vmatpush1.msra.mxu0 0.0
        %2409 = vmatprep.subr.mxu0 0.0
        %2410 = vmatpush1.msra.mxu0 0.0
        %2411 = vmatprep.mubr.f32.mxu0 0.0
        %2412 = vmatmul.mubr.f32.gmra.mrb[0].mxu0 %v2324
        %v2413 = vpop.f32.mrb[0].mxu0
        %v2414 = vadd.f32 0.0, %v2413
        %v2415 = vpop.f32.mrb[0].mxu0
        %2416 = vmatprep.mubr.f32.mxu0 0.0
        %2417 = vmatmul.mubr.f32.gmra.mrb[0].mxu0 %v2327
        %v2418 = vpop.f32.mrb[0].mxu0
        %v2419 = vadd.f32 0.0, %v2418
        %v2420 = vpop.f32.mrb[0].mxu0
        %2421 = vmatprep.mubr.f32.mxu0 0.0
        %2422 = vmatmul.mubr.f32.gmra.mrb[0].mxu0 %v2330
        %v2423 = vpop.f32.mrb[0].mxu0
        %v2424 = vadd.f32 0.0, %v2423
        %v2425 = vpop.f32.mrb[0].mxu0
        %2426 = vmatprep.mubr.f32.mxu0 0.0
        %2427 = vmatmul.mubr.f32.gmra.mrb[0].mxu0 %v2333
        %v2428 = vpop.f32.mrb[0].mxu0
        %v2429 = vadd.f32 0.0, %v2428
        %v2430 = vpop.f32.mrb[0].mxu0
        %2431 = vmatprep.mubr.f32.mxu0 0.0
        %2432 = vmatmul.mubr.f32.gmra.mrb[0].mxu0 %v2336
        %v2433 = vpop.f32.mrb[0].mxu0
        %v2434 = vadd.f32 0.0, %v2433
        %v2435 = vpop.f32.mrb[0].mxu0
        %2436 = vmatprep.mubr.f32.mxu0 0.0
        %2437 = vmatmul.mubr.f32.gmra.mrb[0].mxu0 %v2339
        %v2438 = vpop.f32.mrb[0].mxu0
        %v2439 = vadd.f32 0.0, %v2438
        %v2440 = vpop.f32.mrb[0].mxu0
        %2441 = vmatprep.mubr.f32.mxu0 0.0
        %2442 = vmatmul.mubr.f32.gmra.mrb[0].mxu0 %v2342
        %v2443 = vpop.f32.mrb[0].mxu0
        %v2444 = vadd.f32 0.0, %v2443
        %v2445 = vpop.f32.mrb[0].mxu0
        %2446 = vmatprep.mubr.f32.mxu0 0.0
        %2447 = vmatmul.mubr.f32.gmra.mrb[0].mxu0 %v2345
        %v2448 = vpop.f32.mrb[0].mxu0
        %v2449 = vadd.f32 0.0, %v2448
        %v2450 = vpop.f32.mrb[0].mxu0
        %2451 = vdwg.mxu0
        %v2452 = vadd.f32 %v2305, %v2414
        %v2453 = vadd.f32 %v2306, %v2419
        %v2454 = vadd.f32 %v2307, %v2424
        %v2455 = vadd.f32 %v2308, %v2429
        %v2456 = vadd.f32 %v2309, %v2434
        %v2457 = vadd.f32 %v2310, %v2439
        %v2458 = vadd.f32 %v2311, %v2444
        %v2459 = vadd.f32 %v2312, %v2449
        %v2460 = vld [vmem:[%s1733 + $0x2] sm:$0xff]
        %v2461 = vld [vmem:[%s1733 + $0x12] sm:$0xff]
        %v2462 = vld [vmem:[%s1733 + $0x22] sm:$0xff]
        %v2463 = vld [vmem:[%s1733 + $0x32] sm:$0xff]
        %v2464 = vld [vmem:[%s1733 + $0x42] sm:$0xff]
        %v2465 = vld [vmem:[%s1733 + $0x52] sm:$0xff]
        %v2466 = vld [vmem:[%s1733 + $0x62] sm:$0xff]
        %v2467 = vld [vmem:[%s1733 + $0x72] sm:$0xff]
        %s2468 = scalar_lea.vmem %s3, 40
        %v2469 = vld [vmem:[%s2468] sm:$0xff]
        %v2471 = vsel %vm1705, %v2460, 0
        %v2474 = vsel %vm1705, %v2461, 0
        %v2477 = vsel %vm1705, %v2462, 0
        %v2480 = vsel %vm1705, %v2463, 0
        %v2483 = vsel %vm1705, %v2464, 0
        %v2486 = vsel %vm1705, %v2465, 0
        %v2489 = vsel %vm1705, %v2466, 0
        %v2492 = vsel %vm1705, %v2467, 0
        %2494 = vmatprep.subr.mxu0 0.0
        %2495 = vmatpush1.msra.mxu0 %v2469
        %2496 = vmatprep.subr.mxu0 0.0
        %2497 = vmatpush1.msra.mxu0 0.0
        %2498 = vmatprep.subr.mxu0 0.0
        %2499 = vmatpush1.msra.mxu0 0.0
        %2500 = vmatprep.subr.mxu0 0.0
        %2501 = vmatpush1.msra.mxu0 0.0
        %2502 = vmatprep.subr.mxu0 0.0
        %2503 = vmatpush1.msra.mxu0 0.0
        %2504 = vmatprep.subr.mxu0 0.0
        %2505 = vmatpush1.msra.mxu0 0.0
        %2506 = vmatprep.subr.mxu0 0.0
        %2507 = vmatpush1.msra.mxu0 0.0
        %2508 = vmatprep.subr.mxu0 0.0
        %2509 = vmatpush1.msra.mxu0 0.0
        %2510 = vmatprep.subr.mxu0 0.0
        %2511 = vmatpush1.msra.mxu0 0.0
        %2512 = vmatprep.subr.mxu0 0.0
        %2513 = vmatpush1.msra.mxu0 0.0
        %2514 = vmatprep.subr.mxu0 0.0
        %2515 = vmatpush1.msra.mxu0 0.0
        %2516 = vmatprep.subr.mxu0 0.0
        %2517 = vmatpush1.msra.mxu0 0.0
        %2518 = vmatprep.subr.mxu0 0.0
        %2519 = vmatpush1.msra.mxu0 0.0
        %2520 = vmatprep.subr.mxu0 0.0
        %2521 = vmatpush1.msra.mxu0 0.0
        %2522 = vmatprep.subr.mxu0 0.0
        %2523 = vmatpush1.msra.mxu0 0.0
        %2524 = vmatprep.subr.mxu0 0.0
        %2525 = vmatpush1.msra.mxu0 0.0
        %2526 = vmatprep.subr.mxu0 0.0
        %2527 = vmatpush1.msra.mxu0 0.0
        %2528 = vmatprep.subr.mxu0 0.0
        %2529 = vmatpush1.msra.mxu0 0.0
        %2530 = vmatprep.subr.mxu0 0.0
        %2531 = vmatpush1.msra.mxu0 0.0
        %2532 = vmatprep.subr.mxu0 0.0
        %2533 = vmatpush1.msra.mxu0 0.0
        %2534 = vmatprep.subr.mxu0 0.0
        %2535 = vmatpush1.msra.mxu0 0.0
        %2536 = vmatprep.subr.mxu0 0.0
        %2537 = vmatpush1.msra.mxu0 0.0
        %2538 = vmatprep.subr.mxu0 0.0
        %2539 = vmatpush1.msra.mxu0 0.0
        %2540 = vmatprep.subr.mxu0 0.0
        %2541 = vmatpush1.msra.mxu0 0.0
        %2542 = vmatprep.subr.mxu0 0.0
        %2543 = vmatpush1.msra.mxu0 0.0
        %2544 = vmatprep.subr.mxu0 0.0
        %2545 = vmatpush1.msra.mxu0 0.0
        %2546 = vmatprep.subr.mxu0 0.0
        %2547 = vmatpush1.msra.mxu0 0.0
        %2548 = vmatprep.subr.mxu0 0.0
        %2549 = vmatpush1.msra.mxu0 0.0
        %2550 = vmatprep.subr.mxu0 0.0
        %2551 = vmatpush1.msra.mxu0 0.0
        %2552 = vmatprep.subr.mxu0 0.0
        %2553 = vmatpush1.msra.mxu0 0.0
        %2554 = vmatprep.subr.mxu0 0.0
        %2555 = vmatpush1.msra.mxu0 0.0
        %2556 = vmatprep.subr.mxu0 0.0
        %2557 = vmatpush1.msra.mxu0 0.0
        %2558 = vmatprep.mubr.f32.mxu0 0.0
        %2559 = vmatmul.mubr.f32.gmra.mrb[0].mxu0 %v2471
        %v2560 = vpop.f32.mrb[0].mxu0
        %v2561 = vadd.f32 0.0, %v2560
        %v2562 = vpop.f32.mrb[0].mxu0
        %2563 = vmatprep.mubr.f32.mxu0 0.0
        %2564 = vmatmul.mubr.f32.gmra.mrb[0].mxu0 %v2474
        %v2565 = vpop.f32.mrb[0].mxu0
        %v2566 = vadd.f32 0.0, %v2565
        %v2567 = vpop.f32.mrb[0].mxu0
        %2568 = vmatprep.mubr.f32.mxu0 0.0
        %2569 = vmatmul.mubr.f32.gmra.mrb[0].mxu0 %v2477
        %v2570 = vpop.f32.mrb[0].mxu0
        %v2571 = vadd.f32 0.0, %v2570
        %v2572 = vpop.f32.mrb[0].mxu0
        %2573 = vmatprep.mubr.f32.mxu0 0.0
        %2574 = vmatmul.mubr.f32.gmra.mrb[0].mxu0 %v2480
        %v2575 = vpop.f32.mrb[0].mxu0
        %v2576 = vadd.f32 0.0, %v2575
        %v2577 = vpop.f32.mrb[0].mxu0
        %2578 = vmatprep.mubr.f32.mxu0 0.0
        %2579 = vmatmul.mubr.f32.gmra.mrb[0].mxu0 %v2483
        %v2580 = vpop.f32.mrb[0].mxu0
        %v2581 = vadd.f32 0.0, %v2580
        %v2582 = vpop.f32.mrb[0].mxu0
        %2583 = vmatprep.mubr.f32.mxu0 0.0
        %2584 = vmatmul.mubr.f32.gmra.mrb[0].mxu0 %v2486
        %v2585 = vpop.f32.mrb[0].mxu0
        %v2586 = vadd.f32 0.0, %v2585
        %v2587 = vpop.f32.mrb[0].mxu0
        %2588 = vmatprep.mubr.f32.mxu0 0.0
        %2589 = vmatmul.mubr.f32.gmra.mrb[0].mxu0 %v2489
        %v2590 = vpop.f32.mrb[0].mxu0
        %v2591 = vadd.f32 0.0, %v2590
        %v2592 = vpop.f32.mrb[0].mxu0
        %2593 = vmatprep.mubr.f32.mxu0 0.0
        %2594 = vmatmul.mubr.f32.gmra.mrb[0].mxu0 %v2492
        %v2595 = vpop.f32.mrb[0].mxu0
        %v2596 = vadd.f32 0.0, %v2595
        %v2597 = vpop.f32.mrb[0].mxu0
        %2598 = vdwg.mxu0
        %v2599 = vadd.f32 %v2452, %v2561
        %v2600 = vadd.f32 %v2453, %v2566
        %v2601 = vadd.f32 %v2454, %v2571
        %v2602 = vadd.f32 %v2455, %v2576
        %v2603 = vadd.f32 %v2456, %v2581
        %v2604 = vadd.f32 %v2457, %v2586
        %v2605 = vadd.f32 %v2458, %v2591
        %v2606 = vadd.f32 %v2459, %v2596
        %s2607 = scalar_lea.vmem [#allocation3], 32
        %v2608 = vld [vmem:[%s2607] sm:$0xff]
        %v2609 = vld [vmem:[%s2607 + $0x10] sm:$0xff]
        %v2610 = vld [vmem:[%s2607 + $0x20] sm:$0xff]
        %v2611 = vld [vmem:[%s2607 + $0x30] sm:$0xff]
        %v2612 = vld [vmem:[%s2607 + $0x40] sm:$0xff]
        %v2613 = vld [vmem:[%s2607 + $0x50] sm:$0xff]
        %v2614 = vld [vmem:[%s2607 + $0x60] sm:$0xff]
        %v2615 = vld [vmem:[%s2607 + $0x70] sm:$0xff]
        %s2616 = scalar_lea.vmem %s3, 48
        %v2617 = vld [vmem:[%s2616] sm:$0xff]
        %v2619 = vsel %vm1705, %v2608, 0
        %v2622 = vsel %vm1705, %v2609, 0
        %v2625 = vsel %vm1705, %v2610, 0
        %v2628 = vsel %vm1705, %v2611, 0
        %v2631 = vsel %vm1705, %v2612, 0
        %v2634 = vsel %vm1705, %v2613, 0
        %v2637 = vsel %vm1705, %v2614, 0
        %v2640 = vsel %vm1705, %v2615, 0
        %2642 = vmatprep.subr.mxu0 0.0
        %2643 = vmatpush1.msra.mxu0 %v2617
        %2644 = vmatprep.subr.mxu0 0.0
        %2645 = vmatpush1.msra.mxu0 0.0
        %2646 = vmatprep.subr.mxu0 0.0
        %2647 = vmatpush1.msra.mxu0 0.0
        %2648 = vmatprep.subr.mxu0 0.0
        %2649 = vmatpush1.msra.mxu0 0.0
        %2650 = vmatprep.subr.mxu0 0.0
        %2651 = vmatpush1.msra.mxu0 0.0
        %2652 = vmatprep.subr.mxu0 0.0
        %2653 = vmatpush1.msra.mxu0 0.0
        %2654 = vmatprep.subr.mxu0 0.0
        %2655 = vmatpush1.msra.mxu0 0.0
        %2656 = vmatprep.subr.mxu0 0.0
        %2657 = vmatpush1.msra.mxu0 0.0
        %2658 = vmatprep.subr.mxu0 0.0
        %2659 = vmatpush1.msra.mxu0 0.0
        %2660 = vmatprep.subr.mxu0 0.0
        %2661 = vmatpush1.msra.mxu0 0.0
        %2662 = vmatprep.subr.mxu0 0.0
        %2663 = vmatpush1.msra.mxu0 0.0
        %2664 = vmatprep.subr.mxu0 0.0
        %2665 = vmatpush1.msra.mxu0 0.0
        %2666 = vmatprep.subr.mxu0 0.0
        %2667 = vmatpush1.msra.mxu0 0.0
        %2668 = vmatprep.subr.mxu0 0.0
        %2669 = vmatpush1.msra.mxu0 0.0
        %2670 = vmatprep.subr.mxu0 0.0
        %2671 = vmatpush1.msra.mxu0 0.0
        %2672 = vmatprep.subr.mxu0 0.0
        %2673 = vmatpush1.msra.mxu0 0.0
        %2674 = vmatprep.subr.mxu0 0.0
        %2675 = vmatpush1.msra.mxu0 0.0
        %2676 = vmatprep.subr.mxu0 0.0
        %2677 = vmatpush1.msra.mxu0 0.0
        %2678 = vmatprep.subr.mxu0 0.0
        %2679 = vmatpush1.msra.mxu0 0.0
        %2680 = vmatprep.subr.mxu0 0.0
        %2681 = vmatpush1.msra.mxu0 0.0
        %2682 = vmatprep.subr.mxu0 0.0
        %2683 = vmatpush1.msra.mxu0 0.0
        %2684 = vmatprep.subr.mxu0 0.0
        %2685 = vmatpush1.msra.mxu0 0.0
        %2686 = vmatprep.subr.mxu0 0.0
        %2687 = vmatpush1.msra.mxu0 0.0
        %2688 = vmatprep.subr.mxu0 0.0
        %2689 = vmatpush1.msra.mxu0 0.0
        %2690 = vmatprep.subr.mxu0 0.0
        %2691 = vmatpush1.msra.mxu0 0.0
        %2692 = vmatprep.subr.mxu0 0.0
        %2693 = vmatpush1.msra.mxu0 0.0
        %2694 = vmatprep.subr.mxu0 0.0
        %2695 = vmatpush1.msra.mxu0 0.0
        %2696 = vmatprep.subr.mxu0 0.0
        %2697 = vmatpush1.msra.mxu0 0.0
        %2698 = vmatprep.subr.mxu0 0.0
        %2699 = vmatpush1.msra.mxu0 0.0
        %2700 = vmatprep.subr.mxu0 0.0
        %2701 = vmatpush1.msra.mxu0 0.0
        %2702 = vmatprep.subr.mxu0 0.0
        %2703 = vmatpush1.msra.mxu0 0.0
        %2704 = vmatprep.subr.mxu0 0.0
        %2705 = vmatpush1.msra.mxu0 0.0
        %2706 = vmatprep.mubr.f32.mxu0 0.0
        %2707 = vmatmul.mubr.f32.gmra.mrb[0].mxu0 %v2619
        %v2708 = vpop.f32.mrb[0].mxu0
        %v2709 = vadd.f32 0.0, %v2708
        %v2710 = vpop.f32.mrb[0].mxu0
        %2711 = vmatprep.mubr.f32.mxu0 0.0
        %2712 = vmatmul.mubr.f32.gmra.mrb[0].mxu0 %v2622
        %v2713 = vpop.f32.mrb[0].mxu0
        %v2714 = vadd.f32 0.0, %v2713
        %v2715 = vpop.f32.mrb[0].mxu0
        %2716 = vmatprep.mubr.f32.mxu0 0.0
        %2717 = vmatmul.mubr.f32.gmra.mrb[0].mxu0 %v2625
        %v2718 = vpop.f32.mrb[0].mxu0
        %v2719 = vadd.f32 0.0, %v2718
        %v2720 = vpop.f32.mrb[0].mxu0
        %2721 = vmatprep.mubr.f32.mxu0 0.0
        %2722 = vmatmul.mubr.f32.gmra.mrb[0].mxu0 %v2628
        %v2723 = vpop.f32.mrb[0].mxu0
        %v2724 = vadd.f32 0.0, %v2723
        %v2725 = vpop.f32.mrb[0].mxu0
        %2726 = vmatprep.mubr.f32.mxu0 0.0
        %2727 = vmatmul.mubr.f32.gmra.mrb[0].mxu0 %v2631
        %v2728 = vpop.f32.mrb[0].mxu0
        %v2729 = vadd.f32 0.0, %v2728
        %v2730 = vpop.f32.mrb[0].mxu0
        %2731 = vmatprep.mubr.f32.mxu0 0.0
        %2732 = vmatmul.mubr.f32.gmra.mrb[0].mxu0 %v2634
        %v2733 = vpop.f32.mrb[0].mxu0
        %v2734 = vadd.f32 0.0, %v2733
        %v2735 = vpop.f32.mrb[0].mxu0
        %2736 = vmatprep.mubr.f32.mxu0 0.0
        %2737 = vmatmul.mubr.f32.gmra.mrb[0].mxu0 %v2637
        %v2738 = vpop.f32.mrb[0].mxu0
        %v2739 = vadd.f32 0.0, %v2738
        %v2740 = vpop.f32.mrb[0].mxu0
        %2741 = vmatprep.mubr.f32.mxu0 0.0
        %2742 = vmatmul.mubr.f32.gmra.mrb[0].mxu0 %v2640
        %v2743 = vpop.f32.mrb[0].mxu0
        %v2744 = vadd.f32 0.0, %v2743
        %v2745 = vpop.f32.mrb[0].mxu0
        %2746 = vdwg.mxu0
        %v2747 = vadd.f32 %v2599, %v2709
        %v2748 = vadd.f32 %v2600, %v2714
        %v2749 = vadd.f32 %v2601, %v2719
        %v2750 = vadd.f32 %v2602, %v2724
        %v2751 = vadd.f32 %v2603, %v2729
        %v2752 = vadd.f32 %v2604, %v2734
        %v2753 = vadd.f32 %v2605, %v2739
        %v2754 = vadd.f32 %v2606, %v2744
        %v2755 = vld [vmem:[%s2607 + $0x1] sm:$0xff]
        %v2756 = vld [vmem:[%s2607 + $0x11] sm:$0xff]
        %v2757 = vld [vmem:[%s2607 + $0x21] sm:$0xff]
        %v2758 = vld [vmem:[%s2607 + $0x31] sm:$0xff]
        %v2759 = vld [vmem:[%s2607 + $0x41] sm:$0xff]
        %v2760 = vld [vmem:[%s2607 + $0x51] sm:$0xff]
        %v2761 = vld [vmem:[%s2607 + $0x61] sm:$0xff]
        %v2762 = vld [vmem:[%s2607 + $0x71] sm:$0xff]
        %s2763 = scalar_lea.vmem %s3, 56
        %v2764 = vld [vmem:[%s2763] sm:$0xff]
        %v2766 = vsel %vm1705, %v2755, 0
        %v2769 = vsel %vm1705, %v2756, 0
        %v2772 = vsel %vm1705, %v2757, 0
        %v2775 = vsel %vm1705, %v2758, 0
        %v2778 = vsel %vm1705, %v2759, 0
        %v2781 = vsel %vm1705, %v2760, 0
        %v2784 = vsel %vm1705, %v2761, 0
        %v2787 = vsel %vm1705, %v2762, 0
        %2789 = vmatprep.subr.mxu0 0.0
        %2790 = vmatpush1.msra.mxu0 %v2764
        %2791 = vmatprep.subr.mxu0 0.0
        %2792 = vmatpush1.msra.mxu0 0.0
        %2793 = vmatprep.subr.mxu0 0.0
        %2794 = vmatpush1.msra.mxu0 0.0
        %2795 = vmatprep.subr.mxu0 0.0
        %2796 = vmatpush1.msra.mxu0 0.0
        %2797 = vmatprep.subr.mxu0 0.0
        %2798 = vmatpush1.msra.mxu0 0.0
        %2799 = vmatprep.subr.mxu0 0.0
        %2800 = vmatpush1.msra.mxu0 0.0
        %2801 = vmatprep.subr.mxu0 0.0
        %2802 = vmatpush1.msra.mxu0 0.0
        %2803 = vmatprep.subr.mxu0 0.0
        %2804 = vmatpush1.msra.mxu0 0.0
        %2805 = vmatprep.subr.mxu0 0.0
        %2806 = vmatpush1.msra.mxu0 0.0
        %2807 = vmatprep.subr.mxu0 0.0
        %2808 = vmatpush1.msra.mxu0 0.0
        %2809 = vmatprep.subr.mxu0 0.0
        %2810 = vmatpush1.msra.mxu0 0.0
        %2811 = vmatprep.subr.mxu0 0.0
        %2812 = vmatpush1.msra.mxu0 0.0
        %2813 = vmatprep.subr.mxu0 0.0
        %2814 = vmatpush1.msra.mxu0 0.0
        %2815 = vmatprep.subr.mxu0 0.0
        %2816 = vmatpush1.msra.mxu0 0.0
        %2817 = vmatprep.subr.mxu0 0.0
        %2818 = vmatpush1.msra.mxu0 0.0
        %2819 = vmatprep.subr.mxu0 0.0
        %2820 = vmatpush1.msra.mxu0 0.0
        %2821 = vmatprep.subr.mxu0 0.0
        %2822 = vmatpush1.msra.mxu0 0.0
        %2823 = vmatprep.subr.mxu0 0.0
        %2824 = vmatpush1.msra.mxu0 0.0
        %2825 = vmatprep.subr.mxu0 0.0
        %2826 = vmatpush1.msra.mxu0 0.0
        %2827 = vmatprep.subr.mxu0 0.0
        %2828 = vmatpush1.msra.mxu0 0.0
        %2829 = vmatprep.subr.mxu0 0.0
        %2830 = vmatpush1.msra.mxu0 0.0
        %2831 = vmatprep.subr.mxu0 0.0
        %2832 = vmatpush1.msra.mxu0 0.0
        %2833 = vmatprep.subr.mxu0 0.0
        %2834 = vmatpush1.msra.mxu0 0.0
        %2835 = vmatprep.subr.mxu0 0.0
        %2836 = vmatpush1.msra.mxu0 0.0
        %2837 = vmatprep.subr.mxu0 0.0
        %2838 = vmatpush1.msra.mxu0 0.0
        %2839 = vmatprep.subr.mxu0 0.0
        %2840 = vmatpush1.msra.mxu0 0.0
        %2841 = vmatprep.subr.mxu0 0.0
        %2842 = vmatpush1.msra.mxu0 0.0
        %2843 = vmatprep.subr.mxu0 0.0
        %2844 = vmatpush1.msra.mxu0 0.0
        %2845 = vmatprep.subr.mxu0 0.0
        %2846 = vmatpush1.msra.mxu0 0.0
        %2847 = vmatprep.subr.mxu0 0.0
        %2848 = vmatpush1.msra.mxu0 0.0
        %2849 = vmatprep.subr.mxu0 0.0
        %2850 = vmatpush1.msra.mxu0 0.0
        %2851 = vmatprep.subr.mxu0 0.0
        %2852 = vmatpush1.msra.mxu0 0.0
        %2853 = vmatprep.mubr.f32.mxu0 0.0
        %2854 = vmatmul.mubr.f32.gmra.mrb[0].mxu0 %v2766
        %v2855 = vpop.f32.mrb[0].mxu0
        %v2856 = vadd.f32 0.0, %v2855
        %v2857 = vpop.f32.mrb[0].mxu0
        %2858 = vmatprep.mubr.f32.mxu0 0.0
        %2859 = vmatmul.mubr.f32.gmra.mrb[0].mxu0 %v2769
        %v2860 = vpop.f32.mrb[0].mxu0
        %v2861 = vadd.f32 0.0, %v2860
        %v2862 = vpop.f32.mrb[0].mxu0
        %2863 = vmatprep.mubr.f32.mxu0 0.0
        %2864 = vmatmul.mubr.f32.gmra.mrb[0].mxu0 %v2772
        %v2865 = vpop.f32.mrb[0].mxu0
        %v2866 = vadd.f32 0.0, %v2865
        %v2867 = vpop.f32.mrb[0].mxu0
        %2868 = vmatprep.mubr.f32.mxu0 0.0
        %2869 = vmatmul.mubr.f32.gmra.mrb[0].mxu0 %v2775
        %v2870 = vpop.f32.mrb[0].mxu0
        %v2871 = vadd.f32 0.0, %v2870
        %v2872 = vpop.f32.mrb[0].mxu0
        %2873 = vmatprep.mubr.f32.mxu0 0.0
        %2874 = vmatmul.mubr.f32.gmra.mrb[0].mxu0 %v2778
        %v2875 = vpop.f32.mrb[0].mxu0
        %v2876 = vadd.f32 0.0, %v2875
        %v2877 = vpop.f32.mrb[0].mxu0
        %2878 = vmatprep.mubr.f32.mxu0 0.0
        %2879 = vmatmul.mubr.f32.gmra.mrb[0].mxu0 %v2781
        %v2880 = vpop.f32.mrb[0].mxu0
        %v2881 = vadd.f32 0.0, %v2880
        %v2882 = vpop.f32.mrb[0].mxu0
        %2883 = vmatprep.mubr.f32.mxu0 0.0
        %2884 = vmatmul.mubr.f32.gmra.mrb[0].mxu0 %v2784
        %v2885 = vpop.f32.mrb[0].mxu0
        %v2886 = vadd.f32 0.0, %v2885
        %v2887 = vpop.f32.mrb[0].mxu0
        %2888 = vmatprep.mubr.f32.mxu0 0.0
        %2889 = vmatmul.mubr.f32.gmra.mrb[0].mxu0 %v2787
        %v2890 = vpop.f32.mrb[0].mxu0
        %v2891 = vadd.f32 0.0, %v2890
        %v2892 = vpop.f32.mrb[0].mxu0
        %2893 = vdwg.mxu0
        %v2894 = vadd.f32 %v2747, %v2856
        %v2895 = vadd.f32 %v2748, %v2861
        %v2896 = vadd.f32 %v2749, %v2866
        %v2897 = vadd.f32 %v2750, %v2871
        %v2898 = vadd.f32 %v2751, %v2876
        %v2899 = vadd.f32 %v2752, %v2881
        %v2900 = vadd.f32 %v2753, %v2886
        %v2901 = vadd.f32 %v2754, %v2891
        %v2902 = vld [vmem:[%s2607 + $0x2] sm:$0xff]
        %v2903 = vld [vmem:[%s2607 + $0x12] sm:$0xff]
        %v2904 = vld [vmem:[%s2607 + $0x22] sm:$0xff]
        %v2905 = vld [vmem:[%s2607 + $0x32] sm:$0xff]
        %v2906 = vld [vmem:[%s2607 + $0x42] sm:$0xff]
        %v2907 = vld [vmem:[%s2607 + $0x52] sm:$0xff]
        %v2908 = vld [vmem:[%s2607 + $0x62] sm:$0xff]
        %v2909 = vld [vmem:[%s2607 + $0x72] sm:$0xff]
        %s2910 = scalar_lea.vmem %s3, 64
        %v2911 = vld [vmem:[%s2910] sm:$0xff]
        %v2913 = vsel %vm1705, %v2902, 0
        %v2916 = vsel %vm1705, %v2903, 0
        %v2919 = vsel %vm1705, %v2904, 0
        %v2922 = vsel %vm1705, %v2905, 0
        %v2925 = vsel %vm1705, %v2906, 0
        %v2928 = vsel %vm1705, %v2907, 0
        %v2931 = vsel %vm1705, %v2908, 0
        %v2934 = vsel %vm1705, %v2909, 0
        %2936 = vmatprep.subr.mxu0 0.0
        %2937 = vmatpush1.msra.mxu0 %v2911
        %2938 = vmatprep.subr.mxu0 0.0
        %2939 = vmatpush1.msra.mxu0 0.0
        %2940 = vmatprep.subr.mxu0 0.0
        %2941 = vmatpush1.msra.mxu0 0.0
        %2942 = vmatprep.subr.mxu0 0.0
        %2943 = vmatpush1.msra.mxu0 0.0
        %2944 = vmatprep.subr.mxu0 0.0
        %2945 = vmatpush1.msra.mxu0 0.0
        %2946 = vmatprep.subr.mxu0 0.0
        %2947 = vmatpush1.msra.mxu0 0.0
        %2948 = vmatprep.subr.mxu0 0.0
        %2949 = vmatpush1.msra.mxu0 0.0
        %2950 = vmatprep.subr.mxu0 0.0
        %2951 = vmatpush1.msra.mxu0 0.0
        %2952 = vmatprep.subr.mxu0 0.0
        %2953 = vmatpush1.msra.mxu0 0.0
        %2954 = vmatprep.subr.mxu0 0.0
        %2955 = vmatpush1.msra.mxu0 0.0
        %2956 = vmatprep.subr.mxu0 0.0
        %2957 = vmatpush1.msra.mxu0 0.0
        %2958 = vmatprep.subr.mxu0 0.0
        %2959 = vmatpush1.msra.mxu0 0.0
        %2960 = vmatprep.subr.mxu0 0.0
        %2961 = vmatpush1.msra.mxu0 0.0
        %2962 = vmatprep.subr.mxu0 0.0
        %2963 = vmatpush1.msra.mxu0 0.0
        %2964 = vmatprep.subr.mxu0 0.0
        %2965 = vmatpush1.msra.mxu0 0.0
        %2966 = vmatprep.subr.mxu0 0.0
        %2967 = vmatpush1.msra.mxu0 0.0
        %2968 = vmatprep.subr.mxu0 0.0
        %2969 = vmatpush1.msra.mxu0 0.0
        %2970 = vmatprep.subr.mxu0 0.0
        %2971 = vmatpush1.msra.mxu0 0.0
        %2972 = vmatprep.subr.mxu0 0.0
        %2973 = vmatpush1.msra.mxu0 0.0
        %2974 = vmatprep.subr.mxu0 0.0
        %2975 = vmatpush1.msra.mxu0 0.0
        %2976 = vmatprep.subr.mxu0 0.0
        %2977 = vmatpush1.msra.mxu0 0.0
        %2978 = vmatprep.subr.mxu0 0.0
        %2979 = vmatpush1.msra.mxu0 0.0
        %2980 = vmatprep.subr.mxu0 0.0
        %2981 = vmatpush1.msra.mxu0 0.0
        %2982 = vmatprep.subr.mxu0 0.0
        %2983 = vmatpush1.msra.mxu0 0.0
        %2984 = vmatprep.subr.mxu0 0.0
        %2985 = vmatpush1.msra.mxu0 0.0
        %2986 = vmatprep.subr.mxu0 0.0
        %2987 = vmatpush1.msra.mxu0 0.0
        %2988 = vmatprep.subr.mxu0 0.0
        %2989 = vmatpush1.msra.mxu0 0.0
        %2990 = vmatprep.subr.mxu0 0.0
        %2991 = vmatpush1.msra.mxu0 0.0
        %2992 = vmatprep.subr.mxu0 0.0
        %2993 = vmatpush1.msra.mxu0 0.0
        %2994 = vmatprep.subr.mxu0 0.0
        %2995 = vmatpush1.msra.mxu0 0.0
        %2996 = vmatprep.subr.mxu0 0.0
        %2997 = vmatpush1.msra.mxu0 0.0
        %2998 = vmatprep.subr.mxu0 0.0
        %2999 = vmatpush1.msra.mxu0 0.0
        %3000 = vmatprep.mubr.f32.mxu0 0.0
        %3001 = vmatmul.mubr.f32.gmra.mrb[0].mxu0 %v2913
        %v3002 = vpop.f32.mrb[0].mxu0
        %v3003 = vadd.f32 0.0, %v3002
        %v3004 = vpop.f32.mrb[0].mxu0
        %3005 = vmatprep.mubr.f32.mxu0 0.0
        %3006 = vmatmul.mubr.f32.gmra.mrb[0].mxu0 %v2916
        %v3007 = vpop.f32.mrb[0].mxu0
        %v3008 = vadd.f32 0.0, %v3007
        %v3009 = vpop.f32.mrb[0].mxu0
        %3010 = vmatprep.mubr.f32.mxu0 0.0
        %3011 = vmatmul.mubr.f32.gmra.mrb[0].mxu0 %v2919
        %v3012 = vpop.f32.mrb[0].mxu0
        %v3013 = vadd.f32 0.0, %v3012
        %v3014 = vpop.f32.mrb[0].mxu0
        %3015 = vmatprep.mubr.f32.mxu0 0.0
        %3016 = vmatmul.mubr.f32.gmra.mrb[0].mxu0 %v2922
        %v3017 = vpop.f32.mrb[0].mxu0
        %v3018 = vadd.f32 0.0, %v3017
        %v3019 = vpop.f32.mrb[0].mxu0
        %3020 = vmatprep.mubr.f32.mxu0 0.0
        %3021 = vmatmul.mubr.f32.gmra.mrb[0].mxu0 %v2925
        %v3022 = vpop.f32.mrb[0].mxu0
        %v3023 = vadd.f32 0.0, %v3022
        %v3024 = vpop.f32.mrb[0].mxu0
        %3025 = vmatprep.mubr.f32.mxu0 0.0
        %3026 = vmatmul.mubr.f32.gmra.mrb[0].mxu0 %v2928
        %v3027 = vpop.f32.mrb[0].mxu0
        %v3028 = vadd.f32 0.0, %v3027
        %v3029 = vpop.f32.mrb[0].mxu0
        %3030 = vmatprep.mubr.f32.mxu0 0.0
        %3031 = vmatmul.mubr.f32.gmra.mrb[0].mxu0 %v2931
        %v3032 = vpop.f32.mrb[0].mxu0
        %v3033 = vadd.f32 0.0, %v3032
        %v3034 = vpop.f32.mrb[0].mxu0
        %3035 = vmatprep.mubr.f32.mxu0 0.0
        %3036 = vmatmul.mubr.f32.gmra.mrb[0].mxu0 %v2934
        %v3037 = vpop.f32.mrb[0].mxu0
        %v3038 = vadd.f32 0.0, %v3037
        %v3039 = vpop.f32.mrb[0].mxu0
        %3040 = vdwg.mxu0
        %v3041 = vadd.f32 %v2894, %v3003
        %v3042 = vadd.f32 %v2895, %v3008
        %v3043 = vadd.f32 %v2896, %v3013
        %v3044 = vadd.f32 %v2897, %v3018
        %v3045 = vadd.f32 %v2898, %v3023
        %v3046 = vadd.f32 %v2899, %v3028
        %v3047 = vadd.f32 %v2900, %v3033
        %v3048 = vadd.f32 %v2901, %v3038
        %v3049 = vld [vmem:[%s4] sm:$0x1]
        %v3051 = vlaneseq
        %v3052 = vshrl.u32 %v3051, 7
        %v3053 = vsub.s32 0, %v3052
        %v3054 = vrot.slane %v3049, %v3053
        %v3056 = vadd.f32 %v3041, %v3054
        %v3057 = vadd.f32 %v3042, %v3054
        %v3058 = vadd.f32 %v3043, %v3054
        %v3059 = vadd.f32 %v3044, %v3054
        %v3060 = vadd.f32 %v3045, %v3054
        %v3061 = vadd.f32 %v3046, %v3054
        %v3062 = vadd.f32 %v3047, %v3054
        %v3063 = vadd.f32 %v3048, %v3054
        %v3064 = vmax.f32 %v3056, 0.0
        %v3065 = vmax.f32 %v3057, 0.0
        %v3066 = vmax.f32 %v3058, 0.0
        %v3067 = vmax.f32 %v3059, 0.0
        %v3068 = vmax.f32 %v3060, 0.0
        %v3069 = vmax.f32 %v3061, 0.0
        %v3070 = vmax.f32 %v3062, 0.0
        %v3071 = vmax.f32 %v3063, 0.0
        %3072 = vst.msk [vmem:[%s217] sm:$0xff] %vm1705, %v3064
        %3073 = vst.msk [vmem:[%s217 + $0x8] sm:$0xff] %vm1705, %v3065
        %3074 = vst.msk [vmem:[%s217 + $0x10] sm:$0xff] %vm1705, %v3066
        %3075 = vst.msk [vmem:[%s217 + $0x18] sm:$0xff] %vm1705, %v3067
        %3076 = vst.msk [vmem:[%s217 + $0x20] sm:$0xff] %vm1705, %v3068
        %3077 = vst.msk [vmem:[%s217 + $0x28] sm:$0xff] %vm1705, %v3069
        %3078 = vst.msk [vmem:[%s217 + $0x30] sm:$0xff] %vm1705, %v3070
        %3079 = vst.msk [vmem:[%s217 + $0x38] sm:$0xff] %vm1705, %v3071
        %s3080 = sand.u32 %s137, 1
        %s3081 = scalar_lea.sflag [#allocation5], %s3080
        %s3082 = sand.u32 %s137, 1
        %s3083 = smul.addr %s3082, 64
        %s3084 = scalar_lea.vmem [#allocation4], %s3083
        // Predicated region
        $region41: #{tpu_custom_call.1} parent=39 // pred_check
          %p3085 = pneg %p147
        $region42: #{tpu_custom_call.1} parent=39 // pred_check_branch
          %3087 = sbr.rel (%p3085) target = $region44
        $region43: #{tpu_custom_call.1} parent=39 // pred_region
          %s3089 = ssub.s32 1024, 1024
          %3090 = vsyncadd %s3081, %s3089
          %s3091 = smul.addr %s19, 8
          %s3092 = smul.addr %s3091, 128
          %s3093 = scalar_lea.hbm %s5, %s3092
          %s3094 = sshll.u32 %s3084, 4
          %s3095 = int_to_ptr.vmem [resolvable:$true] %s3094
          %3100 = dma.vmem_to_hbm [thread:$0]  %s3095, 1024, %s3093, %s3081, 128, 128, 8
        $region44: #{tpu_custom_call.1} parent=39 // pred_fallthru
          _
      $region40: #{tpu_custom_call.1} parent=5 // pred_fallthru
        _
      %p3101 = scmp.le.s32.totalorder 2, %s14
      // Predicated region
      $region45: #{tpu_custom_call.1} parent=5 // pred_check
        %p3102 = pneg %p3101
      $region46: #{tpu_custom_call.1} parent=5 // pred_check_branch
        %3104 = sbr.rel (%p3102) target = $region48
      $region47: #{tpu_custom_call.1} parent=5 // pred_region
        %s3105 = ssub.s32 %s14, 2
        // Predicated region
        $region49: #{tpu_custom_call.1} parent=47 // pred_check
          %p3106 = pneg %p153
        $region50: #{tpu_custom_call.1} parent=47 // pred_check_branch
          %3108 = sbr.rel (%p3106) target = $region52
        $region51: #{tpu_custom_call.1} parent=47 // pred_region
          %s3109 = sand.u32 %s138, 1
          %s3110 = scalar_lea.sflag [#allocation5], %s3109
          %s3111 = sand.u32 %s138, 1
          %s3112 = smul.addr %s3111, 64
          %s3113 = scalar_lea.vmem [#allocation4], %s3112
          %3114 = dma.done %s3110, 1024
        $region52: #{tpu_custom_call.1} parent=47 // pred_fallthru
          _
      $region48: #{tpu_custom_call.1} parent=5 // pred_fallthru
        _
    $region6: #{tpu_custom_call.1} parent=1 // loop_footer
      %s18 = sadd.s32 1, %s14
    $region7: #{tpu_custom_call.1} parent=1 // loop_footer_branch
      %13 = sbr.rel target = $region3
    $region8: #{tpu_custom_call.1} parent=1 // loop_exit
      _
    %3115 = vsyncpa [#allocation5], 1
    %s3116 = scalar_lea.sflag [#allocation5], 1
    %3117 = vsyncpa %s3116, 1

</llo_original>
